<compile_context>
chip_gen: v5e
topology: v5e:2x2
jax: 0.10.0
libtpu: 0.0.40
codegen_flags: <defaults>
</compile_context>

<pallas_src>
import functools

import jax
import jax.numpy as jnp
from jax.experimental import pallas as pl
from jax.experimental.pallas import tpu as pltpu

# ---- "config" constants (synthetic, small) ----
NUM_STATE_RES_FILTERS = 16   # config.NUM_STATE_RES_FILTERS (input channels)
NUM_P_RES_FILTERS = 32       # config.NUM_P_RES_FILTERS
POLICY_HEAD_FILTERS = 8      # config.POLICY_HEAD_FILTERS
R = 16                       # config.R
C_BOARD = 16                 # config.C
BN_EPS = 1e-5


# ----------------------------------------------------------------------------
# Fused kernel: one grid step == NB batch samples, kept (channels, NB*pixels).
# ----------------------------------------------------------------------------
def policy_module_kernel(x_ref,
                         w1_0_ref, b1_0_ref, w2_0_ref, b2_0_ref,
                         w1_r_ref, b1_r_ref, w2_r_ref, b2_r_ref,
                         wp_ref, bp_ref,
                         lw2_hbm_ref, lb_ref, noise_ref, pr_ref,
                         out_ref,
                         flat_ref, lw2_vmem_ref, lw2_sem,
                         *, num_rest_blocks, policy_head_filters,
                         num_samples, hw):

    # (1) Kick off the Linear-weight HBM->VMEM DMA (PHF*HW x RC, ~2 MiB); it
    #     overlaps with the 13 conv matmuls below and is waited on at (5).
    lw2_copy = pltpu.make_async_copy(lw2_hbm_ref, lw2_vmem_ref, lw2_sem)
    lw2_copy.start()

    # Read the SMEM scalar early (before any DMA wait).
    p = pr_ref[0, 0]

    def conv(w, x, b):
        # folded 1x1 conv (+BN): (out_c, in_c) @ (in_c, NB*HW) + per-chan bias
        return jnp.dot(w, x, preferred_element_type=jnp.float32) + b

    def resblock(cur, w1, b1, w2, b2):
        h = jnp.maximum(conv(w1, cur, b1), 0.0)
        y = conv(w2, h, b2)
        if y.shape == cur.shape:   # static check, mirrors the torch residual test
            y = y + cur
        return jnp.maximum(y, 0.0)

    # (2) 6 ResBlocks on the (channels, samples*pixels) slab.
    cur = x_ref[0]                                            # (C_in, NB*HW)
    cur = resblock(cur, w1_0_ref[...], b1_0_ref[...], w2_0_ref[...], b2_0_ref[...])
    for b in range(num_rest_blocks):
        cur = resblock(cur, w1_r_ref[b], b1_r_ref[b], w2_r_ref[b], b2_r_ref[b])

    # (3) PolicyHead 1x1 conv (+folded BN) + ReLU -> (PHF, NB*HW).
    hp = jnp.maximum(conv(wp_ref[...], cur, bp_ref[...]), 0.0)

    # (4) Per-sample channel-major flatten (torch x.view(B, -1)) via small
    #     lane-aligned (1, HW) stores into a VMEM scratch: flat[n, ch*HW + w].
    for n in range(num_samples):
        for ch in range(policy_head_filters):
            flat_ref[n:n + 1, ch * hw:(ch + 1) * hw] = hp[ch:ch + 1,
                                                          n * hw:(n + 1) * hw]

    # (5) Linear as ONE matmul with M = NB: (NB, PHF*HW) @ (PHF*HW, RC).
    lw2_copy.wait()
    logits = jnp.dot(flat_ref[...], lw2_vmem_ref[...],
                     preferred_element_type=jnp.float32) + lb_ref[...]

    # (6) softmax over the RC logits (head == 'normal'), reciprocal on the EUP.
    m = jnp.max(logits, axis=-1, keepdims=True)
    e = jnp.exp(logits - m)
    probs = e * pl.reciprocal(jnp.sum(e, axis=-1, keepdims=True), approx=False)

    # (7) Fused exploration-noise mix: probs*(1-p) + noise*p.
    out_ref[0] = probs * (1.0 - p) + noise_ref[0] * p


def _num_grid_steps(n):
    """2 'parallel' steps on 2-TensorCore v7x, otherwise one whole-batch step."""
    if n < 2 or (n % 2) != 0:
        return 1
    try:
        kind = jax.devices()[0].device_kind.lower()
    except Exception:
        kind = ""
    return 2 if ("v7" in kind or "tpu7" in kind) else 1


def policy_module_forward(x_nchw, folded, percent_random=None, noise=None,
                          grid_steps=None):
    """x_nchw: (N, C_in, R, C) f32 -> policy (N, R*C) f32 (softmax [+ noise mix])."""
    n, c_in, r, c = x_nchw.shape
    hw = r * c
    rc = folded["lb"].shape[-1]
    phf = folded["wp"].shape[0]
    num_rest = folded["w1_rest"].shape[0]

    steps = _num_grid_steps(n) if grid_steps is None else grid_steps
    if n % steps != 0:
        steps = 1
    nb = n // steps

    # One HBM-side relayout: (N, Cin, H, W) -> (steps, Cin, NB*HW); samples of
    # a step are contiguous 256-lane chunks along the last (lane) dim.
    x3 = (x_nchw.reshape(steps, nb, c_in, hw)
                .transpose(0, 2, 1, 3)
                .reshape(steps, c_in, nb * hw))

    if percent_random is None:
        # Mix becomes a no-op (p = 0, zero noise); keeps a single kernel variant.
        pr_arr = jnp.zeros((1, 1), jnp.float32)
        noise3 = jnp.zeros((steps, nb, rc), jnp.float32)
    else:
        # TODO(synk): torch used np.random.uniform noise; here the caller passes a
        # deterministic jax.random.uniform array (same distribution).
        pr_arr = jnp.full((1, 1), percent_random, jnp.float32)
        noise3 = noise.reshape(steps, nb, rc)

    worder = ("w1_0", "b1_0", "w2_0", "b2_0",
              "w1_rest", "b1_rest", "w2_rest", "b2_rest",
              "wp", "bp")
    wparams = [folded[k] for k in worder]
    lw2 = folded["lw2"]          # (PHF*HW, RC), stays in HBM (manual DMA)
    lb = folded["lb"]            # (1, RC)

    def const_spec(arr):
        nd = arr.ndim
        return pl.BlockSpec(arr.shape, lambda s, _nd=nd: (0,) * _nd)

    in_specs = ([pl.BlockSpec((1, c_in, nb * hw), lambda s: (s, 0, 0))]
                + [const_spec(p) for p in wparams]
                + [pl.BlockSpec(memory_space=pl.ANY),                    # lw2 (HBM)
                   const_spec(lb),
                   pl.BlockSpec((1, nb, rc), lambda s: (s, 0, 0)),       # noise
                   pl.BlockSpec(memory_space=pltpu.MemorySpace.SMEM)])   # percent_random

    kernel = functools.partial(policy_module_kernel,
                               num_rest_blocks=num_rest,
                               policy_head_filters=phf,
                               num_samples=nb,
                               hw=hw)

    out3 = pl.pallas_call(
        kernel,
        out_shape=jax.ShapeDtypeStruct((steps, nb, rc), jnp.float32),
        grid=(steps,),
        in_specs=in_specs,
        out_specs=pl.BlockSpec((1, nb, rc), lambda s: (s, 0, 0)),
        scratch_shapes=[
            pltpu.VMEM((nb, phf * hw), jnp.float32),   # per-sample flattened hp
            pltpu.VMEM((phf * hw, rc), jnp.float32),   # Linear weight landing zone
            pltpu.SemaphoreType.DMA(()),
        ],
        compiler_params=pltpu.CompilerParams(
            dimension_semantics=("parallel",)),
    )(x3, *wparams, lw2, lb, noise3, pr_arr)

    return out3.reshape(n, rc)


# ----------------------------------------------------------------------------
# Parameter construction (PyTorch-like raw params) and BN/bias folding.
# ----------------------------------------------------------------------------
def _uniform(key, shape, bound):
    return jax.random.uniform(key, shape, jnp.float32, -bound, bound)


def init_resblock_raw(key, in_dims, h_dims, out_dims=None):
    if out_dims is None:
        out_dims = h_dims
    k = jax.random.split(key, 12)
    b1 = 1.0 / (in_dims ** 0.5)
    b2 = 1.0 / (h_dims ** 0.5)
    return dict(
        w1=_uniform(k[0], (h_dims, in_dims), b1),      # Conv2d(k=1) weight (out, in)
        cb1=_uniform(k[1], (h_dims,), b1),
        g1=jax.random.uniform(k[2], (h_dims,), jnp.float32, 0.5, 1.5),
        be1=0.1 * jax.random.normal(k[3], (h_dims,), jnp.float32),
        m1=0.1 * jax.random.normal(k[4], (h_dims,), jnp.float32),
        v1=jax.random.uniform(k[5], (h_dims,), jnp.float32, 0.5, 1.5),
        w2=_uniform(k[6], (out_dims, h_dims), b2),
        cb2=_uniform(k[7], (out_dims,), b2),
        g2=jax.random.uniform(k[8], (out_dims,), jnp.float32, 0.5, 1.5),
        be2=0.1 * jax.random.normal(k[9], (out_dims,), jnp.float32),
        m2=0.1 * jax.random.normal(k[10], (out_dims,), jnp.float32),
        v2=jax.random.uniform(k[11], (out_dims,), jnp.float32, 0.5, 1.5),
    )


def init_policy_head_raw(key, in_dims, phf, rc):
    k = jax.random.split(key, 8)
    bc = 1.0 / (in_dims ** 0.5)
    bl = 1.0 / ((phf * rc) ** 0.5)
    return dict(
        wp=_uniform(k[0], (phf, in_dims), bc),
        cbp=_uniform(k[1], (phf,), bc),
        gp=jax.random.uniform(k[2], (phf,), jnp.float32, 0.5, 1.5),
        bep=0.1 * jax.random.normal(k[3], (phf,), jnp.float32),
        mp=0.1 * jax.random.normal(k[4], (phf,), jnp.float32),
        vp=jax.random.uniform(k[5], (phf,), jnp.float32, 0.5, 1.5),
        lw=_uniform(k[6], (rc, phf * rc), bl),          # Linear weight (out, in)
        lb=_uniform(k[7], (rc,), bl),
    )


def _fold(w, cb, g, be, m, v):
    """Fold eval-mode BN + conv bias into (weight, per-channel bias column)."""
    s = g / jnp.sqrt(v + BN_EPS)
    return s[:, None] * w, (be + s * (cb - m))[:, None]


def fold_params(raw):
    blocks = raw["blocks"]
    b0 = blocks[0]
    w1_0, b1_0 = _fold(b0["w1"], b0["cb1"], b0["g1"], b0["be1"], b0["m1"], b0["v1"])
    w2_0, b2_0 = _fold(b0["w2"], b0["cb2"], b0["g2"], b0["be2"], b0["m2"], b0["v2"])
    w1_r, b1_r, w2_r, b2_r = [], [], [], []
    for blk in blocks[1:]:
        a, b = _fold(blk["w1"], blk["cb1"], blk["g1"], blk["be1"], blk["m1"], blk["v1"])
        c, d = _fold(blk["w2"], blk["cb2"], blk["g2"], blk["be2"], blk["m2"], blk["v2"])
        w1_r.append(a); b1_r.append(b); w2_r.append(c); b2_r.append(d)
    hd = raw["head"]
    wp, bp = _fold(hd["wp"], hd["cbp"], hd["gp"], hd["bep"], hd["mp"], hd["vp"])
    rc = hd["lb"].shape[0]
    # torch .view flattens (PHF, R, C) channel-major -> index ch*HW + hw, which
    # is exactly the row index of lw.T: (PHF*HW, RC).
    lw2 = jnp.asarray(hd["lw"].T)
    return dict(
        w1_0=w1_0, b1_0=b1_0, w2_0=w2_0, b2_0=b2_0,
        w1_rest=jnp.stack(w1_r), b1_rest=jnp.stack(b1_r),
        w2_rest=jnp.stack(w2_r), b2_rest=jnp.stack(b2_r),
        wp=wp, bp=bp, lw2=lw2, lb=hd["lb"].reshape(1, rc),
    )


# ----------------------------------------------------------------------------
# Pure-JAX reference (unfolded BN, eval mode) for correctness checking.
# ----------------------------------------------------------------------------
def _bn_eval(x_nch, gamma, beta, mean, var):
    inv = gamma / jnp.sqrt(var + BN_EPS)
    return (x_nch - mean[None, :, None]) * inv[None, :, None] + beta[None, :, None]


def policy_module_reference(x_nchw, raw, percent_random=None, noise=None):
    n, c_in, r, c = x_nchw.shape
    cur = x_nchw.reshape(n, c_in, r * c)
    hi = jax.lax.Precision.HIGHEST
    for blk in raw["blocks"]:
        t = jnp.einsum("oc,nch->noh", blk["w1"], cur, precision=hi) + blk["cb1"][None, :, None]
        t = jnp.maximum(_bn_eval(t, blk["g1"], blk["be1"], blk["m1"], blk["v1"]), 0.0)
        y = jnp.einsum("oc,nch->noh", blk["w2"], t, precision=hi) + blk["cb2"][None, :, None]
        y = _bn_eval(y, blk["g2"], blk["be2"], blk["m2"], blk["v2"])
        if y.shape == cur.shape:
            y = y + cur
        cur = jnp.maximum(y, 0.0)
    hd = raw["head"]
    hp = jnp.einsum("of,nfh->noh", hd["wp"], cur, precision=hi) + hd["cbp"][None, :, None]
    hp = jnp.maximum(_bn_eval(hp, hd["gp"], hd["bep"], hd["mp"], hd["vp"]), 0.0)
    flat = hp.reshape(n, -1)                             # channel-major, matches torch .view
    logits = jnp.dot(flat, hd["lw"].T, precision=hi) + hd["lb"][None, :]
    probs = jax.nn.softmax(logits, axis=-1)
    if percent_random is not None:
        probs = probs * (1.0 - percent_random) + noise * percent_random
    return probs


if __name__ == "__main__":
    key = jax.random.PRNGKey(0)
    kx, knoise, *kparams = jax.random.split(key, 9)

    N = 2
    RC = R * C_BOARD
    x = jax.random.normal(kx, (N, NUM_STATE_RES_FILTERS, R, C_BOARD), jnp.float32)

    # p_res_inp: NUM_STATE_RES_FILTERS -> F ; p_res1..5: F -> F ; then PolicyHead
    blocks = [init_resblock_raw(kparams[0], NUM_STATE_RES_FILTERS, NUM_P_RES_FILTERS)]
    for i in range(1, 6):
        blocks.append(init_resblock_raw(kparams[i], NUM_P_RES_FILTERS, NUM_P_RES_FILTERS))
    head = init_policy_head_raw(kparams[6], NUM_P_RES_FILTERS, POLICY_HEAD_FILTERS, RC)
    raw = dict(blocks=blocks, head=head)
    folded = fold_params(raw)

    percent_random = 0.25
    noise = jax.random.uniform(knoise, (N, RC), jnp.float32)

    out = policy_module_forward(x, folded, percent_random, noise)
    out = jax.block_until_ready(out)

    ref = policy_module_reference(x, raw, percent_random, noise)
    assert out.shape == (N, RC)
    assert jnp.allclose(out, ref, atol=1e-4, rtol=1e-3), \
        float(jnp.max(jnp.abs(out - ref)))

    print("KERNEL_OK")
</pallas_src>

<mosaic_0001>
module attributes {stable_mosaic.version = 11 : i64} {
  func.func @policy_module_kernel(%arg0: i32, %arg1: memref<1x16x512xf32, #tpu.memory_space<vmem>>, %arg2: memref<32x16xf32, #tpu.memory_space<vmem>>, %arg3: memref<32x1xf32, #tpu.memory_space<vmem>>, %arg4: memref<32x32xf32, #tpu.memory_space<vmem>>, %arg5: memref<32x1xf32, #tpu.memory_space<vmem>>, %arg6: memref<5x32x32xf32, #tpu.memory_space<vmem>>, %arg7: memref<5x32x1xf32, #tpu.memory_space<vmem>>, %arg8: memref<5x32x32xf32, #tpu.memory_space<vmem>>, %arg9: memref<5x32x1xf32, #tpu.memory_space<vmem>>, %arg10: memref<8x32xf32, #tpu.memory_space<vmem>>, %arg11: memref<8x1xf32, #tpu.memory_space<vmem>>, %arg12: memref<2048x256xf32, #tpu.memory_space<any>>, %arg13: memref<1x256xf32, #tpu.memory_space<vmem>>, %arg14: memref<1x2x256xf32, #tpu.memory_space<vmem>>, %arg15: memref<1x1xf32, #tpu.memory_space<smem>>, %arg16: memref<1x2x256xf32, #tpu.memory_space<vmem>>, %arg17: memref<2x2048xf32, #tpu.memory_space<vmem>>, %arg18: memref<2048x256xf32, #tpu.memory_space<vmem>>, %arg19: memref<!tpu.dma_semaphore, #tpu.memory_space<semaphore_mem>>) attributes {dimension_semantics = [#tpu.dimension_semantics<parallel>], iteration_bounds = array<i64: 1>, scalar_prefetch = 0 : i64, scratch_operands = 3 : i64, tpu.core_type = #tpu.core_type<tc>, window_params = [{transform_indices = @transform_0, window_bounds = array<i64: 1, 16, 512>}, {pipeline_mode = #tpu.pipeline_mode<synchronous>, transform_indices = @transform_1, window_bounds = array<i64: 32, 16>}, {pipeline_mode = #tpu.pipeline_mode<synchronous>, transform_indices = @transform_2, window_bounds = array<i64: 32, 1>}, {pipeline_mode = #tpu.pipeline_mode<synchronous>, transform_indices = @transform_3, window_bounds = array<i64: 32, 32>}, {pipeline_mode = #tpu.pipeline_mode<synchronous>, transform_indices = @transform_4, window_bounds = array<i64: 32, 1>}, {pipeline_mode = #tpu.pipeline_mode<synchronous>, transform_indices = @transform_5, window_bounds = array<i64: 5, 32, 32>}, {pipeline_mode = #tpu.pipeline_mode<synchronous>, transform_indices = @transform_6, window_bounds = array<i64: 5, 32, 1>}, {pipeline_mode = #tpu.pipeline_mode<synchronous>, transform_indices = @transform_7, window_bounds = array<i64: 5, 32, 32>}, {pipeline_mode = #tpu.pipeline_mode<synchronous>, transform_indices = @transform_8, window_bounds = array<i64: 5, 32, 1>}, {pipeline_mode = #tpu.pipeline_mode<synchronous>, transform_indices = @transform_9, window_bounds = array<i64: 8, 32>}, {pipeline_mode = #tpu.pipeline_mode<synchronous>, transform_indices = @transform_10, window_bounds = array<i64: 8, 1>}, {}, {pipeline_mode = #tpu.pipeline_mode<synchronous>, transform_indices = @transform_12, window_bounds = array<i64: 1, 256>}, {transform_indices = @transform_13, window_bounds = array<i64: 1, 2, 256>}, {transform_indices = @transform_14, window_bounds = array<i64: 1, 1>}, {transform_indices = @transform_15, window_bounds = array<i64: 1, 2, 256>}]} {
    tpu.enqueue_dma source(%arg12 : memref<2048x256xf32, #tpu.memory_space<any>>) target(%arg18 : memref<2048x256xf32, #tpu.memory_space<vmem>>) target_semaphore(%arg19 : memref<!tpu.dma_semaphore, #tpu.memory_space<semaphore_mem>>)
    %c0 = arith.constant 0 : index
    %c0_0 = arith.constant 0 : index
    %0 = memref.load %arg15[%c0, %c0_0] : memref<1x1xf32, #tpu.memory_space<smem>>
    %c0_1 = arith.constant 0 : index
    %c0_2 = arith.constant 0 : index
    %c0_3 = arith.constant 0 : index
    %1 = vector.load %arg1[%c0_1, %c0_2, %c0_3] : memref<1x16x512xf32, #tpu.memory_space<vmem>>, vector<1x16x512xf32>
    %2 = vector.shape_cast %1 : vector<1x16x512xf32> to vector<16x512xf32>
    %c0_4 = arith.constant 0 : index
    %c0_5 = arith.constant 0 : index
    %3 = vector.load %arg2[%c0_4, %c0_5] : memref<32x16xf32, #tpu.memory_space<vmem>>, vector<32x16xf32>
    %c0_6 = arith.constant 0 : index
    %c0_7 = arith.constant 0 : index
    %4 = vector.load %arg3[%c0_6, %c0_7] : memref<32x1xf32, #tpu.memory_space<vmem>>, vector<32x1xf32>
    %c0_8 = arith.constant 0 : index
    %c0_9 = arith.constant 0 : index
    %5 = vector.load %arg4[%c0_8, %c0_9] : memref<32x32xf32, #tpu.memory_space<vmem>>, vector<32x32xf32>
    %c0_10 = arith.constant 0 : index
    %c0_11 = arith.constant 0 : index
    %6 = vector.load %arg5[%c0_10, %c0_11] : memref<32x1xf32, #tpu.memory_space<vmem>>, vector<32x1xf32>
    %cst = arith.constant dense<0.000000e+00> : vector<32x512xf32>
    %7 = tpu.matmul %3, %2, %cst {dimension_numbers = #tpu.dot_dimension_numbers<[1], [0], [0], [1], [0, 0, 1, 1], [], []>} : vector<32x16xf32>, vector<16x512xf32>, vector<32x512xf32> -> vector<32x512xf32>
    %8 = vector.broadcast %4 : vector<32x1xf32> to vector<32x512xf32>
    %9 = arith.addf %7, %8 : vector<32x512xf32>
    %cst_12 = arith.constant 0.000000e+00 : f32
    %10 = vector.broadcast %cst_12 : f32 to vector<32x512xf32>
    %11 = arith.maximumf %9, %10 : vector<32x512xf32>
    %cst_13 = arith.constant dense<0.000000e+00> : vector<32x512xf32>
    %12 = tpu.matmul %5, %11, %cst_13 {dimension_numbers = #tpu.dot_dimension_numbers<[1], [0], [0], [1], [0, 0, 1, 1], [], []>} : vector<32x32xf32>, vector<32x512xf32>, vector<32x512xf32> -> vector<32x512xf32>
    %13 = vector.broadcast %6 : vector<32x1xf32> to vector<32x512xf32>
    %14 = arith.addf %12, %13 : vector<32x512xf32>
    %cst_14 = arith.constant 0.000000e+00 : f32
    %15 = vector.broadcast %cst_14 : f32 to vector<32x512xf32>
    %16 = arith.maximumf %14, %15 : vector<32x512xf32>
    %c0_15 = arith.constant 0 : index
    %c0_16 = arith.constant 0 : index
    %c0_17 = arith.constant 0 : index
    %17 = vector.load %arg6[%c0_15, %c0_16, %c0_17] : memref<5x32x32xf32, #tpu.memory_space<vmem>>, vector<1x32x32xf32>
    %18 = vector.shape_cast %17 : vector<1x32x32xf32> to vector<32x32xf32>
    %c0_18 = arith.constant 0 : index
    %c0_19 = arith.constant 0 : index
    %c0_20 = arith.constant 0 : index
    %19 = vector.load %arg7[%c0_18, %c0_19, %c0_20] : memref<5x32x1xf32, #tpu.memory_space<vmem>>, vector<1x32x1xf32>
    %20 = vector.shape_cast %19 : vector<1x32x1xf32> to vector<32x1xf32>
    %c0_21 = arith.constant 0 : index
    %c0_22 = arith.constant 0 : index
    %c0_23 = arith.constant 0 : index
    %21 = vector.load %arg8[%c0_21, %c0_22, %c0_23] : memref<5x32x32xf32, #tpu.memory_space<vmem>>, vector<1x32x32xf32>
    %22 = vector.shape_cast %21 : vector<1x32x32xf32> to vector<32x32xf32>
    %c0_24 = arith.constant 0 : index
    %c0_25 = arith.constant 0 : index
    %c0_26 = arith.constant 0 : index
    %23 = vector.load %arg9[%c0_24, %c0_25, %c0_26] : memref<5x32x1xf32, #tpu.memory_space<vmem>>, vector<1x32x1xf32>
    %24 = vector.shape_cast %23 : vector<1x32x1xf32> to vector<32x1xf32>
    %cst_27 = arith.constant dense<0.000000e+00> : vector<32x512xf32>
    %25 = tpu.matmul %18, %16, %cst_27 {dimension_numbers = #tpu.dot_dimension_numbers<[1], [0], [0], [1], [0, 0, 1, 1], [], []>} : vector<32x32xf32>, vector<32x512xf32>, vector<32x512xf32> -> vector<32x512xf32>
    %26 = vector.broadcast %20 : vector<32x1xf32> to vector<32x512xf32>
    %27 = arith.addf %25, %26 : vector<32x512xf32>
    %cst_28 = arith.constant 0.000000e+00 : f32
    %28 = vector.broadcast %cst_28 : f32 to vector<32x512xf32>
    %29 = arith.maximumf %27, %28 : vector<32x512xf32>
    %cst_29 = arith.constant dense<0.000000e+00> : vector<32x512xf32>
    %30 = tpu.matmul %22, %29, %cst_29 {dimension_numbers = #tpu.dot_dimension_numbers<[1], [0], [0], [1], [0, 0, 1, 1], [], []>} : vector<32x32xf32>, vector<32x512xf32>, vector<32x512xf32> -> vector<32x512xf32>
    %31 = vector.broadcast %24 : vector<32x1xf32> to vector<32x512xf32>
    %32 = arith.addf %30, %31 : vector<32x512xf32>
    %33 = arith.addf %32, %16 : vector<32x512xf32>
    %cst_30 = arith.constant 0.000000e+00 : f32
    %34 = vector.broadcast %cst_30 : f32 to vector<32x512xf32>
    %35 = arith.maximumf %33, %34 : vector<32x512xf32>
    %c1 = arith.constant 1 : index
    %c0_31 = arith.constant 0 : index
    %c0_32 = arith.constant 0 : index
    %36 = vector.load %arg6[%c1, %c0_31, %c0_32] : memref<5x32x32xf32, #tpu.memory_space<vmem>>, vector<1x32x32xf32>
    %37 = vector.shape_cast %36 : vector<1x32x32xf32> to vector<32x32xf32>
    %c1_33 = arith.constant 1 : index
    %c0_34 = arith.constant 0 : index
    %c0_35 = arith.constant 0 : index
    %38 = vector.load %arg7[%c1_33, %c0_34, %c0_35] : memref<5x32x1xf32, #tpu.memory_space<vmem>>, vector<1x32x1xf32>
    %39 = vector.shape_cast %38 : vector<1x32x1xf32> to vector<32x1xf32>
    %c1_36 = arith.constant 1 : index
    %c0_37 = arith.constant 0 : index
    %c0_38 = arith.constant 0 : index
    %40 = vector.load %arg8[%c1_36, %c0_37, %c0_38] : memref<5x32x32xf32, #tpu.memory_space<vmem>>, vector<1x32x32xf32>
    %41 = vector.shape_cast %40 : vector<1x32x32xf32> to vector<32x32xf32>
    %c1_39 = arith.constant 1 : index
    %c0_40 = arith.constant 0 : index
    %c0_41 = arith.constant 0 : index
    %42 = vector.load %arg9[%c1_39, %c0_40, %c0_41] : memref<5x32x1xf32, #tpu.memory_space<vmem>>, vector<1x32x1xf32>
    %43 = vector.shape_cast %42 : vector<1x32x1xf32> to vector<32x1xf32>
    %cst_42 = arith.constant dense<0.000000e+00> : vector<32x512xf32>
    %44 = tpu.matmul %37, %35, %cst_42 {dimension_numbers = #tpu.dot_dimension_numbers<[1], [0], [0], [1], [0, 0, 1, 1], [], []>} : vector<32x32xf32>, vector<32x512xf32>, vector<32x512xf32> -> vector<32x512xf32>
    %45 = vector.broadcast %39 : vector<32x1xf32> to vector<32x512xf32>
    %46 = arith.addf %44, %45 : vector<32x512xf32>
    %cst_43 = arith.constant 0.000000e+00 : f32
    %47 = vector.broadcast %cst_43 : f32 to vector<32x512xf32>
    %48 = arith.maximumf %46, %47 : vector<32x512xf32>
    %cst_44 = arith.constant dense<0.000000e+00> : vector<32x512xf32>
    %49 = tpu.matmul %41, %48, %cst_44 {dimension_numbers = #tpu.dot_dimension_numbers<[1], [0], [0], [1], [0, 0, 1, 1], [], []>} : vector<32x32xf32>, vector<32x512xf32>, vector<32x512xf32> -> vector<32x512xf32>
    %50 = vector.broadcast %43 : vector<32x1xf32> to vector<32x512xf32>
    %51 = arith.addf %49, %50 : vector<32x512xf32>
    %52 = arith.addf %51, %35 : vector<32x512xf32>
    %cst_45 = arith.constant 0.000000e+00 : f32
    %53 = vector.broadcast %cst_45 : f32 to vector<32x512xf32>
    %54 = arith.maximumf %52, %53 : vector<32x512xf32>
    %c2 = arith.constant 2 : index
    %c0_46 = arith.constant 0 : index
    %c0_47 = arith.constant 0 : index
    %55 = vector.load %arg6[%c2, %c0_46, %c0_47] : memref<5x32x32xf32, #tpu.memory_space<vmem>>, vector<1x32x32xf32>
    %56 = vector.shape_cast %55 : vector<1x32x32xf32> to vector<32x32xf32>
    %c2_48 = arith.constant 2 : index
    %c0_49 = arith.constant 0 : index
    %c0_50 = arith.constant 0 : index
    %57 = vector.load %arg7[%c2_48, %c0_49, %c0_50] : memref<5x32x1xf32, #tpu.memory_space<vmem>>, vector<1x32x1xf32>
    %58 = vector.shape_cast %57 : vector<1x32x1xf32> to vector<32x1xf32>
    %c2_51 = arith.constant 2 : index
    %c0_52 = arith.constant 0 : index
    %c0_53 = arith.constant 0 : index
    %59 = vector.load %arg8[%c2_51, %c0_52, %c0_53] : memref<5x32x32xf32, #tpu.memory_space<vmem>>, vector<1x32x32xf32>
    %60 = vector.shape_cast %59 : vector<1x32x32xf32> to vector<32x32xf32>
    %c2_54 = arith.constant 2 : index
    %c0_55 = arith.constant 0 : index
    %c0_56 = arith.constant 0 : index
    %61 = vector.load %arg9[%c2_54, %c0_55, %c0_56] : memref<5x32x1xf32, #tpu.memory_space<vmem>>, vector<1x32x1xf32>
    %62 = vector.shape_cast %61 : vector<1x32x1xf32> to vector<32x1xf32>
    %cst_57 = arith.constant dense<0.000000e+00> : vector<32x512xf32>
    %63 = tpu.matmul %56, %54, %cst_57 {dimension_numbers = #tpu.dot_dimension_numbers<[1], [0], [0], [1], [0, 0, 1, 1], [], []>} : vector<32x32xf32>, vector<32x512xf32>, vector<32x512xf32> -> vector<32x512xf32>
    %64 = vector.broadcast %58 : vector<32x1xf32> to vector<32x512xf32>
    %65 = arith.addf %63, %64 : vector<32x512xf32>
    %cst_58 = arith.constant 0.000000e+00 : f32
    %66 = vector.broadcast %cst_58 : f32 to vector<32x512xf32>
    %67 = arith.maximumf %65, %66 : vector<32x512xf32>
    %cst_59 = arith.constant dense<0.000000e+00> : vector<32x512xf32>
    %68 = tpu.matmul %60, %67, %cst_59 {dimension_numbers = #tpu.dot_dimension_numbers<[1], [0], [0], [1], [0, 0, 1, 1], [], []>} : vector<32x32xf32>, vector<32x512xf32>, vector<32x512xf32> -> vector<32x512xf32>
    %69 = vector.broadcast %62 : vector<32x1xf32> to vector<32x512xf32>
    %70 = arith.addf %68, %69 : vector<32x512xf32>
    %71 = arith.addf %70, %54 : vector<32x512xf32>
    %cst_60 = arith.constant 0.000000e+00 : f32
    %72 = vector.broadcast %cst_60 : f32 to vector<32x512xf32>
    %73 = arith.maximumf %71, %72 : vector<32x512xf32>
    %c3 = arith.constant 3 : index
    %c0_61 = arith.constant 0 : index
    %c0_62 = arith.constant 0 : index
    %74 = vector.load %arg6[%c3, %c0_61, %c0_62] : memref<5x32x32xf32, #tpu.memory_space<vmem>>, vector<1x32x32xf32>
    %75 = vector.shape_cast %74 : vector<1x32x32xf32> to vector<32x32xf32>
    %c3_63 = arith.constant 3 : index
    %c0_64 = arith.constant 0 : index
    %c0_65 = arith.constant 0 : index
    %76 = vector.load %arg7[%c3_63, %c0_64, %c0_65] : memref<5x32x1xf32, #tpu.memory_space<vmem>>, vector<1x32x1xf32>
    %77 = vector.shape_cast %76 : vector<1x32x1xf32> to vector<32x1xf32>
    %c3_66 = arith.constant 3 : index
    %c0_67 = arith.constant 0 : index
    %c0_68 = arith.constant 0 : index
    %78 = vector.load %arg8[%c3_66, %c0_67, %c0_68] : memref<5x32x32xf32, #tpu.memory_space<vmem>>, vector<1x32x32xf32>
    %79 = vector.shape_cast %78 : vector<1x32x32xf32> to vector<32x32xf32>
    %c3_69 = arith.constant 3 : index
    %c0_70 = arith.constant 0 : index
    %c0_71 = arith.constant 0 : index
    %80 = vector.load %arg9[%c3_69, %c0_70, %c0_71] : memref<5x32x1xf32, #tpu.memory_space<vmem>>, vector<1x32x1xf32>
    %81 = vector.shape_cast %80 : vector<1x32x1xf32> to vector<32x1xf32>
    %cst_72 = arith.constant dense<0.000000e+00> : vector<32x512xf32>
    %82 = tpu.matmul %75, %73, %cst_72 {dimension_numbers = #tpu.dot_dimension_numbers<[1], [0], [0], [1], [0, 0, 1, 1], [], []>} : vector<32x32xf32>, vector<32x512xf32>, vector<32x512xf32> -> vector<32x512xf32>
    %83 = vector.broadcast %77 : vector<32x1xf32> to vector<32x512xf32>
    %84 = arith.addf %82, %83 : vector<32x512xf32>
    %cst_73 = arith.constant 0.000000e+00 : f32
    %85 = vector.broadcast %cst_73 : f32 to vector<32x512xf32>
    %86 = arith.maximumf %84, %85 : vector<32x512xf32>
    %cst_74 = arith.constant dense<0.000000e+00> : vector<32x512xf32>
    %87 = tpu.matmul %79, %86, %cst_74 {dimension_numbers = #tpu.dot_dimension_numbers<[1], [0], [0], [1], [0, 0, 1, 1], [], []>} : vector<32x32xf32>, vector<32x512xf32>, vector<32x512xf32> -> vector<32x512xf32>
    %88 = vector.broadcast %81 : vector<32x1xf32> to vector<32x512xf32>
    %89 = arith.addf %87, %88 : vector<32x512xf32>
    %90 = arith.addf %89, %73 : vector<32x512xf32>
    %cst_75 = arith.constant 0.000000e+00 : f32
    %91 = vector.broadcast %cst_75 : f32 to vector<32x512xf32>
    %92 = arith.maximumf %90, %91 : vector<32x512xf32>
    %c4 = arith.constant 4 : index
    %c0_76 = arith.constant 0 : index
    %c0_77 = arith.constant 0 : index
    %93 = vector.load %arg6[%c4, %c0_76, %c0_77] : memref<5x32x32xf32, #tpu.memory_space<vmem>>, vector<1x32x32xf32>
    %94 = vector.shape_cast %93 : vector<1x32x32xf32> to vector<32x32xf32>
    %c4_78 = arith.constant 4 : index
    %c0_79 = arith.constant 0 : index
    %c0_80 = arith.constant 0 : index
    %95 = vector.load %arg7[%c4_78, %c0_79, %c0_80] : memref<5x32x1xf32, #tpu.memory_space<vmem>>, vector<1x32x1xf32>
    %96 = vector.shape_cast %95 : vector<1x32x1xf32> to vector<32x1xf32>
    %c4_81 = arith.constant 4 : index
    %c0_82 = arith.constant 0 : index
    %c0_83 = arith.constant 0 : index
    %97 = vector.load %arg8[%c4_81, %c0_82, %c0_83] : memref<5x32x32xf32, #tpu.memory_space<vmem>>, vector<1x32x32xf32>
    %98 = vector.shape_cast %97 : vector<1x32x32xf32> to vector<32x32xf32>
    %c4_84 = arith.constant 4 : index
    %c0_85 = arith.constant 0 : index
    %c0_86 = arith.constant 0 : index
    %99 = vector.load %arg9[%c4_84, %c0_85, %c0_86] : memref<5x32x1xf32, #tpu.memory_space<vmem>>, vector<1x32x1xf32>
    %100 = vector.shape_cast %99 : vector<1x32x1xf32> to vector<32x1xf32>
    %cst_87 = arith.constant dense<0.000000e+00> : vector<32x512xf32>
    %101 = tpu.matmul %94, %92, %cst_87 {dimension_numbers = #tpu.dot_dimension_numbers<[1], [0], [0], [1], [0, 0, 1, 1], [], []>} : vector<32x32xf32>, vector<32x512xf32>, vector<32x512xf32> -> vector<32x512xf32>
    %102 = vector.broadcast %96 : vector<32x1xf32> to vector<32x512xf32>
    %103 = arith.addf %101, %102 : vector<32x512xf32>
    %cst_88 = arith.constant 0.000000e+00 : f32
    %104 = vector.broadcast %cst_88 : f32 to vector<32x512xf32>
    %105 = arith.maximumf %103, %104 : vector<32x512xf32>
    %cst_89 = arith.constant dense<0.000000e+00> : vector<32x512xf32>
    %106 = tpu.matmul %98, %105, %cst_89 {dimension_numbers = #tpu.dot_dimension_numbers<[1], [0], [0], [1], [0, 0, 1, 1], [], []>} : vector<32x32xf32>, vector<32x512xf32>, vector<32x512xf32> -> vector<32x512xf32>
    %107 = vector.broadcast %100 : vector<32x1xf32> to vector<32x512xf32>
    %108 = arith.addf %106, %107 : vector<32x512xf32>
    %109 = arith.addf %108, %92 : vector<32x512xf32>
    %cst_90 = arith.constant 0.000000e+00 : f32
    %110 = vector.broadcast %cst_90 : f32 to vector<32x512xf32>
    %111 = arith.maximumf %109, %110 : vector<32x512xf32>
    %c0_91 = arith.constant 0 : index
    %c0_92 = arith.constant 0 : index
    %112 = vector.load %arg10[%c0_91, %c0_92] : memref<8x32xf32, #tpu.memory_space<vmem>>, vector<8x32xf32>
    %c0_93 = arith.constant 0 : index
    %c0_94 = arith.constant 0 : index
    %113 = vector.load %arg11[%c0_93, %c0_94] : memref<8x1xf32, #tpu.memory_space<vmem>>, vector<8x1xf32>
    %cst_95 = arith.constant dense<0.000000e+00> : vector<8x512xf32>
    %114 = tpu.matmul %112, %111, %cst_95 {dimension_numbers = #tpu.dot_dimension_numbers<[1], [0], [0], [1], [0, 0, 1, 1], [], []>} : vector<8x32xf32>, vector<32x512xf32>, vector<8x512xf32> -> vector<8x512xf32>
    %115 = vector.broadcast %113 : vector<8x1xf32> to vector<8x512xf32>
    %116 = arith.addf %114, %115 : vector<8x512xf32>
    %cst_96 = arith.constant 0.000000e+00 : f32
    %117 = vector.broadcast %cst_96 : f32 to vector<8x512xf32>
    %118 = arith.maximumf %116, %117 : vector<8x512xf32>
    %119 = vector.extract_strided_slice %118 {offsets = [0, 0], sizes = [1, 256], strides = [1, 1]} : vector<8x512xf32> to vector<1x256xf32>
    %c0_97 = arith.constant 0 : index
    %c0_98 = arith.constant 0 : index
    %120 = vector.load %arg17[%c0_97, %c0_98] : memref<2x2048xf32, #tpu.memory_space<vmem>>, vector<1x256xf32>
    tpu.vector_store %arg17[%c0_97, %c0_98], %119 {strides = array<i32>} : memref<2x2048xf32, #tpu.memory_space<vmem>>, vector<1x256xf32>,
    %121 = vector.extract_strided_slice %118 {offsets = [1, 0], sizes = [1, 256], strides = [1, 1]} : vector<8x512xf32> to vector<1x256xf32>
    %c0_99 = arith.constant 0 : index
    %c256 = arith.constant 256 : index
    %122 = vector.load %arg17[%c0_99, %c256] : memref<2x2048xf32, #tpu.memory_space<vmem>>, vector<1x256xf32>
    tpu.vector_store %arg17[%c0_99, %c256], %121 {strides = array<i32>} : memref<2x2048xf32, #tpu.memory_space<vmem>>, vector<1x256xf32>,
    %123 = vector.extract_strided_slice %118 {offsets = [2, 0], sizes = [1, 256], strides = [1, 1]} : vector<8x512xf32> to vector<1x256xf32>
    %c0_100 = arith.constant 0 : index
    %c512 = arith.constant 512 : index
    %124 = vector.load %arg17[%c0_100, %c512] : memref<2x2048xf32, #tpu.memory_space<vmem>>, vector<1x256xf32>
    tpu.vector_store %arg17[%c0_100, %c512], %123 {strides = array<i32>} : memref<2x2048xf32, #tpu.memory_space<vmem>>, vector<1x256xf32>,
    %125 = vector.extract_strided_slice %118 {offsets = [3, 0], sizes = [1, 256], strides = [1, 1]} : vector<8x512xf32> to vector<1x256xf32>
    %c0_101 = arith.constant 0 : index
    %c768 = arith.constant 768 : index
    %126 = vector.load %arg17[%c0_101, %c768] : memref<2x2048xf32, #tpu.memory_space<vmem>>, vector<1x256xf32>
    tpu.vector_store %arg17[%c0_101, %c768], %125 {strides = array<i32>} : memref<2x2048xf32, #tpu.memory_space<vmem>>, vector<1x256xf32>,
    %127 = vector.extract_strided_slice %118 {offsets = [4, 0], sizes = [1, 256], strides = [1, 1]} : vector<8x512xf32> to vector<1x256xf32>
    %c0_102 = arith.constant 0 : index
    %c1024 = arith.constant 1024 : index
    %128 = vector.load %arg17[%c0_102, %c1024] : memref<2x2048xf32, #tpu.memory_space<vmem>>, vector<1x256xf32>
    tpu.vector_store %arg17[%c0_102, %c1024], %127 {strides = array<i32>} : memref<2x2048xf32, #tpu.memory_space<vmem>>, vector<1x256xf32>,
    %129 = vector.extract_strided_slice %118 {offsets = [5, 0], sizes = [1, 256], strides = [1, 1]} : vector<8x512xf32> to vector<1x256xf32>
    %c0_103 = arith.constant 0 : index
    %c1280 = arith.constant 1280 : index
    %130 = vector.load %arg17[%c0_103, %c1280] : memref<2x2048xf32, #tpu.memory_space<vmem>>, vector<1x256xf32>
    tpu.vector_store %arg17[%c0_103, %c1280], %129 {strides = array<i32>} : memref<2x2048xf32, #tpu.memory_space<vmem>>, vector<1x256xf32>,
    %131 = vector.extract_strided_slice %118 {offsets = [6, 0], sizes = [1, 256], strides = [1, 1]} : vector<8x512xf32> to vector<1x256xf32>
    %c0_104 = arith.constant 0 : index
    %c1536 = arith.constant 1536 : index
    %132 = vector.load %arg17[%c0_104, %c1536] : memref<2x2048xf32, #tpu.memory_space<vmem>>, vector<1x256xf32>
    tpu.vector_store %arg17[%c0_104, %c1536], %131 {strides = array<i32>} : memref<2x2048xf32, #tpu.memory_space<vmem>>, vector<1x256xf32>,
    %133 = vector.extract_strided_slice %118 {offsets = [7, 0], sizes = [1, 256], strides = [1, 1]} : vector<8x512xf32> to vector<1x256xf32>
    %c0_105 = arith.constant 0 : index
    %c1792 = arith.constant 1792 : index
    %134 = vector.load %arg17[%c0_105, %c1792] : memref<2x2048xf32, #tpu.memory_space<vmem>>, vector<1x256xf32>
    tpu.vector_store %arg17[%c0_105, %c1792], %133 {strides = array<i32>} : memref<2x2048xf32, #tpu.memory_space<vmem>>, vector<1x256xf32>,
    %135 = vector.extract_strided_slice %118 {offsets = [0, 256], sizes = [1, 256], strides = [1, 1]} : vector<8x512xf32> to vector<1x256xf32>
    %c1_106 = arith.constant 1 : index
    %c0_107 = arith.constant 0 : index
    %136 = vector.load %arg17[%c1_106, %c0_107] : memref<2x2048xf32, #tpu.memory_space<vmem>>, vector<1x256xf32>
    tpu.vector_store %arg17[%c1_106, %c0_107], %135 {strides = array<i32>} : memref<2x2048xf32, #tpu.memory_space<vmem>>, vector<1x256xf32>,
    %137 = vector.extract_strided_slice %118 {offsets = [1, 256], sizes = [1, 256], strides = [1, 1]} : vector<8x512xf32> to vector<1x256xf32>
    %c1_108 = arith.constant 1 : index
    %c256_109 = arith.constant 256 : index
    %138 = vector.load %arg17[%c1_108, %c256_109] : memref<2x2048xf32, #tpu.memory_space<vmem>>, vector<1x256xf32>
    tpu.vector_store %arg17[%c1_108, %c256_109], %137 {strides = array<i32>} : memref<2x2048xf32, #tpu.memory_space<vmem>>, vector<1x256xf32>,
    %139 = vector.extract_strided_slice %118 {offsets = [2, 256], sizes = [1, 256], strides = [1, 1]} : vector<8x512xf32> to vector<1x256xf32>
    %c1_110 = arith.constant 1 : index
    %c512_111 = arith.constant 512 : index
    %140 = vector.load %arg17[%c1_110, %c512_111] : memref<2x2048xf32, #tpu.memory_space<vmem>>, vector<1x256xf32>
    tpu.vector_store %arg17[%c1_110, %c512_111], %139 {strides = array<i32>} : memref<2x2048xf32, #tpu.memory_space<vmem>>, vector<1x256xf32>,
    %141 = vector.extract_strided_slice %118 {offsets = [3, 256], sizes = [1, 256], strides = [1, 1]} : vector<8x512xf32> to vector<1x256xf32>
    %c1_112 = arith.constant 1 : index
    %c768_113 = arith.constant 768 : index
    %142 = vector.load %arg17[%c1_112, %c768_113] : memref<2x2048xf32, #tpu.memory_space<vmem>>, vector<1x256xf32>
    tpu.vector_store %arg17[%c1_112, %c768_113], %141 {strides = array<i32>} : memref<2x2048xf32, #tpu.memory_space<vmem>>, vector<1x256xf32>,
    %143 = vector.extract_strided_slice %118 {offsets = [4, 256], sizes = [1, 256], strides = [1, 1]} : vector<8x512xf32> to vector<1x256xf32>
    %c1_114 = arith.constant 1 : index
    %c1024_115 = arith.constant 1024 : index
    %144 = vector.load %arg17[%c1_114, %c1024_115] : memref<2x2048xf32, #tpu.memory_space<vmem>>, vector<1x256xf32>
    tpu.vector_store %arg17[%c1_114, %c1024_115], %143 {strides = array<i32>} : memref<2x2048xf32, #tpu.memory_space<vmem>>, vector<1x256xf32>,
    %145 = vector.extract_strided_slice %118 {offsets = [5, 256], sizes = [1, 256], strides = [1, 1]} : vector<8x512xf32> to vector<1x256xf32>
    %c1_116 = arith.constant 1 : index
    %c1280_117 = arith.constant 1280 : index
    %146 = vector.load %arg17[%c1_116, %c1280_117] : memref<2x2048xf32, #tpu.memory_space<vmem>>, vector<1x256xf32>
    tpu.vector_store %arg17[%c1_116, %c1280_117], %145 {strides = array<i32>} : memref<2x2048xf32, #tpu.memory_space<vmem>>, vector<1x256xf32>,
    %147 = vector.extract_strided_slice %118 {offsets = [6, 256], sizes = [1, 256], strides = [1, 1]} : vector<8x512xf32> to vector<1x256xf32>
    %c1_118 = arith.constant 1 : index
    %c1536_119 = arith.constant 1536 : index
    %148 = vector.load %arg17[%c1_118, %c1536_119] : memref<2x2048xf32, #tpu.memory_space<vmem>>, vector<1x256xf32>
    tpu.vector_store %arg17[%c1_118, %c1536_119], %147 {strides = array<i32>} : memref<2x2048xf32, #tpu.memory_space<vmem>>, vector<1x256xf32>,
    %149 = vector.extract_strided_slice %118 {offsets = [7, 256], sizes = [1, 256], strides = [1, 1]} : vector<8x512xf32> to vector<1x256xf32>
    %c1_120 = arith.constant 1 : index
    %c1792_121 = arith.constant 1792 : index
    %150 = vector.load %arg17[%c1_120, %c1792_121] : memref<2x2048xf32, #tpu.memory_space<vmem>>, vector<1x256xf32>
    tpu.vector_store %arg17[%c1_120, %c1792_121], %149 {strides = array<i32>} : memref<2x2048xf32, #tpu.memory_space<vmem>>, vector<1x256xf32>,
    tpu.wait_dma2 semaphore(%arg19 : memref<!tpu.dma_semaphore, #tpu.memory_space<semaphore_mem>>) src(%arg12 : memref<2048x256xf32, #tpu.memory_space<any>>) dst(%arg18 : memref<2048x256xf32, #tpu.memory_space<vmem>>)
    %c0_122 = arith.constant 0 : index
    %c0_123 = arith.constant 0 : index
    %151 = vector.load %arg17[%c0_122, %c0_123] : memref<2x2048xf32, #tpu.memory_space<vmem>>, vector<2x2048xf32>
    %c0_124 = arith.constant 0 : index
    %c0_125 = arith.constant 0 : index
    %152 = vector.load %arg18[%c0_124, %c0_125] : memref<2048x256xf32, #tpu.memory_space<vmem>>, vector<2048x256xf32>
    %cst_126 = arith.constant dense<0.000000e+00> : vector<2x256xf32>
    %153 = tpu.matmul %151, %152, %cst_126 {dimension_numbers = #tpu.dot_dimension_numbers<[1], [0], [0], [1], [0, 0, 1, 1], [], []>} : vector<2x2048xf32>, vector<2048x256xf32>, vector<2x256xf32> -> vector<2x256xf32>
    %c0_127 = arith.constant 0 : index
    %c0_128 = arith.constant 0 : index
    %154 = vector.load %arg13[%c0_127, %c0_128] : memref<1x256xf32, #tpu.memory_space<vmem>>, vector<1x256xf32>
    %155 = vector.broadcast %154 : vector<1x256xf32> to vector<2x256xf32>
    %156 = arith.addf %153, %155 : vector<2x256xf32>
    %cst_129 = arith.constant dense<0xFF800000> : vector<2xf32>
    %157 = vector.multi_reduction <maximumf>, %156, %cst_129 [1] : vector<2x256xf32> to vector<2xf32>
    %158 = vector.shape_cast %157 : vector<2xf32> to vector<2x1xf32>
    %159 = vector.broadcast %158 : vector<2x1xf32> to vector<2x256xf32>
    %160 = arith.subf %156, %159 : vector<2x256xf32>
    %161 = math.exp %160 : vector<2x256xf32>
    %cst_130 = arith.constant dense<0.000000e+00> : vector<2xf32>
    %162 = vector.multi_reduction <add>, %161, %cst_130 [1] : vector<2x256xf32> to vector<2xf32>
    %163 = vector.shape_cast %162 : vector<2xf32> to vector<2x1xf32>
    %164 = tpu.reciprocal %163 : vector<2x1xf32> -> vector<2x1xf32>
    %165 = vector.broadcast %164 : vector<2x1xf32> to vector<2x256xf32>
    %166 = arith.mulf %161, %165 : vector<2x256xf32>
    %cst_131 = arith.constant 1.000000e+00 : f32
    %167 = arith.subf %cst_131, %0 : f32
    %168 = vector.broadcast %167 : f32 to vector<2x256xf32>
    %169 = arith.mulf %166, %168 : vector<2x256xf32>
    %c0_132 = arith.constant 0 : index
    %c0_133 = arith.constant 0 : index
    %c0_134 = arith.constant 0 : index
    %170 = vector.load %arg14[%c0_132, %c0_133, %c0_134] : memref<1x2x256xf32, #tpu.memory_space<vmem>>, vector<1x2x256xf32>
    %171 = vector.shape_cast %170 : vector<1x2x256xf32> to vector<2x256xf32>
    %172 = vector.broadcast %0 : f32 to vector<2x256xf32>
    %173 = arith.mulf %171, %172 : vector<2x256xf32>
    %174 = arith.addf %169, %173 : vector<2x256xf32>
    %c0_135 = arith.constant 0 : index
    %c0_136 = arith.constant 0 : index
    %c0_137 = arith.constant 0 : index
    %175 = vector.load %arg16[%c0_135, %c0_136, %c0_137] : memref<1x2x256xf32, #tpu.memory_space<vmem>>, vector<1x2x256xf32>
    %176 = vector.shape_cast %175 : vector<1x2x256xf32> to vector<2x256xf32>
    %177 = vector.shape_cast %174 : vector<2x256xf32> to vector<1x2x256xf32>
    tpu.vector_store %arg16[%c0_135, %c0_136, %c0_137], %177 {strides = array<i32>} : memref<1x2x256xf32, #tpu.memory_space<vmem>>, vector<1x2x256xf32>,
    return
  }
  func.func @transform_0(%arg0: i32) -> (i32, i32, i32) {
    %c0_i32 = arith.constant 0 : i32
    %c0_i32_0 = arith.constant 0 : i32
    %c0_i32_1 = arith.constant 0 : i32
    return %arg0, %c0_i32, %c0_i32_0 : i32, i32, i32
  }
  func.func @transform_1(%arg0: i32) -> (i32, i32) {
    %c0_i32 = arith.constant 0 : i32
    %c0_i32_0 = arith.constant 0 : i32
    %c0_i32_1 = arith.constant 0 : i32
    return %c0_i32, %c0_i32_0 : i32, i32
  }
  func.func @transform_2(%arg0: i32) -> (i32, i32) {
    %c0_i32 = arith.constant 0 : i32
    %c0_i32_0 = arith.constant 0 : i32
    %c0_i32_1 = arith.constant 0 : i32
    return %c0_i32, %c0_i32_0 : i32, i32
  }
  func.func @transform_3(%arg0: i32) -> (i32, i32) {
    %c0_i32 = arith.constant 0 : i32
    %c0_i32_0 = arith.constant 0 : i32
    %c0_i32_1 = arith.constant 0 : i32
    return %c0_i32, %c0_i32_0 : i32, i32
  }
  func.func @transform_4(%arg0: i32) -> (i32, i32) {
    %c0_i32 = arith.constant 0 : i32
    %c0_i32_0 = arith.constant 0 : i32
    %c0_i32_1 = arith.constant 0 : i32
    return %c0_i32, %c0_i32_0 : i32, i32
  }
  func.func @transform_5(%arg0: i32) -> (i32, i32, i32) {
    %c0_i32 = arith.constant 0 : i32
    %c0_i32_0 = arith.constant 0 : i32
    %c0_i32_1 = arith.constant 0 : i32
    %c0_i32_2 = arith.constant 0 : i32
    return %c0_i32, %c0_i32_0, %c0_i32_1 : i32, i32, i32
  }
  func.func @transform_6(%arg0: i32) -> (i32, i32, i32) {
    %c0_i32 = arith.constant 0 : i32
    %c0_i32_0 = arith.constant 0 : i32
    %c0_i32_1 = arith.constant 0 : i32
    %c0_i32_2 = arith.constant 0 : i32
    return %c0_i32, %c0_i32_0, %c0_i32_1 : i32, i32, i32
  }
  func.func @transform_7(%arg0: i32) -> (i32, i32, i32) {
    %c0_i32 = arith.constant 0 : i32
    %c0_i32_0 = arith.constant 0 : i32
    %c0_i32_1 = arith.constant 0 : i32
    %c0_i32_2 = arith.constant 0 : i32
    return %c0_i32, %c0_i32_0, %c0_i32_1 : i32, i32, i32
  }
  func.func @transform_8(%arg0: i32) -> (i32, i32, i32) {
    %c0_i32 = arith.constant 0 : i32
    %c0_i32_0 = arith.constant 0 : i32
    %c0_i32_1 = arith.constant 0 : i32
    %c0_i32_2 = arith.constant 0 : i32
    return %c0_i32, %c0_i32_0, %c0_i32_1 : i32, i32, i32
  }
  func.func @transform_9(%arg0: i32) -> (i32, i32) {
    %c0_i32 = arith.constant 0 : i32
    %c0_i32_0 = arith.constant 0 : i32
    %c0_i32_1 = arith.constant 0 : i32
    return %c0_i32, %c0_i32_0 : i32, i32
  }
  func.func @transform_10(%arg0: i32) -> (i32, i32) {
    %c0_i32 = arith.constant 0 : i32
    %c0_i32_0 = arith.constant 0 : i32
    %c0_i32_1 = arith.constant 0 : i32
    return %c0_i32, %c0_i32_0 : i32, i32
  }
  func.func @transform_12(%arg0: i32) -> (i32, i32) {
    %c0_i32 = arith.constant 0 : i32
    %c0_i32_0 = arith.constant 0 : i32
    %c0_i32_1 = arith.constant 0 : i32
    return %c0_i32, %c0_i32_0 : i32, i32
  }
  func.func @transform_13(%arg0: i32) -> (i32, i32, i32) {
    %c0_i32 = arith.constant 0 : i32
    %c0_i32_0 = arith.constant 0 : i32
    %c0_i32_1 = arith.constant 0 : i32
    return %arg0, %c0_i32, %c0_i32_0 : i32, i32, i32
  }
  func.func @transform_14(%arg0: i32) -> (i32, i32) {
    %c0_i32 = arith.constant 0 : i32
    %c0_i32_0 = arith.constant 0 : i32
    %c0_i32_1 = arith.constant 0 : i32
    return %c0_i32, %c0_i32_0 : i32, i32
  }
  func.func @transform_15(%arg0: i32) -> (i32, i32, i32) {
    %c0_i32 = arith.constant 0 : i32
    %c0_i32_0 = arith.constant 0 : i32
    %c0_i32_1 = arith.constant 0 : i32
    return %arg0, %c0_i32, %c0_i32_0 : i32, i32, i32
  }
}

</mosaic_0001>

<llo_original>
// kernel: tpu_custom_call.1
$region0: #{tpu_custom_call.1}
  #allocation0 [shape = 'u32[]', space=smem, size = 0x4, offset = 0x4, fixed_abs, tag = 'smem constant byte address 0x4 - core index']
  #allocation1 [shape = 'u32[72,128]{1,0:T(1,128)}', space=vmem, size = 0x9000, scoped, tag = 'internal scratch']
  #allocation2 [shape = 'f32[2,2048]{1,0:T(2,128)}', space=vmem, size = 0x4000, scoped, tag = 'scratch operand']
  #allocation3 [shape = 'f32[2048,256]{1,0:T(8,128)}', space=vmem, size = 0x200000, scoped, tag = 'scratch operand']
  #allocation4 [shape = 's32[1]{0}', space=sflag, size = 0x4, scoped, tag = 'scratch operand']
  #allocation5 [shape = 'f32[1,1]{1,0:T(1,128)S(6)}', space=smem, size = 0x200, scoped, tag = 'scoped memory for tpu_custom_call.1']
  #allocation19 [shape = 's32[]', space=sflag, size = 0x4, offset = 0, fixed_abs, tag = 'sflag constant byte address 0x0 - dummy sync flag']
  #allocation20 [shape = 's32[]', space=sflag, size = 0x4, offset = 0, fixed_abs, tag = 'sflag constant byte address 0x0 - dummy sync flag']
  #allocation21 [shape = 'u32[]', space=smem, size = 0x4, offset = 0x44, fixed_abs, tag = 'smem constant byte address 0x44 - assertion arg 0']
  #allocation22 [shape = 'u32[]', space=smem, size = 0x4, offset = 0x48, fixed_abs, tag = 'smem constant byte address 0x48 - assertion arg 1']
  %s0 = inlined_call_operand.hbm [shape: f32[1,16,512], index: 0, kind: input, shape index: {}]
  %s1 = inlined_call_operand.vmem [shape: f32[32,16], index: 1, kind: input, shape index: {}]
  %s2 = inlined_call_operand.vmem [shape: f32[32,1], index: 2, kind: input, shape index: {}]
  %s3 = inlined_call_operand.hbm [shape: f32[32,32], index: 3, kind: input, shape index: {}]
  %s4 = inlined_call_operand.vmem [shape: f32[32,1], index: 4, kind: input, shape index: {}]
  %s5 = inlined_call_operand.hbm [shape: f32[5,32,32], index: 5, kind: input, shape index: {}]
  %s6 = inlined_call_operand.vmem [shape: f32[5,32,1], index: 6, kind: input, shape index: {}]
  %s7 = inlined_call_operand.hbm [shape: f32[5,32,32], index: 7, kind: input, shape index: {}]
  %s8 = inlined_call_operand.vmem [shape: f32[5,32,1], index: 8, kind: input, shape index: {}]
  %s9 = inlined_call_operand.hbm [shape: f32[8,32], index: 9, kind: input, shape index: {}]
  %s10 = inlined_call_operand.vmem [shape: f32[8,1], index: 10, kind: input, shape index: {}]
  %s11 = inlined_call_operand.hbm [shape: f32[2048,256], index: 11, kind: input, shape index: {}]
  %s12 = inlined_call_operand.hbm [shape: f32[1,256], index: 12, kind: input, shape index: {}]
  %s13 = inlined_call_operand.hbm [shape: f32[1,2,256], index: 13, kind: input, shape index: {}]
  %s14 = inlined_call_operand.<no memory space> [shape: f32[1,1], index: 14, kind: input, shape index: {}]
  %s15 = inlined_call_operand.hbm [shape: f32[1,2,256], index: 15, kind: output, shape index: {}]
  %s16 = sld [smem:[#allocation0]]
  $region98: #{tpu_custom_call.1} parent=0
    _
  %s18 = ssub.s32 1, %s16
  %s19 = scalar_select 0, %s18, %s16
  %20 = sst [smem:[#allocation5]] %s14
  $region1: #{tpu_custom_call.1} parent=0
    #allocation6 [shape = 'u8[32768]{0}', space=vmem, size = 0x8000, scoped, tag = 'input window, operand 0, single buffered']
    #allocation7 [shape = 's32[1]{0}', space=sflag, size = 0x4, scoped, tag = 'scoped memory for tpu_custom_call.1']
    #allocation8 [shape = 's32[1]{0}', space=sflag, size = 0x4, scoped, tag = 'scoped memory for tpu_custom_call.1']
    #allocation9 [shape = 'u8[16384]{0}', space=vmem, size = 0x4000, scoped, tag = 'input window, operand 3, single buffered']
    #allocation10 [shape = 's32[1]{0}', space=sflag, size = 0x4, scoped, tag = 'scoped memory for tpu_custom_call.1']
    #allocation11 [shape = 'u8[81920]{0}', space=vmem, size = 0x14000, scoped, tag = 'input window, operand 5, single buffered']
    #allocation12 [shape = 'u8[81920]{0}', space=vmem, size = 0x14000, scoped, tag = 'input window, operand 7, single buffered']
    #allocation13 [shape = 's32[1]{0}', space=sflag, size = 0x4, scoped, tag = 'scoped memory for tpu_custom_call.1']
    #allocation14 [shape = 'u8[4096]{0}', space=vmem, size = 0x1000, scoped, tag = 'input window, operand 9, single buffered']
    #allocation15 [shape = 'u8[1024]{0}', space=vmem, size = 0x400, scoped, tag = 'input window, operand 12, single buffered']
    #allocation16 [shape = 's32[1]{0}', space=sflag, size = 0x4, scoped, tag = 'scoped memory for tpu_custom_call.1']
    #allocation17 [shape = 'u8[2048]{0}', space=vmem, size = 0x800, scoped, tag = 'input window, operand 13, single buffered']
    #allocation18 [shape = 'u8[2048]{0}', space=vmem, size = 0x800, scoped, tag = 'output window, operand 0, single buffered']
    %21 = vsyncpa [#allocation7], 0
    %22 = vsyncpa [#allocation10], 0
    %23 = vsyncpa [#allocation13], 0
    %24 = vsyncpa [#allocation16], 0
    %25 = vsyncpa [#allocation8], 0
    // Predicated region
    $region2: #{tpu_custom_call.1} parent=1 // pred_check
      _
    $region3: #{tpu_custom_call.1} parent=1 // pred_check_branch
      %27 = sbr.rel (0) target = $region5
    $region4: #{tpu_custom_call.1} parent=1 // pred_region
      %29 = vsyncadd [#allocation7], 0
      %s30 = sshll.u32 %s0, 4
      %s31 = int_to_ptr.hbm [resolvable:$true] %s30
      %s32 = sshll.u32 [#allocation6], 4
      %s33 = int_to_ptr.vmem [resolvable:$true] %s32
      %38 = dma.hbm_to_vmem [thread:$0]  %s31, 1024, %s33, [#allocation7], 512, 512, 32
    $region5: #{tpu_custom_call.1} parent=1 // pred_fallthru
      _
    // Predicated region
    $region6: #{tpu_custom_call.1} parent=1 // pred_check
      _
    $region7: #{tpu_custom_call.1} parent=1 // pred_check_branch
      %40 = sbr.rel (0) target = $region9
    $region8: #{tpu_custom_call.1} parent=1 // pred_region
      _
    $region9: #{tpu_custom_call.1} parent=1 // pred_fallthru
      _
    // Predicated region
    $region10: #{tpu_custom_call.1} parent=1 // pred_check
      _
    $region11: #{tpu_custom_call.1} parent=1 // pred_check_branch
      %42 = sbr.rel (0) target = $region13
    $region12: #{tpu_custom_call.1} parent=1 // pred_region
      _
    $region13: #{tpu_custom_call.1} parent=1 // pred_fallthru
      _
    // Predicated region
    $region14: #{tpu_custom_call.1} parent=1 // pred_check
      _
    $region15: #{tpu_custom_call.1} parent=1 // pred_check_branch
      %44 = sbr.rel (0) target = $region17
    $region16: #{tpu_custom_call.1} parent=1 // pred_region
      %46 = vsyncadd [#allocation10], 0
      %s47 = sshll.u32 %s3, 4
      %s48 = int_to_ptr.hbm [resolvable:$true] %s47
      %s49 = sshll.u32 [#allocation9], 4
      %s50 = int_to_ptr.vmem [resolvable:$true] %s49
      %55 = dma.hbm_to_vmem [thread:$0]  %s48, 512, %s50, [#allocation10], 128, 128, 8
    $region17: #{tpu_custom_call.1} parent=1 // pred_fallthru
      _
    // Predicated region
    $region18: #{tpu_custom_call.1} parent=1 // pred_check
      _
    $region19: #{tpu_custom_call.1} parent=1 // pred_check_branch
      %57 = sbr.rel (0) target = $region21
    $region20: #{tpu_custom_call.1} parent=1 // pred_region
      _
    $region21: #{tpu_custom_call.1} parent=1 // pred_fallthru
      _
    // Predicated region
    $region22: #{tpu_custom_call.1} parent=1 // pred_check
      _
    $region23: #{tpu_custom_call.1} parent=1 // pred_check_branch
      %59 = sbr.rel (0) target = $region25
    $region24: #{tpu_custom_call.1} parent=1 // pred_region
      %61 = vsyncadd [#allocation10], 0
      %s62 = sshll.u32 %s5, 4
      %s63 = int_to_ptr.hbm [resolvable:$true] %s62
      %s64 = sshll.u32 [#allocation11], 4
      %s65 = int_to_ptr.vmem [resolvable:$true] %s64
      %70 = dma.hbm_to_vmem [thread:$0]  %s63, 2560, %s65, [#allocation10], 128, 128, 8
    $region25: #{tpu_custom_call.1} parent=1 // pred_fallthru
      _
    // Predicated region
    $region26: #{tpu_custom_call.1} parent=1 // pred_check
      _
    $region27: #{tpu_custom_call.1} parent=1 // pred_check_branch
      %72 = sbr.rel (0) target = $region29
    $region28: #{tpu_custom_call.1} parent=1 // pred_region
      _
    $region29: #{tpu_custom_call.1} parent=1 // pred_fallthru
      _
    // Predicated region
    $region30: #{tpu_custom_call.1} parent=1 // pred_check
      _
    $region31: #{tpu_custom_call.1} parent=1 // pred_check_branch
      %74 = sbr.rel (0) target = $region33
    $region32: #{tpu_custom_call.1} parent=1 // pred_region
      %76 = vsyncadd [#allocation13], 0
      %s77 = sshll.u32 %s7, 4
      %s78 = int_to_ptr.hbm [resolvable:$true] %s77
      %s79 = sshll.u32 [#allocation12], 4
      %s80 = int_to_ptr.vmem [resolvable:$true] %s79
      %85 = dma.hbm_to_vmem [thread:$0]  %s78, 2560, %s80, [#allocation13], 128, 128, 8
    $region33: #{tpu_custom_call.1} parent=1 // pred_fallthru
      _
    // Predicated region
    $region34: #{tpu_custom_call.1} parent=1 // pred_check
      _
    $region35: #{tpu_custom_call.1} parent=1 // pred_check_branch
      %87 = sbr.rel (0) target = $region37
    $region36: #{tpu_custom_call.1} parent=1 // pred_region
      _
    $region37: #{tpu_custom_call.1} parent=1 // pred_fallthru
      _
    // Predicated region
    $region38: #{tpu_custom_call.1} parent=1 // pred_check
      _
    $region39: #{tpu_custom_call.1} parent=1 // pred_check_branch
      %89 = sbr.rel (0) target = $region41
    $region40: #{tpu_custom_call.1} parent=1 // pred_region
      %91 = vsyncadd [#allocation13], 0
      %s93 = sshll.u32 %s9, 4
      %s94 = int_to_ptr.hbm [resolvable:$true] %s93
      %s95 = sshll.u32 [#allocation14], 4
      %s96 = int_to_ptr.vmem [resolvable:$true] %s95
      %98 = dma.hbm_to_vmem [thread:$0]  %s94, 128, %s96, [#allocation13]
    $region41: #{tpu_custom_call.1} parent=1 // pred_fallthru
      _
    // Predicated region
    $region42: #{tpu_custom_call.1} parent=1 // pred_check
      _
    $region43: #{tpu_custom_call.1} parent=1 // pred_check_branch
      %100 = sbr.rel (0) target = $region45
    $region44: #{tpu_custom_call.1} parent=1 // pred_region
      _
    $region45: #{tpu_custom_call.1} parent=1 // pred_fallthru
      _
    // Predicated region
    $region46: #{tpu_custom_call.1} parent=1 // pred_check
      _
    $region47: #{tpu_custom_call.1} parent=1 // pred_check_branch
      %102 = sbr.rel (0) target = $region49
    $region48: #{tpu_custom_call.1} parent=1 // pred_region
      %104 = vsyncadd [#allocation16], 0
      %s106 = sshll.u32 %s12, 4
      %s107 = int_to_ptr.hbm [resolvable:$true] %s106
      %s108 = sshll.u32 [#allocation15], 4
      %s109 = int_to_ptr.vmem [resolvable:$true] %s108
      %111 = dma.hbm_to_vmem [thread:$0]  %s107, 32, %s109, [#allocation16]
    $region49: #{tpu_custom_call.1} parent=1 // pred_fallthru
      _
    // Predicated region
    $region50: #{tpu_custom_call.1} parent=1 // pred_check
      _
    $region51: #{tpu_custom_call.1} parent=1 // pred_check_branch
      %113 = sbr.rel (0) target = $region53
    $region52: #{tpu_custom_call.1} parent=1 // pred_region
      %115 = vsyncadd [#allocation16], 0
      %s117 = sshll.u32 %s13, 4
      %s118 = int_to_ptr.hbm [resolvable:$true] %s117
      %s119 = sshll.u32 [#allocation17], 4
      %s120 = int_to_ptr.vmem [resolvable:$true] %s119
      %122 = dma.hbm_to_vmem [thread:$0]  %s118, 64, %s120, [#allocation16]
    $region53: #{tpu_custom_call.1} parent=1 // pred_fallthru
      _
    // Predicated region
    $region54: #{tpu_custom_call.1} parent=1 // pred_check
      _
    $region55: #{tpu_custom_call.1} parent=1 // pred_check_branch
      %124 = sbr.rel (0) target = $region57
    $region56: #{tpu_custom_call.1} parent=1 // pred_region
      _
    $region57: #{tpu_custom_call.1} parent=1 // pred_fallthru
      _
    // Predicated region
    $region58: #{tpu_custom_call.1} parent=1 // pred_check
      _
    $region59: #{tpu_custom_call.1} parent=1 // pred_check_branch
      %126 = sbr.rel (0) target = $region61
    $region60: #{tpu_custom_call.1} parent=1 // pred_region
      %128 = dma.done [#allocation7], 1024
    $region61: #{tpu_custom_call.1} parent=1 // pred_fallthru
      _
    // Predicated region
    $region62: #{tpu_custom_call.1} parent=1 // pred_check
      _
    $region63: #{tpu_custom_call.1} parent=1 // pred_check_branch
      %130 = sbr.rel (0) target = $region65
    $region64: #{tpu_custom_call.1} parent=1 // pred_region
      %132 = dma.done [#allocation10], 512
    $region65: #{tpu_custom_call.1} parent=1 // pred_fallthru
      _
    // Predicated region
    $region66: #{tpu_custom_call.1} parent=1 // pred_check
      _
    $region67: #{tpu_custom_call.1} parent=1 // pred_check_branch
      %134 = sbr.rel (0) target = $region69
    $region68: #{tpu_custom_call.1} parent=1 // pred_region
      %136 = dma.done [#allocation10], 2560
    $region69: #{tpu_custom_call.1} parent=1 // pred_fallthru
      _
    // Predicated region
    $region70: #{tpu_custom_call.1} parent=1 // pred_check
      _
    $region71: #{tpu_custom_call.1} parent=1 // pred_check_branch
      %138 = sbr.rel (0) target = $region73
    $region72: #{tpu_custom_call.1} parent=1 // pred_region
      %140 = dma.done [#allocation13], 2560
    $region73: #{tpu_custom_call.1} parent=1 // pred_fallthru
      _
    // Predicated region
    $region74: #{tpu_custom_call.1} parent=1 // pred_check
      _
    $region75: #{tpu_custom_call.1} parent=1 // pred_check_branch
      %142 = sbr.rel (0) target = $region77
    $region76: #{tpu_custom_call.1} parent=1 // pred_region
      %144 = dma.done [#allocation13], 128
    $region77: #{tpu_custom_call.1} parent=1 // pred_fallthru
      _
    // Predicated region
    $region78: #{tpu_custom_call.1} parent=1 // pred_check
      _
    $region79: #{tpu_custom_call.1} parent=1 // pred_check_branch
      %146 = sbr.rel (0) target = $region81
    $region80: #{tpu_custom_call.1} parent=1 // pred_region
      %148 = dma.done [#allocation16], 32
    $region81: #{tpu_custom_call.1} parent=1 // pred_fallthru
      _
    // Predicated region
    $region82: #{tpu_custom_call.1} parent=1 // pred_check
      _
    $region83: #{tpu_custom_call.1} parent=1 // pred_check_branch
      %150 = sbr.rel (0) target = $region85
    $region84: #{tpu_custom_call.1} parent=1 // pred_region
      %152 = dma.done [#allocation16], 64
    $region85: #{tpu_custom_call.1} parent=1 // pred_fallthru
      _
    // Predicated region
    $region86: #{tpu_custom_call.1} parent=1 // pred_check
      _
    $region87: #{tpu_custom_call.1} parent=1 // pred_check_branch
      %154 = sbr.rel target = $region89
    $region88: #{tpu_custom_call.1} parent=1 // pred_region
      %155 = sst [smem:[#allocation21]] [#allocation20]
      %156 = sst [smem:[#allocation22]] [#allocation19]
    $region89: #{tpu_custom_call.1} parent=1 // pred_fallthru
      _
    %158 = shalt.err (0)
    %s160 = sshll.u32 %s11, 4
    %s161 = int_to_ptr.hbm [resolvable:$true] %s160
    %s162 = sshll.u32 [#allocation3], 4
    %s163 = int_to_ptr.vmem [resolvable:$true] %s162
    %165 = dma.hbm_to_vmem [thread:$0]  %s161, 65536, %s163, [#allocation4]
    %s166 = sld [smem:[#allocation5]]
    %v167 = vld [vmem:[#allocation6] sm:$0xff]
    %v168 = vld [vmem:[#allocation6 + $0x8] sm:$0xff]
    %v169 = vld [vmem:[#allocation6 + $0x10] sm:$0xff]
    %v170 = vld [vmem:[#allocation6 + $0x18] sm:$0xff]
    %v171 = vld [vmem:[#allocation6 + $0x20] sm:$0xff]
    %v172 = vld [vmem:[#allocation6 + $0x28] sm:$0xff]
    %v173 = vld [vmem:[#allocation6 + $0x30] sm:$0xff]
    %v174 = vld [vmem:[#allocation6 + $0x38] sm:$0xff]
    %v175 = vld [vmem:[%s1] sm:$0xff]
    %v176 = vld [vmem:[%s1 + $0x8] sm:$0xff]
    %v177 = vld [vmem:[%s1 + $0x10] sm:$0xff]
    %v178 = vld [vmem:[%s1 + $0x18] sm:$0xff]
    %v179 = vld [vmem:[%s2] sm:$0xff]
    %v180 = vld [vmem:[%s2 + $0x8] sm:$0xff]
    %v181 = vld [vmem:[%s2 + $0x10] sm:$0xff]
    %v182 = vld [vmem:[%s2 + $0x18] sm:$0xff]
    %v183 = vld [vmem:[#allocation9] sm:$0xff]
    %v184 = vld [vmem:[#allocation9 + $0x8] sm:$0xff]
    %v185 = vld [vmem:[#allocation9 + $0x10] sm:$0xff]
    %v186 = vld [vmem:[#allocation9 + $0x18] sm:$0xff]
    %v187 = vld [vmem:[%s4] sm:$0xff]
    %v188 = vld [vmem:[%s4 + $0x8] sm:$0xff]
    %v189 = vld [vmem:[%s4 + $0x10] sm:$0xff]
    %v190 = vld [vmem:[%s4 + $0x18] sm:$0xff]
    %192 = vset.pattern.permute.xlu0 0
    %193 = vperm.xlu0 %192, %v179
    %v194 = vpop.permute.xlu0 %193
    %197 = vset.pattern.permute.xlu0 0
    %198 = vperm.xlu0 %197, %v180
    %v199 = vpop.permute.xlu0 %198
    %202 = vset.pattern.permute.xlu0 0
    %203 = vperm.xlu0 %202, %v181
    %v204 = vpop.permute.xlu0 %203
    %207 = vset.pattern.permute.xlu0 0
    %208 = vperm.xlu0 %207, %v182
    %v209 = vpop.permute.xlu0 %208
    %vm211 = vcmask 130048
    %v213 = vsel %vm211, %v175, 0
    %v216 = vsel %vm211, %v176, 0
    %v219 = vsel %vm211, %v177, 0
    %v222 = vsel %vm211, %v178, 0
    %224 = vmatpush.msra.mxu0 0.0
    %225 = vmatpush.msra.mxu0 0.0
    %226 = vmatpush.msra.mxu0 0.0
    %227 = vmatpush.msra.mxu0 0.0
    %228 = vmatpush.msra.mxu0 0.0
    %229 = vmatpush.msra.mxu0 0.0
    %230 = vmatpush.msra.mxu0 0.0
    %231 = vmatpush.msra.mxu0 0.0
    %232 = vmatpush.msra.mxu0 0.0
    %233 = vmatpush.msra.mxu0 0.0
    %234 = vmatpush.msra.mxu0 0.0
    %235 = vmatpush.msra.mxu0 0.0
    %236 = vmatpush.msra.mxu0 0.0
    %237 = vmatpush.msra.mxu0 0.0
    %238 = vmatpush.msra.mxu0 %v171
    %239 = vmatpush.msra.mxu0 %v167
    %240 = vmatmul.f32.gmra.mxu0 %v213
    %v241 = vpop.f32.mrf.mxu0
    %v242 = vadd.f32 %v194, %v241
    %243 = vmatmul.f32.gmra.mxu0 %v216
    %v244 = vpop.f32.mrf.mxu0
    %v245 = vadd.f32 %v199, %v244
    %246 = vmatmul.f32.gmra.mxu0 %v219
    %v247 = vpop.f32.mrf.mxu0
    %v248 = vadd.f32 %v204, %v247
    %249 = vmatmul.f32.gmra.mxu0 %v222
    %v250 = vpop.f32.mrf.mxu0
    %v251 = vadd.f32 %v209, %v250
    %252 = vdwg.mxu0
    %253 = vmatpush.msra.mxu0 0.0
    %254 = vmatpush.msra.mxu0 0.0
    %255 = vmatpush.msra.mxu0 0.0
    %256 = vmatpush.msra.mxu0 0.0
    %257 = vmatpush.msra.mxu0 0.0
    %258 = vmatpush.msra.mxu0 0.0
    %259 = vmatpush.msra.mxu0 0.0
    %260 = vmatpush.msra.mxu0 0.0
    %261 = vmatpush.msra.mxu0 0.0
    %262 = vmatpush.msra.mxu0 0.0
    %263 = vmatpush.msra.mxu0 0.0
    %264 = vmatpush.msra.mxu0 0.0
    %265 = vmatpush.msra.mxu0 0.0
    %266 = vmatpush.msra.mxu0 0.0
    %267 = vmatpush.msra.mxu0 %v172
    %268 = vmatpush.msra.mxu0 %v168
    %269 = vmatmul.f32.gmra.mxu0 %v213
    %v270 = vpop.f32.mrf.mxu0
    %v271 = vadd.f32 %v194, %v270
    %272 = vmatmul.f32.gmra.mxu0 %v216
    %v273 = vpop.f32.mrf.mxu0
    %v274 = vadd.f32 %v199, %v273
    %275 = vmatmul.f32.gmra.mxu0 %v219
    %v276 = vpop.f32.mrf.mxu0
    %v277 = vadd.f32 %v204, %v276
    %278 = vmatmul.f32.gmra.mxu0 %v222
    %v279 = vpop.f32.mrf.mxu0
    %v280 = vadd.f32 %v209, %v279
    %281 = vdwg.mxu0
    %282 = vmatpush.msra.mxu0 0.0
    %283 = vmatpush.msra.mxu0 0.0
    %284 = vmatpush.msra.mxu0 0.0
    %285 = vmatpush.msra.mxu0 0.0
    %286 = vmatpush.msra.mxu0 0.0
    %287 = vmatpush.msra.mxu0 0.0
    %288 = vmatpush.msra.mxu0 0.0
    %289 = vmatpush.msra.mxu0 0.0
    %290 = vmatpush.msra.mxu0 0.0
    %291 = vmatpush.msra.mxu0 0.0
    %292 = vmatpush.msra.mxu0 0.0
    %293 = vmatpush.msra.mxu0 0.0
    %294 = vmatpush.msra.mxu0 0.0
    %295 = vmatpush.msra.mxu0 0.0
    %296 = vmatpush.msra.mxu0 %v173
    %297 = vmatpush.msra.mxu0 %v169
    %298 = vmatmul.f32.gmra.mxu0 %v213
    %v299 = vpop.f32.mrf.mxu0
    %v300 = vadd.f32 %v194, %v299
    %301 = vmatmul.f32.gmra.mxu0 %v216
    %v302 = vpop.f32.mrf.mxu0
    %v303 = vadd.f32 %v199, %v302
    %304 = vmatmul.f32.gmra.mxu0 %v219
    %v305 = vpop.f32.mrf.mxu0
    %v306 = vadd.f32 %v204, %v305
    %307 = vmatmul.f32.gmra.mxu0 %v222
    %v308 = vpop.f32.mrf.mxu0
    %v309 = vadd.f32 %v209, %v308
    %310 = vdwg.mxu0
    %311 = vmatpush.msra.mxu0 0.0
    %312 = vmatpush.msra.mxu0 0.0
    %313 = vmatpush.msra.mxu0 0.0
    %314 = vmatpush.msra.mxu0 0.0
    %315 = vmatpush.msra.mxu0 0.0
    %316 = vmatpush.msra.mxu0 0.0
    %317 = vmatpush.msra.mxu0 0.0
    %318 = vmatpush.msra.mxu0 0.0
    %319 = vmatpush.msra.mxu0 0.0
    %320 = vmatpush.msra.mxu0 0.0
    %321 = vmatpush.msra.mxu0 0.0
    %322 = vmatpush.msra.mxu0 0.0
    %323 = vmatpush.msra.mxu0 0.0
    %324 = vmatpush.msra.mxu0 0.0
    %325 = vmatpush.msra.mxu0 %v174
    %326 = vmatpush.msra.mxu0 %v170
    %327 = vmatmul.f32.gmra.mxu0 %v213
    %v328 = vpop.f32.mrf.mxu0
    %v329 = vadd.f32 %v194, %v328
    %330 = vmatmul.f32.gmra.mxu0 %v216
    %v331 = vpop.f32.mrf.mxu0
    %v332 = vadd.f32 %v199, %v331
    %333 = vmatmul.f32.gmra.mxu0 %v219
    %v334 = vpop.f32.mrf.mxu0
    %v335 = vadd.f32 %v204, %v334
    %336 = vmatmul.f32.gmra.mxu0 %v222
    %v337 = vpop.f32.mrf.mxu0
    %v338 = vadd.f32 %v209, %v337
    %339 = vdwg.mxu0
    %v340 = vmax.f32 %v242, 0.0
    %v341 = vmax.f32 %v271, 0.0
    %v342 = vmax.f32 %v300, 0.0
    %v343 = vmax.f32 %v329, 0.0
    %v344 = vmax.f32 %v245, 0.0
    %v345 = vmax.f32 %v274, 0.0
    %v346 = vmax.f32 %v303, 0.0
    %v347 = vmax.f32 %v332, 0.0
    %v348 = vmax.f32 %v248, 0.0
    %v349 = vmax.f32 %v277, 0.0
    %v350 = vmax.f32 %v306, 0.0
    %v351 = vmax.f32 %v335, 0.0
    %v352 = vmax.f32 %v251, 0.0
    %v353 = vmax.f32 %v280, 0.0
    %v354 = vmax.f32 %v309, 0.0
    %v355 = vmax.f32 %v338, 0.0
    %357 = vset.pattern.permute.xlu0 0
    %358 = vperm.xlu0 %357, %v187
    %v359 = vpop.permute.xlu0 %358
    %362 = vset.pattern.permute.xlu0 0
    %363 = vperm.xlu0 %362, %v188
    %v364 = vpop.permute.xlu0 %363
    %367 = vset.pattern.permute.xlu0 0
    %368 = vperm.xlu0 %367, %v189
    %v369 = vpop.permute.xlu0 %368
    %372 = vset.pattern.permute.xlu0 0
    %373 = vperm.xlu0 %372, %v190
    %v374 = vpop.permute.xlu0 %373
    %vm376 = vcmask 261120
    %v378 = vsel %vm376, %v183, 0
    %v381 = vsel %vm376, %v184, 0
    %v384 = vsel %vm376, %v185, 0
    %v387 = vsel %vm376, %v186, 0
    %389 = vmatpush.msra.mxu0 0.0
    %390 = vmatpush.msra.mxu0 0.0
    %391 = vmatpush.msra.mxu0 0.0
    %392 = vmatpush.msra.mxu0 0.0
    %393 = vmatpush.msra.mxu0 0.0
    %394 = vmatpush.msra.mxu0 0.0
    %395 = vmatpush.msra.mxu0 0.0
    %396 = vmatpush.msra.mxu0 0.0
    %397 = vmatpush.msra.mxu0 0.0
    %398 = vmatpush.msra.mxu0 0.0
    %399 = vmatpush.msra.mxu0 0.0
    %400 = vmatpush.msra.mxu0 0.0
    %401 = vmatpush.msra.mxu0 %v352
    %402 = vmatpush.msra.mxu0 %v348
    %403 = vmatpush.msra.mxu0 %v344
    %404 = vmatpush.msra.mxu0 %v340
    %405 = vmatmul.f32.gmra.mxu0 %v378
    %v406 = vpop.f32.mrf.mxu0
    %v407 = vadd.f32 %v359, %v406
    %408 = vmatmul.f32.gmra.mxu0 %v381
    %v409 = vpop.f32.mrf.mxu0
    %v410 = vadd.f32 %v364, %v409
    %411 = vmatmul.f32.gmra.mxu0 %v384
    %v412 = vpop.f32.mrf.mxu0
    %v413 = vadd.f32 %v369, %v412
    %414 = vmatmul.f32.gmra.mxu0 %v387
    %v415 = vpop.f32.mrf.mxu0
    %v416 = vadd.f32 %v374, %v415
    %417 = vdwg.mxu0
    %418 = vmatpush.msra.mxu0 0.0
    %419 = vmatpush.msra.mxu0 0.0
    %420 = vmatpush.msra.mxu0 0.0
    %421 = vmatpush.msra.mxu0 0.0
    %422 = vmatpush.msra.mxu0 0.0
    %423 = vmatpush.msra.mxu0 0.0
    %424 = vmatpush.msra.mxu0 0.0
    %425 = vmatpush.msra.mxu0 0.0
    %426 = vmatpush.msra.mxu0 0.0
    %427 = vmatpush.msra.mxu0 0.0
    %428 = vmatpush.msra.mxu0 0.0
    %429 = vmatpush.msra.mxu0 0.0
    %430 = vmatpush.msra.mxu0 %v353
    %431 = vmatpush.msra.mxu0 %v349
    %432 = vmatpush.msra.mxu0 %v345
    %433 = vmatpush.msra.mxu0 %v341
    %434 = vmatmul.f32.gmra.mxu0 %v378
    %v435 = vpop.f32.mrf.mxu0
    %v436 = vadd.f32 %v359, %v435
    %437 = vmatmul.f32.gmra.mxu0 %v381
    %v438 = vpop.f32.mrf.mxu0
    %v439 = vadd.f32 %v364, %v438
    %440 = vmatmul.f32.gmra.mxu0 %v384
    %v441 = vpop.f32.mrf.mxu0
    %v442 = vadd.f32 %v369, %v441
    %443 = vmatmul.f32.gmra.mxu0 %v387
    %v444 = vpop.f32.mrf.mxu0
    %v445 = vadd.f32 %v374, %v444
    %446 = vdwg.mxu0
    %447 = vmatpush.msra.mxu0 0.0
    %448 = vmatpush.msra.mxu0 0.0
    %449 = vmatpush.msra.mxu0 0.0
    %450 = vmatpush.msra.mxu0 0.0
    %451 = vmatpush.msra.mxu0 0.0
    %452 = vmatpush.msra.mxu0 0.0
    %453 = vmatpush.msra.mxu0 0.0
    %454 = vmatpush.msra.mxu0 0.0
    %455 = vmatpush.msra.mxu0 0.0
    %456 = vmatpush.msra.mxu0 0.0
    %457 = vmatpush.msra.mxu0 0.0
    %458 = vmatpush.msra.mxu0 0.0
    %459 = vmatpush.msra.mxu0 %v354
    %460 = vmatpush.msra.mxu0 %v350
    %461 = vmatpush.msra.mxu0 %v346
    %462 = vmatpush.msra.mxu0 %v342
    %463 = vmatmul.f32.gmra.mxu0 %v378
    %v464 = vpop.f32.mrf.mxu0
    %v465 = vadd.f32 %v359, %v464
    %466 = vmatmul.f32.gmra.mxu0 %v381
    %v467 = vpop.f32.mrf.mxu0
    %v468 = vadd.f32 %v364, %v467
    %469 = vmatmul.f32.gmra.mxu0 %v384
    %v470 = vpop.f32.mrf.mxu0
    %v471 = vadd.f32 %v369, %v470
    %472 = vmatmul.f32.gmra.mxu0 %v387
    %v473 = vpop.f32.mrf.mxu0
    %v474 = vadd.f32 %v374, %v473
    %475 = vdwg.mxu0
    %476 = vmatpush.msra.mxu0 0.0
    %477 = vmatpush.msra.mxu0 0.0
    %478 = vmatpush.msra.mxu0 0.0
    %479 = vmatpush.msra.mxu0 0.0
    %480 = vmatpush.msra.mxu0 0.0
    %481 = vmatpush.msra.mxu0 0.0
    %482 = vmatpush.msra.mxu0 0.0
    %483 = vmatpush.msra.mxu0 0.0
    %484 = vmatpush.msra.mxu0 0.0
    %485 = vmatpush.msra.mxu0 0.0
    %486 = vmatpush.msra.mxu0 0.0
    %487 = vmatpush.msra.mxu0 0.0
    %488 = vmatpush.msra.mxu0 %v355
    %489 = vmatpush.msra.mxu0 %v351
    %490 = vmatpush.msra.mxu0 %v347
    %491 = vmatpush.msra.mxu0 %v343
    %492 = vmatmul.f32.gmra.mxu0 %v378
    %v493 = vpop.f32.mrf.mxu0
    %v494 = vadd.f32 %v359, %v493
    %495 = vmatmul.f32.gmra.mxu0 %v381
    %v496 = vpop.f32.mrf.mxu0
    %v497 = vadd.f32 %v364, %v496
    %498 = vmatmul.f32.gmra.mxu0 %v384
    %v499 = vpop.f32.mrf.mxu0
    %v500 = vadd.f32 %v369, %v499
    %501 = vmatmul.f32.gmra.mxu0 %v387
    %v502 = vpop.f32.mrf.mxu0
    %v503 = vadd.f32 %v374, %v502
    %504 = vdwg.mxu0
    %v505 = vmax.f32 %v407, 0.0
    %v506 = vmax.f32 %v436, 0.0
    %v507 = vmax.f32 %v465, 0.0
    %v508 = vmax.f32 %v494, 0.0
    %v509 = vmax.f32 %v410, 0.0
    %v510 = vmax.f32 %v439, 0.0
    %v511 = vmax.f32 %v468, 0.0
    %v512 = vmax.f32 %v497, 0.0
    %v513 = vmax.f32 %v413, 0.0
    %v514 = vmax.f32 %v442, 0.0
    %v515 = vmax.f32 %v471, 0.0
    %v516 = vmax.f32 %v500, 0.0
    %v517 = vmax.f32 %v416, 0.0
    %v518 = vmax.f32 %v445, 0.0
    %v519 = vmax.f32 %v474, 0.0
    %v520 = vmax.f32 %v503, 0.0
    %v521 = vld [vmem:[#allocation11] sm:$0xff]
    %v522 = vld [vmem:[#allocation11 + $0x8] sm:$0xff]
    %v523 = vld [vmem:[#allocation11 + $0x10] sm:$0xff]
    %v524 = vld [vmem:[#allocation11 + $0x18] sm:$0xff]
    %v525 = vld [vmem:[%s6] sm:$0xff]
    %v526 = vld [vmem:[%s6 + $0x8] sm:$0xff]
    %v527 = vld [vmem:[%s6 + $0x10] sm:$0xff]
    %v528 = vld [vmem:[%s6 + $0x18] sm:$0xff]
    %v529 = vld [vmem:[#allocation12] sm:$0xff]
    %v530 = vld [vmem:[#allocation12 + $0x8] sm:$0xff]
    %v531 = vld [vmem:[#allocation12 + $0x10] sm:$0xff]
    %v532 = vld [vmem:[#allocation12 + $0x18] sm:$0xff]
    %v533 = vld [vmem:[%s8] sm:$0xff]
    %v534 = vld [vmem:[%s8 + $0x8] sm:$0xff]
    %v535 = vld [vmem:[%s8 + $0x10] sm:$0xff]
    %v536 = vld [vmem:[%s8 + $0x18] sm:$0xff]
    %538 = vset.pattern.permute.xlu0 0
    %539 = vperm.xlu0 %538, %v525
    %v540 = vpop.permute.xlu0 %539
    %543 = vset.pattern.permute.xlu0 0
    %544 = vperm.xlu0 %543, %v526
    %v545 = vpop.permute.xlu0 %544
    %548 = vset.pattern.permute.xlu0 0
    %549 = vperm.xlu0 %548, %v527
    %v550 = vpop.permute.xlu0 %549
    %553 = vset.pattern.permute.xlu0 0
    %554 = vperm.xlu0 %553, %v528
    %v555 = vpop.permute.xlu0 %554
    %v558 = vsel %vm376, %v521, 0
    %v561 = vsel %vm376, %v522, 0
    %v564 = vsel %vm376, %v523, 0
    %v567 = vsel %vm376, %v524, 0
    %569 = vmatpush.msra.mxu0 0.0
    %570 = vmatpush.msra.mxu0 0.0
    %571 = vmatpush.msra.mxu0 0.0
    %572 = vmatpush.msra.mxu0 0.0
    %573 = vmatpush.msra.mxu0 0.0
    %574 = vmatpush.msra.mxu0 0.0
    %575 = vmatpush.msra.mxu0 0.0
    %576 = vmatpush.msra.mxu0 0.0
    %577 = vmatpush.msra.mxu0 0.0
    %578 = vmatpush.msra.mxu0 0.0
    %579 = vmatpush.msra.mxu0 0.0
    %580 = vmatpush.msra.mxu0 0.0
    %581 = vmatpush.msra.mxu0 %v517
    %582 = vmatpush.msra.mxu0 %v513
    %583 = vmatpush.msra.mxu0 %v509
    %584 = vmatpush.msra.mxu0 %v505
    %585 = vmatmul.f32.gmra.mxu0 %v558
    %v586 = vpop.f32.mrf.mxu0
    %v587 = vadd.f32 %v540, %v586
    %588 = vmatmul.f32.gmra.mxu0 %v561
    %v589 = vpop.f32.mrf.mxu0
    %v590 = vadd.f32 %v545, %v589
    %591 = vmatmul.f32.gmra.mxu0 %v564
    %v592 = vpop.f32.mrf.mxu0
    %v593 = vadd.f32 %v550, %v592
    %594 = vmatmul.f32.gmra.mxu0 %v567
    %v595 = vpop.f32.mrf.mxu0
    %v596 = vadd.f32 %v555, %v595
    %597 = vdwg.mxu0
    %598 = vmatpush.msra.mxu0 0.0
    %599 = vmatpush.msra.mxu0 0.0
    %600 = vmatpush.msra.mxu0 0.0
    %601 = vmatpush.msra.mxu0 0.0
    %602 = vmatpush.msra.mxu0 0.0
    %603 = vmatpush.msra.mxu0 0.0
    %604 = vmatpush.msra.mxu0 0.0
    %605 = vmatpush.msra.mxu0 0.0
    %606 = vmatpush.msra.mxu0 0.0
    %607 = vmatpush.msra.mxu0 0.0
    %608 = vmatpush.msra.mxu0 0.0
    %609 = vmatpush.msra.mxu0 0.0
    %610 = vmatpush.msra.mxu0 %v518
    %611 = vmatpush.msra.mxu0 %v514
    %612 = vmatpush.msra.mxu0 %v510
    %613 = vmatpush.msra.mxu0 %v506
    %614 = vmatmul.f32.gmra.mxu0 %v558
    %v615 = vpop.f32.mrf.mxu0
    %v616 = vadd.f32 %v540, %v615
    %617 = vmatmul.f32.gmra.mxu0 %v561
    %v618 = vpop.f32.mrf.mxu0
    %v619 = vadd.f32 %v545, %v618
    %620 = vmatmul.f32.gmra.mxu0 %v564
    %v621 = vpop.f32.mrf.mxu0
    %v622 = vadd.f32 %v550, %v621
    %623 = vmatmul.f32.gmra.mxu0 %v567
    %v624 = vpop.f32.mrf.mxu0
    %v625 = vadd.f32 %v555, %v624
    %626 = vdwg.mxu0
    %627 = vmatpush.msra.mxu0 0.0
    %628 = vmatpush.msra.mxu0 0.0
    %629 = vmatpush.msra.mxu0 0.0
    %630 = vmatpush.msra.mxu0 0.0
    %631 = vmatpush.msra.mxu0 0.0
    %632 = vmatpush.msra.mxu0 0.0
    %633 = vmatpush.msra.mxu0 0.0
    %634 = vmatpush.msra.mxu0 0.0
    %635 = vmatpush.msra.mxu0 0.0
    %636 = vmatpush.msra.mxu0 0.0
    %637 = vmatpush.msra.mxu0 0.0
    %638 = vmatpush.msra.mxu0 0.0
    %639 = vmatpush.msra.mxu0 %v519
    %640 = vmatpush.msra.mxu0 %v515
    %641 = vmatpush.msra.mxu0 %v511
    %642 = vmatpush.msra.mxu0 %v507
    %643 = vmatmul.f32.gmra.mxu0 %v558
    %v644 = vpop.f32.mrf.mxu0
    %v645 = vadd.f32 %v540, %v644
    %646 = vmatmul.f32.gmra.mxu0 %v561
    %v647 = vpop.f32.mrf.mxu0
    %v648 = vadd.f32 %v545, %v647
    %649 = vmatmul.f32.gmra.mxu0 %v564
    %v650 = vpop.f32.mrf.mxu0
    %v651 = vadd.f32 %v550, %v650
    %652 = vmatmul.f32.gmra.mxu0 %v567
    %v653 = vpop.f32.mrf.mxu0
    %v654 = vadd.f32 %v555, %v653
    %655 = vdwg.mxu0
    %656 = vmatpush.msra.mxu0 0.0
    %657 = vmatpush.msra.mxu0 0.0
    %658 = vmatpush.msra.mxu0 0.0
    %659 = vmatpush.msra.mxu0 0.0
    %660 = vmatpush.msra.mxu0 0.0
    %661 = vmatpush.msra.mxu0 0.0
    %662 = vmatpush.msra.mxu0 0.0
    %663 = vmatpush.msra.mxu0 0.0
    %664 = vmatpush.msra.mxu0 0.0
    %665 = vmatpush.msra.mxu0 0.0
    %666 = vmatpush.msra.mxu0 0.0
    %667 = vmatpush.msra.mxu0 0.0
    %668 = vmatpush.msra.mxu0 %v520
    %669 = vmatpush.msra.mxu0 %v516
    %670 = vmatpush.msra.mxu0 %v512
    %671 = vmatpush.msra.mxu0 %v508
    %672 = vmatmul.f32.gmra.mxu0 %v558
    %v673 = vpop.f32.mrf.mxu0
    %v674 = vadd.f32 %v540, %v673
    %675 = vmatmul.f32.gmra.mxu0 %v561
    %v676 = vpop.f32.mrf.mxu0
    %v677 = vadd.f32 %v545, %v676
    %678 = vmatmul.f32.gmra.mxu0 %v564
    %v679 = vpop.f32.mrf.mxu0
    %v680 = vadd.f32 %v550, %v679
    %681 = vmatmul.f32.gmra.mxu0 %v567
    %v682 = vpop.f32.mrf.mxu0
    %v683 = vadd.f32 %v555, %v682
    %684 = vdwg.mxu0
    %v685 = vmax.f32 %v587, 0.0
    %v686 = vmax.f32 %v616, 0.0
    %v687 = vmax.f32 %v645, 0.0
    %v688 = vmax.f32 %v674, 0.0
    %v689 = vmax.f32 %v590, 0.0
    %v690 = vmax.f32 %v619, 0.0
    %v691 = vmax.f32 %v648, 0.0
    %v692 = vmax.f32 %v677, 0.0
    %v693 = vmax.f32 %v593, 0.0
    %v694 = vmax.f32 %v622, 0.0
    %v695 = vmax.f32 %v651, 0.0
    %v696 = vmax.f32 %v680, 0.0
    %v697 = vmax.f32 %v596, 0.0
    %v698 = vmax.f32 %v625, 0.0
    %v699 = vmax.f32 %v654, 0.0
    %v700 = vmax.f32 %v683, 0.0
    %702 = vset.pattern.permute.xlu0 0
    %703 = vperm.xlu0 %702, %v533
    %v704 = vpop.permute.xlu0 %703
    %707 = vset.pattern.permute.xlu0 0
    %708 = vperm.xlu0 %707, %v534
    %v709 = vpop.permute.xlu0 %708
    %712 = vset.pattern.permute.xlu0 0
    %713 = vperm.xlu0 %712, %v535
    %v714 = vpop.permute.xlu0 %713
    %717 = vset.pattern.permute.xlu0 0
    %718 = vperm.xlu0 %717, %v536
    %v719 = vpop.permute.xlu0 %718
    %v722 = vsel %vm376, %v529, 0
    %v725 = vsel %vm376, %v530, 0
    %v728 = vsel %vm376, %v531, 0
    %v731 = vsel %vm376, %v532, 0
    %733 = vmatpush.msra.mxu0 0.0
    %734 = vmatpush.msra.mxu0 0.0
    %735 = vmatpush.msra.mxu0 0.0
    %736 = vmatpush.msra.mxu0 0.0
    %737 = vmatpush.msra.mxu0 0.0
    %738 = vmatpush.msra.mxu0 0.0
    %739 = vmatpush.msra.mxu0 0.0
    %740 = vmatpush.msra.mxu0 0.0
    %741 = vmatpush.msra.mxu0 0.0
    %742 = vmatpush.msra.mxu0 0.0
    %743 = vmatpush.msra.mxu0 0.0
    %744 = vmatpush.msra.mxu0 0.0
    %745 = vmatpush.msra.mxu0 %v697
    %746 = vmatpush.msra.mxu0 %v693
    %747 = vmatpush.msra.mxu0 %v689
    %748 = vmatpush.msra.mxu0 %v685
    %749 = vmatmul.f32.gmra.mxu0 %v722
    %v750 = vpop.f32.mrf.mxu0
    %v751 = vadd.f32 %v704, %v750
    %752 = vmatmul.f32.gmra.mxu0 %v725
    %v753 = vpop.f32.mrf.mxu0
    %v754 = vadd.f32 %v709, %v753
    %755 = vmatmul.f32.gmra.mxu0 %v728
    %v756 = vpop.f32.mrf.mxu0
    %v757 = vadd.f32 %v714, %v756
    %758 = vmatmul.f32.gmra.mxu0 %v731
    %v759 = vpop.f32.mrf.mxu0
    %v760 = vadd.f32 %v719, %v759
    %761 = vdwg.mxu0
    %762 = vmatpush.msra.mxu0 0.0
    %763 = vmatpush.msra.mxu0 0.0
    %764 = vmatpush.msra.mxu0 0.0
    %765 = vmatpush.msra.mxu0 0.0
    %766 = vmatpush.msra.mxu0 0.0
    %767 = vmatpush.msra.mxu0 0.0
    %768 = vmatpush.msra.mxu0 0.0
    %769 = vmatpush.msra.mxu0 0.0
    %770 = vmatpush.msra.mxu0 0.0
    %771 = vmatpush.msra.mxu0 0.0
    %772 = vmatpush.msra.mxu0 0.0
    %773 = vmatpush.msra.mxu0 0.0
    %774 = vmatpush.msra.mxu0 %v698
    %775 = vmatpush.msra.mxu0 %v694
    %776 = vmatpush.msra.mxu0 %v690
    %777 = vmatpush.msra.mxu0 %v686
    %778 = vmatmul.f32.gmra.mxu0 %v722
    %v779 = vpop.f32.mrf.mxu0
    %v780 = vadd.f32 %v704, %v779
    %781 = vmatmul.f32.gmra.mxu0 %v725
    %v782 = vpop.f32.mrf.mxu0
    %v783 = vadd.f32 %v709, %v782
    %784 = vmatmul.f32.gmra.mxu0 %v728
    %v785 = vpop.f32.mrf.mxu0
    %v786 = vadd.f32 %v714, %v785
    %787 = vmatmul.f32.gmra.mxu0 %v731
    %v788 = vpop.f32.mrf.mxu0
    %v789 = vadd.f32 %v719, %v788
    %790 = vdwg.mxu0
    %791 = vmatpush.msra.mxu0 0.0
    %792 = vmatpush.msra.mxu0 0.0
    %793 = vmatpush.msra.mxu0 0.0
    %794 = vmatpush.msra.mxu0 0.0
    %795 = vmatpush.msra.mxu0 0.0
    %796 = vmatpush.msra.mxu0 0.0
    %797 = vmatpush.msra.mxu0 0.0
    %798 = vmatpush.msra.mxu0 0.0
    %799 = vmatpush.msra.mxu0 0.0
    %800 = vmatpush.msra.mxu0 0.0
    %801 = vmatpush.msra.mxu0 0.0
    %802 = vmatpush.msra.mxu0 0.0
    %803 = vmatpush.msra.mxu0 %v699
    %804 = vmatpush.msra.mxu0 %v695
    %805 = vmatpush.msra.mxu0 %v691
    %806 = vmatpush.msra.mxu0 %v687
    %807 = vmatmul.f32.gmra.mxu0 %v722
    %v808 = vpop.f32.mrf.mxu0
    %v809 = vadd.f32 %v704, %v808
    %810 = vmatmul.f32.gmra.mxu0 %v725
    %v811 = vpop.f32.mrf.mxu0
    %v812 = vadd.f32 %v709, %v811
    %813 = vmatmul.f32.gmra.mxu0 %v728
    %v814 = vpop.f32.mrf.mxu0
    %v815 = vadd.f32 %v714, %v814
    %816 = vmatmul.f32.gmra.mxu0 %v731
    %v817 = vpop.f32.mrf.mxu0
    %v818 = vadd.f32 %v719, %v817
    %819 = vdwg.mxu0
    %820 = vmatpush.msra.mxu0 0.0
    %821 = vmatpush.msra.mxu0 0.0
    %822 = vmatpush.msra.mxu0 0.0
    %823 = vmatpush.msra.mxu0 0.0
    %824 = vmatpush.msra.mxu0 0.0
    %825 = vmatpush.msra.mxu0 0.0
    %826 = vmatpush.msra.mxu0 0.0
    %827 = vmatpush.msra.mxu0 0.0
    %828 = vmatpush.msra.mxu0 0.0
    %829 = vmatpush.msra.mxu0 0.0
    %830 = vmatpush.msra.mxu0 0.0
    %831 = vmatpush.msra.mxu0 0.0
    %832 = vmatpush.msra.mxu0 %v700
    %833 = vmatpush.msra.mxu0 %v696
    %834 = vmatpush.msra.mxu0 %v692
    %835 = vmatpush.msra.mxu0 %v688
    %836 = vmatmul.f32.gmra.mxu0 %v722
    %v837 = vpop.f32.mrf.mxu0
    %v838 = vadd.f32 %v704, %v837
    %839 = vmatmul.f32.gmra.mxu0 %v725
    %v840 = vpop.f32.mrf.mxu0
    %v841 = vadd.f32 %v709, %v840
    %842 = vmatmul.f32.gmra.mxu0 %v728
    %v843 = vpop.f32.mrf.mxu0
    %v844 = vadd.f32 %v714, %v843
    %845 = vmatmul.f32.gmra.mxu0 %v731
    %v846 = vpop.f32.mrf.mxu0
    %v847 = vadd.f32 %v719, %v846
    %848 = vdwg.mxu0
    %v849 = vadd.f32 %v751, %v505
    %v850 = vadd.f32 %v780, %v506
    %v851 = vadd.f32 %v809, %v507
    %v852 = vadd.f32 %v838, %v508
    %v853 = vadd.f32 %v754, %v509
    %v854 = vadd.f32 %v783, %v510
    %v855 = vadd.f32 %v812, %v511
    %v856 = vadd.f32 %v841, %v512
    %v857 = vadd.f32 %v757, %v513
    %v858 = vadd.f32 %v786, %v514
    %v859 = vadd.f32 %v815, %v515
    %v860 = vadd.f32 %v844, %v516
    %v861 = vadd.f32 %v760, %v517
    %v862 = vadd.f32 %v789, %v518
    %v863 = vadd.f32 %v818, %v519
    %v864 = vadd.f32 %v847, %v520
    %v865 = vmax.f32 %v849, 0.0
    %v866 = vmax.f32 %v850, 0.0
    %v867 = vmax.f32 %v851, 0.0
    %v868 = vmax.f32 %v852, 0.0
    %v869 = vmax.f32 %v853, 0.0
    %v870 = vmax.f32 %v854, 0.0
    %v871 = vmax.f32 %v855, 0.0
    %v872 = vmax.f32 %v856, 0.0
    %v873 = vmax.f32 %v857, 0.0
    %v874 = vmax.f32 %v858, 0.0
    %v875 = vmax.f32 %v859, 0.0
    %v876 = vmax.f32 %v860, 0.0
    %v877 = vmax.f32 %v861, 0.0
    %v878 = vmax.f32 %v862, 0.0
    %v879 = vmax.f32 %v863, 0.0
    %v880 = vmax.f32 %v864, 0.0
    %s881 = scalar_lea.vmem [#allocation11], 32
    %v882 = vld [vmem:[%s881] sm:$0xff]
    %v883 = vld [vmem:[%s881 + $0x8] sm:$0xff]
    %v884 = vld [vmem:[%s881 + $0x10] sm:$0xff]
    %v885 = vld [vmem:[%s881 + $0x18] sm:$0xff]
    %s886 = scalar_lea.vmem %s6, 32
    %v887 = vld [vmem:[%s886] sm:$0xff]
    %v888 = vld [vmem:[%s886 + $0x8] sm:$0xff]
    %v889 = vld [vmem:[%s886 + $0x10] sm:$0xff]
    %v890 = vld [vmem:[%s886 + $0x18] sm:$0xff]
    %s891 = scalar_lea.vmem [#allocation12], 32
    %v892 = vld [vmem:[%s891] sm:$0xff]
    %v893 = vld [vmem:[%s891 + $0x8] sm:$0xff]
    %v894 = vld [vmem:[%s891 + $0x10] sm:$0xff]
    %v895 = vld [vmem:[%s891 + $0x18] sm:$0xff]
    %s896 = scalar_lea.vmem %s8, 32
    %v897 = vld [vmem:[%s896] sm:$0xff]
    %v898 = vld [vmem:[%s896 + $0x8] sm:$0xff]
    %v899 = vld [vmem:[%s896 + $0x10] sm:$0xff]
    %v900 = vld [vmem:[%s896 + $0x18] sm:$0xff]
    %902 = vset.pattern.permute.xlu0 0
    %903 = vperm.xlu0 %902, %v887
    %v904 = vpop.permute.xlu0 %903
    %907 = vset.pattern.permute.xlu0 0
    %908 = vperm.xlu0 %907, %v888
    %v909 = vpop.permute.xlu0 %908
    %912 = vset.pattern.permute.xlu0 0
    %913 = vperm.xlu0 %912, %v889
    %v914 = vpop.permute.xlu0 %913
    %917 = vset.pattern.permute.xlu0 0
    %918 = vperm.xlu0 %917, %v890
    %v919 = vpop.permute.xlu0 %918
    %v922 = vsel %vm376, %v882, 0
    %v925 = vsel %vm376, %v883, 0
    %v928 = vsel %vm376, %v884, 0
    %v931 = vsel %vm376, %v885, 0
    %933 = vmatpush.msra.mxu0 0.0
    %934 = vmatpush.msra.mxu0 0.0
    %935 = vmatpush.msra.mxu0 0.0
    %936 = vmatpush.msra.mxu0 0.0
    %937 = vmatpush.msra.mxu0 0.0
    %938 = vmatpush.msra.mxu0 0.0
    %939 = vmatpush.msra.mxu0 0.0
    %940 = vmatpush.msra.mxu0 0.0
    %941 = vmatpush.msra.mxu0 0.0
    %942 = vmatpush.msra.mxu0 0.0
    %943 = vmatpush.msra.mxu0 0.0
    %944 = vmatpush.msra.mxu0 0.0
    %945 = vmatpush.msra.mxu0 %v877
    %946 = vmatpush.msra.mxu0 %v873
    %947 = vmatpush.msra.mxu0 %v869
    %948 = vmatpush.msra.mxu0 %v865
    %949 = vmatmul.f32.gmra.mxu0 %v922
    %v950 = vpop.f32.mrf.mxu0
    %v951 = vadd.f32 %v904, %v950
    %952 = vmatmul.f32.gmra.mxu0 %v925
    %v953 = vpop.f32.mrf.mxu0
    %v954 = vadd.f32 %v909, %v953
    %955 = vmatmul.f32.gmra.mxu0 %v928
    %v956 = vpop.f32.mrf.mxu0
    %v957 = vadd.f32 %v914, %v956
    %958 = vmatmul.f32.gmra.mxu0 %v931
    %v959 = vpop.f32.mrf.mxu0
    %v960 = vadd.f32 %v919, %v959
    %961 = vdwg.mxu0
    %962 = vmatpush.msra.mxu0 0.0
    %963 = vmatpush.msra.mxu0 0.0
    %964 = vmatpush.msra.mxu0 0.0
    %965 = vmatpush.msra.mxu0 0.0
    %966 = vmatpush.msra.mxu0 0.0
    %967 = vmatpush.msra.mxu0 0.0
    %968 = vmatpush.msra.mxu0 0.0
    %969 = vmatpush.msra.mxu0 0.0
    %970 = vmatpush.msra.mxu0 0.0
    %971 = vmatpush.msra.mxu0 0.0
    %972 = vmatpush.msra.mxu0 0.0
    %973 = vmatpush.msra.mxu0 0.0
    %974 = vmatpush.msra.mxu0 %v878
    %975 = vmatpush.msra.mxu0 %v874
    %976 = vmatpush.msra.mxu0 %v870
    %977 = vmatpush.msra.mxu0 %v866
    %978 = vmatmul.f32.gmra.mxu0 %v922
    %v979 = vpop.f32.mrf.mxu0
    %v980 = vadd.f32 %v904, %v979
    %981 = vmatmul.f32.gmra.mxu0 %v925
    %v982 = vpop.f32.mrf.mxu0
    %v983 = vadd.f32 %v909, %v982
    %984 = vmatmul.f32.gmra.mxu0 %v928
    %v985 = vpop.f32.mrf.mxu0
    %v986 = vadd.f32 %v914, %v985
    %987 = vmatmul.f32.gmra.mxu0 %v931
    %v988 = vpop.f32.mrf.mxu0
    %v989 = vadd.f32 %v919, %v988
    %990 = vdwg.mxu0
    %991 = vmatpush.msra.mxu0 0.0
    %992 = vmatpush.msra.mxu0 0.0
    %993 = vmatpush.msra.mxu0 0.0
    %994 = vmatpush.msra.mxu0 0.0
    %995 = vmatpush.msra.mxu0 0.0
    %996 = vmatpush.msra.mxu0 0.0
    %997 = vmatpush.msra.mxu0 0.0
    %998 = vmatpush.msra.mxu0 0.0
    %999 = vmatpush.msra.mxu0 0.0
    %1000 = vmatpush.msra.mxu0 0.0
    %1001 = vmatpush.msra.mxu0 0.0
    %1002 = vmatpush.msra.mxu0 0.0
    %1003 = vmatpush.msra.mxu0 %v879
    %1004 = vmatpush.msra.mxu0 %v875
    %1005 = vmatpush.msra.mxu0 %v871
    %1006 = vmatpush.msra.mxu0 %v867
    %1007 = vmatmul.f32.gmra.mxu0 %v922
    %v1008 = vpop.f32.mrf.mxu0
    %v1009 = vadd.f32 %v904, %v1008
    %1010 = vmatmul.f32.gmra.mxu0 %v925
    %v1011 = vpop.f32.mrf.mxu0
    %v1012 = vadd.f32 %v909, %v1011
    %1013 = vmatmul.f32.gmra.mxu0 %v928
    %v1014 = vpop.f32.mrf.mxu0
    %v1015 = vadd.f32 %v914, %v1014
    %1016 = vmatmul.f32.gmra.mxu0 %v931
    %v1017 = vpop.f32.mrf.mxu0
    %v1018 = vadd.f32 %v919, %v1017
    %1019 = vdwg.mxu0
    %1020 = vmatpush.msra.mxu0 0.0
    %1021 = vmatpush.msra.mxu0 0.0
    %1022 = vmatpush.msra.mxu0 0.0
    %1023 = vmatpush.msra.mxu0 0.0
    %1024 = vmatpush.msra.mxu0 0.0
    %1025 = vmatpush.msra.mxu0 0.0
    %1026 = vmatpush.msra.mxu0 0.0
    %1027 = vmatpush.msra.mxu0 0.0
    %1028 = vmatpush.msra.mxu0 0.0
    %1029 = vmatpush.msra.mxu0 0.0
    %1030 = vmatpush.msra.mxu0 0.0
    %1031 = vmatpush.msra.mxu0 0.0
    %1032 = vmatpush.msra.mxu0 %v880
    %1033 = vmatpush.msra.mxu0 %v876
    %1034 = vmatpush.msra.mxu0 %v872
    %1035 = vmatpush.msra.mxu0 %v868
    %1036 = vmatmul.f32.gmra.mxu0 %v922
    %v1037 = vpop.f32.mrf.mxu0
    %v1038 = vadd.f32 %v904, %v1037
    %1039 = vmatmul.f32.gmra.mxu0 %v925
    %v1040 = vpop.f32.mrf.mxu0
    %v1041 = vadd.f32 %v909, %v1040
    %1042 = vmatmul.f32.gmra.mxu0 %v928
    %v1043 = vpop.f32.mrf.mxu0
    %v1044 = vadd.f32 %v914, %v1043
    %1045 = vmatmul.f32.gmra.mxu0 %v931
    %v1046 = vpop.f32.mrf.mxu0
    %v1047 = vadd.f32 %v919, %v1046
    %1048 = vdwg.mxu0
    %v1049 = vmax.f32 %v951, 0.0
    %v1050 = vmax.f32 %v980, 0.0
    %v1051 = vmax.f32 %v1009, 0.0
    %v1052 = vmax.f32 %v1038, 0.0
    %v1053 = vmax.f32 %v954, 0.0
    %v1054 = vmax.f32 %v983, 0.0
    %v1055 = vmax.f32 %v1012, 0.0
    %v1056 = vmax.f32 %v1041, 0.0
    %v1057 = vmax.f32 %v957, 0.0
    %v1058 = vmax.f32 %v986, 0.0
    %v1059 = vmax.f32 %v1015, 0.0
    %v1060 = vmax.f32 %v1044, 0.0
    %v1061 = vmax.f32 %v960, 0.0
    %v1062 = vmax.f32 %v989, 0.0
    %v1063 = vmax.f32 %v1018, 0.0
    %v1064 = vmax.f32 %v1047, 0.0
    %1066 = vset.pattern.permute.xlu0 0
    %1067 = vperm.xlu0 %1066, %v897
    %v1068 = vpop.permute.xlu0 %1067
    %1071 = vset.pattern.permute.xlu0 0
    %1072 = vperm.xlu0 %1071, %v898
    %v1073 = vpop.permute.xlu0 %1072
    %1076 = vset.pattern.permute.xlu0 0
    %1077 = vperm.xlu0 %1076, %v899
    %v1078 = vpop.permute.xlu0 %1077
    %1081 = vset.pattern.permute.xlu0 0
    %1082 = vperm.xlu0 %1081, %v900
    %v1083 = vpop.permute.xlu0 %1082
    %v1086 = vsel %vm376, %v892, 0
    %v1089 = vsel %vm376, %v893, 0
    %v1092 = vsel %vm376, %v894, 0
    %v1095 = vsel %vm376, %v895, 0
    %1097 = vmatpush.msra.mxu0 0.0
    %1098 = vmatpush.msra.mxu0 0.0
    %1099 = vmatpush.msra.mxu0 0.0
    %1100 = vmatpush.msra.mxu0 0.0
    %1101 = vmatpush.msra.mxu0 0.0
    %1102 = vmatpush.msra.mxu0 0.0
    %1103 = vmatpush.msra.mxu0 0.0
    %1104 = vmatpush.msra.mxu0 0.0
    %1105 = vmatpush.msra.mxu0 0.0
    %1106 = vmatpush.msra.mxu0 0.0
    %1107 = vmatpush.msra.mxu0 0.0
    %1108 = vmatpush.msra.mxu0 0.0
    %1109 = vmatpush.msra.mxu0 %v1061
    %1110 = vmatpush.msra.mxu0 %v1057
    %1111 = vmatpush.msra.mxu0 %v1053
    %1112 = vmatpush.msra.mxu0 %v1049
    %1113 = vmatmul.f32.gmra.mxu0 %v1086
    %v1114 = vpop.f32.mrf.mxu0
    %v1115 = vadd.f32 %v1068, %v1114
    %1116 = vmatmul.f32.gmra.mxu0 %v1089
    %v1117 = vpop.f32.mrf.mxu0
    %v1118 = vadd.f32 %v1073, %v1117
    %1119 = vmatmul.f32.gmra.mxu0 %v1092
    %v1120 = vpop.f32.mrf.mxu0
    %v1121 = vadd.f32 %v1078, %v1120
    %1122 = vmatmul.f32.gmra.mxu0 %v1095
    %v1123 = vpop.f32.mrf.mxu0
    %v1124 = vadd.f32 %v1083, %v1123
    %1125 = vdwg.mxu0
    %1126 = vmatpush.msra.mxu0 0.0
    %1127 = vmatpush.msra.mxu0 0.0
    %1128 = vmatpush.msra.mxu0 0.0
    %1129 = vmatpush.msra.mxu0 0.0
    %1130 = vmatpush.msra.mxu0 0.0
    %1131 = vmatpush.msra.mxu0 0.0
    %1132 = vmatpush.msra.mxu0 0.0
    %1133 = vmatpush.msra.mxu0 0.0
    %1134 = vmatpush.msra.mxu0 0.0
    %1135 = vmatpush.msra.mxu0 0.0
    %1136 = vmatpush.msra.mxu0 0.0
    %1137 = vmatpush.msra.mxu0 0.0
    %1138 = vmatpush.msra.mxu0 %v1062
    %1139 = vmatpush.msra.mxu0 %v1058
    %1140 = vmatpush.msra.mxu0 %v1054
    %1141 = vmatpush.msra.mxu0 %v1050
    %1142 = vmatmul.f32.gmra.mxu0 %v1086
    %v1143 = vpop.f32.mrf.mxu0
    %v1144 = vadd.f32 %v1068, %v1143
    %1145 = vmatmul.f32.gmra.mxu0 %v1089
    %v1146 = vpop.f32.mrf.mxu0
    %v1147 = vadd.f32 %v1073, %v1146
    %1148 = vmatmul.f32.gmra.mxu0 %v1092
    %v1149 = vpop.f32.mrf.mxu0
    %v1150 = vadd.f32 %v1078, %v1149
    %1151 = vmatmul.f32.gmra.mxu0 %v1095
    %v1152 = vpop.f32.mrf.mxu0
    %v1153 = vadd.f32 %v1083, %v1152
    %1154 = vdwg.mxu0
    %1155 = vmatpush.msra.mxu0 0.0
    %1156 = vmatpush.msra.mxu0 0.0
    %1157 = vmatpush.msra.mxu0 0.0
    %1158 = vmatpush.msra.mxu0 0.0
    %1159 = vmatpush.msra.mxu0 0.0
    %1160 = vmatpush.msra.mxu0 0.0
    %1161 = vmatpush.msra.mxu0 0.0
    %1162 = vmatpush.msra.mxu0 0.0
    %1163 = vmatpush.msra.mxu0 0.0
    %1164 = vmatpush.msra.mxu0 0.0
    %1165 = vmatpush.msra.mxu0 0.0
    %1166 = vmatpush.msra.mxu0 0.0
    %1167 = vmatpush.msra.mxu0 %v1063
    %1168 = vmatpush.msra.mxu0 %v1059
    %1169 = vmatpush.msra.mxu0 %v1055
    %1170 = vmatpush.msra.mxu0 %v1051
    %1171 = vmatmul.f32.gmra.mxu0 %v1086
    %v1172 = vpop.f32.mrf.mxu0
    %v1173 = vadd.f32 %v1068, %v1172
    %1174 = vmatmul.f32.gmra.mxu0 %v1089
    %v1175 = vpop.f32.mrf.mxu0
    %v1176 = vadd.f32 %v1073, %v1175
    %1177 = vmatmul.f32.gmra.mxu0 %v1092
    %v1178 = vpop.f32.mrf.mxu0
    %v1179 = vadd.f32 %v1078, %v1178
    %1180 = vmatmul.f32.gmra.mxu0 %v1095
    %v1181 = vpop.f32.mrf.mxu0
    %v1182 = vadd.f32 %v1083, %v1181
    %1183 = vdwg.mxu0
    %1184 = vmatpush.msra.mxu0 0.0
    %1185 = vmatpush.msra.mxu0 0.0
    %1186 = vmatpush.msra.mxu0 0.0
    %1187 = vmatpush.msra.mxu0 0.0
    %1188 = vmatpush.msra.mxu0 0.0
    %1189 = vmatpush.msra.mxu0 0.0
    %1190 = vmatpush.msra.mxu0 0.0
    %1191 = vmatpush.msra.mxu0 0.0
    %1192 = vmatpush.msra.mxu0 0.0
    %1193 = vmatpush.msra.mxu0 0.0
    %1194 = vmatpush.msra.mxu0 0.0
    %1195 = vmatpush.msra.mxu0 0.0
    %1196 = vmatpush.msra.mxu0 %v1064
    %1197 = vmatpush.msra.mxu0 %v1060
    %1198 = vmatpush.msra.mxu0 %v1056
    %1199 = vmatpush.msra.mxu0 %v1052
    %1200 = vmatmul.f32.gmra.mxu0 %v1086
    %v1201 = vpop.f32.mrf.mxu0
    %v1202 = vadd.f32 %v1068, %v1201
    %1203 = vmatmul.f32.gmra.mxu0 %v1089
    %v1204 = vpop.f32.mrf.mxu0
    %v1205 = vadd.f32 %v1073, %v1204
    %1206 = vmatmul.f32.gmra.mxu0 %v1092
    %v1207 = vpop.f32.mrf.mxu0
    %v1208 = vadd.f32 %v1078, %v1207
    %1209 = vmatmul.f32.gmra.mxu0 %v1095
    %v1210 = vpop.f32.mrf.mxu0
    %v1211 = vadd.f32 %v1083, %v1210
    %1212 = vdwg.mxu0
    %v1213 = vadd.f32 %v1115, %v865
    %v1214 = vadd.f32 %v1144, %v866
    %v1215 = vadd.f32 %v1173, %v867
    %v1216 = vadd.f32 %v1202, %v868
    %v1217 = vadd.f32 %v1118, %v869
    %v1218 = vadd.f32 %v1147, %v870
    %v1219 = vadd.f32 %v1176, %v871
    %v1220 = vadd.f32 %v1205, %v872
    %v1221 = vadd.f32 %v1121, %v873
    %v1222 = vadd.f32 %v1150, %v874
    %v1223 = vadd.f32 %v1179, %v875
    %v1224 = vadd.f32 %v1208, %v876
    %v1225 = vadd.f32 %v1124, %v877
    %v1226 = vadd.f32 %v1153, %v878
    %v1227 = vadd.f32 %v1182, %v879
    %v1228 = vadd.f32 %v1211, %v880
    %v1229 = vmax.f32 %v1213, 0.0
    %v1230 = vmax.f32 %v1214, 0.0
    %v1231 = vmax.f32 %v1215, 0.0
    %v1232 = vmax.f32 %v1216, 0.0
    %v1233 = vmax.f32 %v1217, 0.0
    %v1234 = vmax.f32 %v1218, 0.0
    %v1235 = vmax.f32 %v1219, 0.0
    %v1236 = vmax.f32 %v1220, 0.0
    %v1237 = vmax.f32 %v1221, 0.0
    %v1238 = vmax.f32 %v1222, 0.0
    %v1239 = vmax.f32 %v1223, 0.0
    %v1240 = vmax.f32 %v1224, 0.0
    %v1241 = vmax.f32 %v1225, 0.0
    %v1242 = vmax.f32 %v1226, 0.0
    %v1243 = vmax.f32 %v1227, 0.0
    %v1244 = vmax.f32 %v1228, 0.0
    %s1245 = scalar_lea.vmem [#allocation11], 64
    %v1246 = vld [vmem:[%s1245] sm:$0xff]
    %v1247 = vld [vmem:[%s1245 + $0x8] sm:$0xff]
    %v1248 = vld [vmem:[%s1245 + $0x10] sm:$0xff]
    %v1249 = vld [vmem:[%s1245 + $0x18] sm:$0xff]
    %s1250 = scalar_lea.vmem %s6, 64
    %v1251 = vld [vmem:[%s1250] sm:$0xff]
    %v1252 = vld [vmem:[%s1250 + $0x8] sm:$0xff]
    %v1253 = vld [vmem:[%s1250 + $0x10] sm:$0xff]
    %v1254 = vld [vmem:[%s1250 + $0x18] sm:$0xff]
    %s1255 = scalar_lea.vmem [#allocation12], 64
    %v1256 = vld [vmem:[%s1255] sm:$0xff]
    %v1257 = vld [vmem:[%s1255 + $0x8] sm:$0xff]
    %v1258 = vld [vmem:[%s1255 + $0x10] sm:$0xff]
    %v1259 = vld [vmem:[%s1255 + $0x18] sm:$0xff]
    %s1260 = scalar_lea.vmem %s8, 64
    %v1261 = vld [vmem:[%s1260] sm:$0xff]
    %v1262 = vld [vmem:[%s1260 + $0x8] sm:$0xff]
    %v1263 = vld [vmem:[%s1260 + $0x10] sm:$0xff]
    %v1264 = vld [vmem:[%s1260 + $0x18] sm:$0xff]
    %1266 = vset.pattern.permute.xlu0 0
    %1267 = vperm.xlu0 %1266, %v1251
    %v1268 = vpop.permute.xlu0 %1267
    %1271 = vset.pattern.permute.xlu0 0
    %1272 = vperm.xlu0 %1271, %v1252
    %v1273 = vpop.permute.xlu0 %1272
    %1276 = vset.pattern.permute.xlu0 0
    %1277 = vperm.xlu0 %1276, %v1253
    %v1278 = vpop.permute.xlu0 %1277
    %1281 = vset.pattern.permute.xlu0 0
    %1282 = vperm.xlu0 %1281, %v1254
    %v1283 = vpop.permute.xlu0 %1282
    %v1286 = vsel %vm376, %v1246, 0
    %v1289 = vsel %vm376, %v1247, 0
    %v1292 = vsel %vm376, %v1248, 0
    %v1295 = vsel %vm376, %v1249, 0
    %1297 = vmatpush.msra.mxu0 0.0
    %1298 = vmatpush.msra.mxu0 0.0
    %1299 = vmatpush.msra.mxu0 0.0
    %1300 = vmatpush.msra.mxu0 0.0
    %1301 = vmatpush.msra.mxu0 0.0
    %1302 = vmatpush.msra.mxu0 0.0
    %1303 = vmatpush.msra.mxu0 0.0
    %1304 = vmatpush.msra.mxu0 0.0
    %1305 = vmatpush.msra.mxu0 0.0
    %1306 = vmatpush.msra.mxu0 0.0
    %1307 = vmatpush.msra.mxu0 0.0
    %1308 = vmatpush.msra.mxu0 0.0
    %1309 = vmatpush.msra.mxu0 %v1241
    %1310 = vmatpush.msra.mxu0 %v1237
    %1311 = vmatpush.msra.mxu0 %v1233
    %1312 = vmatpush.msra.mxu0 %v1229
    %1313 = vmatmul.f32.gmra.mxu0 %v1286
    %v1314 = vpop.f32.mrf.mxu0
    %v1315 = vadd.f32 %v1268, %v1314
    %1316 = vmatmul.f32.gmra.mxu0 %v1289
    %v1317 = vpop.f32.mrf.mxu0
    %v1318 = vadd.f32 %v1273, %v1317
    %1319 = vmatmul.f32.gmra.mxu0 %v1292
    %v1320 = vpop.f32.mrf.mxu0
    %v1321 = vadd.f32 %v1278, %v1320
    %1322 = vmatmul.f32.gmra.mxu0 %v1295
    %v1323 = vpop.f32.mrf.mxu0
    %v1324 = vadd.f32 %v1283, %v1323
    %1325 = vdwg.mxu0
    %1326 = vmatpush.msra.mxu0 0.0
    %1327 = vmatpush.msra.mxu0 0.0
    %1328 = vmatpush.msra.mxu0 0.0
    %1329 = vmatpush.msra.mxu0 0.0
    %1330 = vmatpush.msra.mxu0 0.0
    %1331 = vmatpush.msra.mxu0 0.0
    %1332 = vmatpush.msra.mxu0 0.0
    %1333 = vmatpush.msra.mxu0 0.0
    %1334 = vmatpush.msra.mxu0 0.0
    %1335 = vmatpush.msra.mxu0 0.0
    %1336 = vmatpush.msra.mxu0 0.0
    %1337 = vmatpush.msra.mxu0 0.0
    %1338 = vmatpush.msra.mxu0 %v1242
    %1339 = vmatpush.msra.mxu0 %v1238
    %1340 = vmatpush.msra.mxu0 %v1234
    %1341 = vmatpush.msra.mxu0 %v1230
    %1342 = vmatmul.f32.gmra.mxu0 %v1286
    %v1343 = vpop.f32.mrf.mxu0
    %v1344 = vadd.f32 %v1268, %v1343
    %1345 = vmatmul.f32.gmra.mxu0 %v1289
    %v1346 = vpop.f32.mrf.mxu0
    %v1347 = vadd.f32 %v1273, %v1346
    %1348 = vmatmul.f32.gmra.mxu0 %v1292
    %v1349 = vpop.f32.mrf.mxu0
    %v1350 = vadd.f32 %v1278, %v1349
    %1351 = vmatmul.f32.gmra.mxu0 %v1295
    %v1352 = vpop.f32.mrf.mxu0
    %v1353 = vadd.f32 %v1283, %v1352
    %1354 = vdwg.mxu0
    %1355 = vmatpush.msra.mxu0 0.0
    %1356 = vmatpush.msra.mxu0 0.0
    %1357 = vmatpush.msra.mxu0 0.0
    %1358 = vmatpush.msra.mxu0 0.0
    %1359 = vmatpush.msra.mxu0 0.0
    %1360 = vmatpush.msra.mxu0 0.0
    %1361 = vmatpush.msra.mxu0 0.0
    %1362 = vmatpush.msra.mxu0 0.0
    %1363 = vmatpush.msra.mxu0 0.0
    %1364 = vmatpush.msra.mxu0 0.0
    %1365 = vmatpush.msra.mxu0 0.0
    %1366 = vmatpush.msra.mxu0 0.0
    %1367 = vmatpush.msra.mxu0 %v1243
    %1368 = vmatpush.msra.mxu0 %v1239
    %1369 = vmatpush.msra.mxu0 %v1235
    %1370 = vmatpush.msra.mxu0 %v1231
    %1371 = vmatmul.f32.gmra.mxu0 %v1286
    %v1372 = vpop.f32.mrf.mxu0
    %v1373 = vadd.f32 %v1268, %v1372
    %1374 = vmatmul.f32.gmra.mxu0 %v1289
    %v1375 = vpop.f32.mrf.mxu0
    %v1376 = vadd.f32 %v1273, %v1375
    %1377 = vmatmul.f32.gmra.mxu0 %v1292
    %v1378 = vpop.f32.mrf.mxu0
    %v1379 = vadd.f32 %v1278, %v1378
    %1380 = vmatmul.f32.gmra.mxu0 %v1295
    %v1381 = vpop.f32.mrf.mxu0
    %v1382 = vadd.f32 %v1283, %v1381
    %1383 = vdwg.mxu0
    %1384 = vmatpush.msra.mxu0 0.0
    %1385 = vmatpush.msra.mxu0 0.0
    %1386 = vmatpush.msra.mxu0 0.0
    %1387 = vmatpush.msra.mxu0 0.0
    %1388 = vmatpush.msra.mxu0 0.0
    %1389 = vmatpush.msra.mxu0 0.0
    %1390 = vmatpush.msra.mxu0 0.0
    %1391 = vmatpush.msra.mxu0 0.0
    %1392 = vmatpush.msra.mxu0 0.0
    %1393 = vmatpush.msra.mxu0 0.0
    %1394 = vmatpush.msra.mxu0 0.0
    %1395 = vmatpush.msra.mxu0 0.0
    %1396 = vmatpush.msra.mxu0 %v1244
    %1397 = vmatpush.msra.mxu0 %v1240
    %1398 = vmatpush.msra.mxu0 %v1236
    %1399 = vmatpush.msra.mxu0 %v1232
    %1400 = vmatmul.f32.gmra.mxu0 %v1286
    %v1401 = vpop.f32.mrf.mxu0
    %v1402 = vadd.f32 %v1268, %v1401
    %1403 = vmatmul.f32.gmra.mxu0 %v1289
    %v1404 = vpop.f32.mrf.mxu0
    %v1405 = vadd.f32 %v1273, %v1404
    %1406 = vmatmul.f32.gmra.mxu0 %v1292
    %v1407 = vpop.f32.mrf.mxu0
    %v1408 = vadd.f32 %v1278, %v1407
    %1409 = vmatmul.f32.gmra.mxu0 %v1295
    %v1410 = vpop.f32.mrf.mxu0
    %v1411 = vadd.f32 %v1283, %v1410
    %1412 = vdwg.mxu0
    %v1413 = vmax.f32 %v1315, 0.0
    %v1414 = vmax.f32 %v1344, 0.0
    %v1415 = vmax.f32 %v1373, 0.0
    %v1416 = vmax.f32 %v1402, 0.0
    %v1417 = vmax.f32 %v1318, 0.0
    %v1418 = vmax.f32 %v1347, 0.0
    %v1419 = vmax.f32 %v1376, 0.0
    %v1420 = vmax.f32 %v1405, 0.0
    %v1421 = vmax.f32 %v1321, 0.0
    %v1422 = vmax.f32 %v1350, 0.0
    %v1423 = vmax.f32 %v1379, 0.0
    %v1424 = vmax.f32 %v1408, 0.0
    %v1425 = vmax.f32 %v1324, 0.0
    %v1426 = vmax.f32 %v1353, 0.0
    %v1427 = vmax.f32 %v1382, 0.0
    %v1428 = vmax.f32 %v1411, 0.0
    %1430 = vset.pattern.permute.xlu0 0
    %1431 = vperm.xlu0 %1430, %v1261
    %v1432 = vpop.permute.xlu0 %1431
    %1435 = vset.pattern.permute.xlu0 0
    %1436 = vperm.xlu0 %1435, %v1262
    %v1437 = vpop.permute.xlu0 %1436
    %1440 = vset.pattern.permute.xlu0 0
    %1441 = vperm.xlu0 %1440, %v1263
    %v1442 = vpop.permute.xlu0 %1441
    %1445 = vset.pattern.permute.xlu0 0
    %1446 = vperm.xlu0 %1445, %v1264
    %v1447 = vpop.permute.xlu0 %1446
    %v1450 = vsel %vm376, %v1256, 0
    %v1453 = vsel %vm376, %v1257, 0
    %v1456 = vsel %vm376, %v1258, 0
    %v1459 = vsel %vm376, %v1259, 0
    %1461 = vmatpush.msra.mxu0 0.0
    %1462 = vmatpush.msra.mxu0 0.0
    %1463 = vmatpush.msra.mxu0 0.0
    %1464 = vmatpush.msra.mxu0 0.0
    %1465 = vmatpush.msra.mxu0 0.0
    %1466 = vmatpush.msra.mxu0 0.0
    %1467 = vmatpush.msra.mxu0 0.0
    %1468 = vmatpush.msra.mxu0 0.0
    %1469 = vmatpush.msra.mxu0 0.0
    %1470 = vmatpush.msra.mxu0 0.0
    %1471 = vmatpush.msra.mxu0 0.0
    %1472 = vmatpush.msra.mxu0 0.0
    %1473 = vmatpush.msra.mxu0 %v1425
    %1474 = vmatpush.msra.mxu0 %v1421
    %1475 = vmatpush.msra.mxu0 %v1417
    %1476 = vmatpush.msra.mxu0 %v1413
    %1477 = vmatmul.f32.gmra.mxu0 %v1450
    %v1478 = vpop.f32.mrf.mxu0
    %v1479 = vadd.f32 %v1432, %v1478
    %1480 = vmatmul.f32.gmra.mxu0 %v1453
    %v1481 = vpop.f32.mrf.mxu0
    %v1482 = vadd.f32 %v1437, %v1481
    %1483 = vmatmul.f32.gmra.mxu0 %v1456
    %v1484 = vpop.f32.mrf.mxu0
    %v1485 = vadd.f32 %v1442, %v1484
    %1486 = vmatmul.f32.gmra.mxu0 %v1459
    %v1487 = vpop.f32.mrf.mxu0
    %v1488 = vadd.f32 %v1447, %v1487
    %1489 = vdwg.mxu0
    %1490 = vmatpush.msra.mxu0 0.0
    %1491 = vmatpush.msra.mxu0 0.0
    %1492 = vmatpush.msra.mxu0 0.0
    %1493 = vmatpush.msra.mxu0 0.0
    %1494 = vmatpush.msra.mxu0 0.0
    %1495 = vmatpush.msra.mxu0 0.0
    %1496 = vmatpush.msra.mxu0 0.0
    %1497 = vmatpush.msra.mxu0 0.0
    %1498 = vmatpush.msra.mxu0 0.0
    %1499 = vmatpush.msra.mxu0 0.0
    %1500 = vmatpush.msra.mxu0 0.0
    %1501 = vmatpush.msra.mxu0 0.0
    %1502 = vmatpush.msra.mxu0 %v1426
    %1503 = vmatpush.msra.mxu0 %v1422
    %1504 = vmatpush.msra.mxu0 %v1418
    %1505 = vmatpush.msra.mxu0 %v1414
    %1506 = vmatmul.f32.gmra.mxu0 %v1450
    %v1507 = vpop.f32.mrf.mxu0
    %v1508 = vadd.f32 %v1432, %v1507
    %1509 = vmatmul.f32.gmra.mxu0 %v1453
    %v1510 = vpop.f32.mrf.mxu0
    %v1511 = vadd.f32 %v1437, %v1510
    %1512 = vmatmul.f32.gmra.mxu0 %v1456
    %v1513 = vpop.f32.mrf.mxu0
    %v1514 = vadd.f32 %v1442, %v1513
    %1515 = vmatmul.f32.gmra.mxu0 %v1459
    %v1516 = vpop.f32.mrf.mxu0
    %v1517 = vadd.f32 %v1447, %v1516
    %1518 = vdwg.mxu0
    %1519 = vmatpush.msra.mxu0 0.0
    %1520 = vmatpush.msra.mxu0 0.0
    %1521 = vmatpush.msra.mxu0 0.0
    %1522 = vmatpush.msra.mxu0 0.0
    %1523 = vmatpush.msra.mxu0 0.0
    %1524 = vmatpush.msra.mxu0 0.0
    %1525 = vmatpush.msra.mxu0 0.0
    %1526 = vmatpush.msra.mxu0 0.0
    %1527 = vmatpush.msra.mxu0 0.0
    %1528 = vmatpush.msra.mxu0 0.0
    %1529 = vmatpush.msra.mxu0 0.0
    %1530 = vmatpush.msra.mxu0 0.0
    %1531 = vmatpush.msra.mxu0 %v1427
    %1532 = vmatpush.msra.mxu0 %v1423
    %1533 = vmatpush.msra.mxu0 %v1419
    %1534 = vmatpush.msra.mxu0 %v1415
    %1535 = vmatmul.f32.gmra.mxu0 %v1450
    %v1536 = vpop.f32.mrf.mxu0
    %v1537 = vadd.f32 %v1432, %v1536
    %1538 = vmatmul.f32.gmra.mxu0 %v1453
    %v1539 = vpop.f32.mrf.mxu0
    %v1540 = vadd.f32 %v1437, %v1539
    %1541 = vmatmul.f32.gmra.mxu0 %v1456
    %v1542 = vpop.f32.mrf.mxu0
    %v1543 = vadd.f32 %v1442, %v1542
    %1544 = vmatmul.f32.gmra.mxu0 %v1459
    %v1545 = vpop.f32.mrf.mxu0
    %v1546 = vadd.f32 %v1447, %v1545
    %1547 = vdwg.mxu0
    %1548 = vmatpush.msra.mxu0 0.0
    %1549 = vmatpush.msra.mxu0 0.0
    %1550 = vmatpush.msra.mxu0 0.0
    %1551 = vmatpush.msra.mxu0 0.0
    %1552 = vmatpush.msra.mxu0 0.0
    %1553 = vmatpush.msra.mxu0 0.0
    %1554 = vmatpush.msra.mxu0 0.0
    %1555 = vmatpush.msra.mxu0 0.0
    %1556 = vmatpush.msra.mxu0 0.0
    %1557 = vmatpush.msra.mxu0 0.0
    %1558 = vmatpush.msra.mxu0 0.0
    %1559 = vmatpush.msra.mxu0 0.0
    %1560 = vmatpush.msra.mxu0 %v1428
    %1561 = vmatpush.msra.mxu0 %v1424
    %1562 = vmatpush.msra.mxu0 %v1420
    %1563 = vmatpush.msra.mxu0 %v1416
    %1564 = vmatmul.f32.gmra.mxu0 %v1450
    %v1565 = vpop.f32.mrf.mxu0
    %v1566 = vadd.f32 %v1432, %v1565
    %1567 = vmatmul.f32.gmra.mxu0 %v1453
    %v1568 = vpop.f32.mrf.mxu0
    %v1569 = vadd.f32 %v1437, %v1568
    %1570 = vmatmul.f32.gmra.mxu0 %v1456
    %v1571 = vpop.f32.mrf.mxu0
    %v1572 = vadd.f32 %v1442, %v1571
    %1573 = vmatmul.f32.gmra.mxu0 %v1459
    %v1574 = vpop.f32.mrf.mxu0
    %v1575 = vadd.f32 %v1447, %v1574
    %1576 = vdwg.mxu0
    %v1577 = vadd.f32 %v1479, %v1229
    %v1578 = vadd.f32 %v1508, %v1230
    %v1579 = vadd.f32 %v1537, %v1231
    %v1580 = vadd.f32 %v1566, %v1232
    %v1581 = vadd.f32 %v1482, %v1233
    %v1582 = vadd.f32 %v1511, %v1234
    %v1583 = vadd.f32 %v1540, %v1235
    %v1584 = vadd.f32 %v1569, %v1236
    %v1585 = vadd.f32 %v1485, %v1237
    %v1586 = vadd.f32 %v1514, %v1238
    %v1587 = vadd.f32 %v1543, %v1239
    %v1588 = vadd.f32 %v1572, %v1240
    %v1589 = vadd.f32 %v1488, %v1241
    %v1590 = vadd.f32 %v1517, %v1242
    %v1591 = vadd.f32 %v1546, %v1243
    %v1592 = vadd.f32 %v1575, %v1244
    %v1593 = vmax.f32 %v1577, 0.0
    %v1594 = vmax.f32 %v1578, 0.0
    %v1595 = vmax.f32 %v1579, 0.0
    %v1596 = vmax.f32 %v1580, 0.0
    %v1597 = vmax.f32 %v1581, 0.0
    %v1598 = vmax.f32 %v1582, 0.0
    %v1599 = vmax.f32 %v1583, 0.0
    %v1600 = vmax.f32 %v1584, 0.0
    %v1601 = vmax.f32 %v1585, 0.0
    %v1602 = vmax.f32 %v1586, 0.0
    %v1603 = vmax.f32 %v1587, 0.0
    %v1604 = vmax.f32 %v1588, 0.0
    %v1605 = vmax.f32 %v1589, 0.0
    %v1606 = vmax.f32 %v1590, 0.0
    %v1607 = vmax.f32 %v1591, 0.0
    %v1608 = vmax.f32 %v1592, 0.0
    %s1609 = scalar_lea.vmem [#allocation11], 96
    %v1610 = vld [vmem:[%s1609] sm:$0xff]
    %v1611 = vld [vmem:[%s1609 + $0x8] sm:$0xff]
    %v1612 = vld [vmem:[%s1609 + $0x10] sm:$0xff]
    %v1613 = vld [vmem:[%s1609 + $0x18] sm:$0xff]
    %s1614 = scalar_lea.vmem %s6, 96
    %v1615 = vld [vmem:[%s1614] sm:$0xff]
    %v1616 = vld [vmem:[%s1614 + $0x8] sm:$0xff]
    %v1617 = vld [vmem:[%s1614 + $0x10] sm:$0xff]
    %v1618 = vld [vmem:[%s1614 + $0x18] sm:$0xff]
    %s1619 = scalar_lea.vmem [#allocation12], 96
    %v1620 = vld [vmem:[%s1619] sm:$0xff]
    %v1621 = vld [vmem:[%s1619 + $0x8] sm:$0xff]
    %v1622 = vld [vmem:[%s1619 + $0x10] sm:$0xff]
    %v1623 = vld [vmem:[%s1619 + $0x18] sm:$0xff]
    %s1624 = scalar_lea.vmem %s8, 96
    %v1625 = vld [vmem:[%s1624] sm:$0xff]
    %v1626 = vld [vmem:[%s1624 + $0x8] sm:$0xff]
    %v1627 = vld [vmem:[%s1624 + $0x10] sm:$0xff]
    %v1628 = vld [vmem:[%s1624 + $0x18] sm:$0xff]
    %1630 = vset.pattern.permute.xlu0 0
    %1631 = vperm.xlu0 %1630, %v1615
    %v1632 = vpop.permute.xlu0 %1631
    %1635 = vset.pattern.permute.xlu0 0
    %1636 = vperm.xlu0 %1635, %v1616
    %v1637 = vpop.permute.xlu0 %1636
    %1640 = vset.pattern.permute.xlu0 0
    %1641 = vperm.xlu0 %1640, %v1617
    %v1642 = vpop.permute.xlu0 %1641
    %1645 = vset.pattern.permute.xlu0 0
    %1646 = vperm.xlu0 %1645, %v1618
    %v1647 = vpop.permute.xlu0 %1646
    %v1650 = vsel %vm376, %v1610, 0
    %v1653 = vsel %vm376, %v1611, 0
    %v1656 = vsel %vm376, %v1612, 0
    %v1659 = vsel %vm376, %v1613, 0
    %1661 = vmatpush.msra.mxu0 0.0
    %1662 = vmatpush.msra.mxu0 0.0
    %1663 = vmatpush.msra.mxu0 0.0
    %1664 = vmatpush.msra.mxu0 0.0
    %1665 = vmatpush.msra.mxu0 0.0
    %1666 = vmatpush.msra.mxu0 0.0
    %1667 = vmatpush.msra.mxu0 0.0
    %1668 = vmatpush.msra.mxu0 0.0
    %1669 = vmatpush.msra.mxu0 0.0
    %1670 = vmatpush.msra.mxu0 0.0
    %1671 = vmatpush.msra.mxu0 0.0
    %1672 = vmatpush.msra.mxu0 0.0
    %1673 = vmatpush.msra.mxu0 %v1605
    %1674 = vmatpush.msra.mxu0 %v1601
    %1675 = vmatpush.msra.mxu0 %v1597
    %1676 = vmatpush.msra.mxu0 %v1593
    %1677 = vmatmul.f32.gmra.mxu0 %v1650
    %v1678 = vpop.f32.mrf.mxu0
    %v1679 = vadd.f32 %v1632, %v1678
    %1680 = vmatmul.f32.gmra.mxu0 %v1653
    %v1681 = vpop.f32.mrf.mxu0
    %v1682 = vadd.f32 %v1637, %v1681
    %1683 = vmatmul.f32.gmra.mxu0 %v1656
    %v1684 = vpop.f32.mrf.mxu0
    %v1685 = vadd.f32 %v1642, %v1684
    %1686 = vmatmul.f32.gmra.mxu0 %v1659
    %v1687 = vpop.f32.mrf.mxu0
    %v1688 = vadd.f32 %v1647, %v1687
    %1689 = vdwg.mxu0
    %1690 = vmatpush.msra.mxu0 0.0
    %1691 = vmatpush.msra.mxu0 0.0
    %1692 = vmatpush.msra.mxu0 0.0
    %1693 = vmatpush.msra.mxu0 0.0
    %1694 = vmatpush.msra.mxu0 0.0
    %1695 = vmatpush.msra.mxu0 0.0
    %1696 = vmatpush.msra.mxu0 0.0
    %1697 = vmatpush.msra.mxu0 0.0
    %1698 = vmatpush.msra.mxu0 0.0
    %1699 = vmatpush.msra.mxu0 0.0
    %1700 = vmatpush.msra.mxu0 0.0
    %1701 = vmatpush.msra.mxu0 0.0
    %1702 = vmatpush.msra.mxu0 %v1606
    %1703 = vmatpush.msra.mxu0 %v1602
    %1704 = vmatpush.msra.mxu0 %v1598
    %1705 = vmatpush.msra.mxu0 %v1594
    %1706 = vmatmul.f32.gmra.mxu0 %v1650
    %v1707 = vpop.f32.mrf.mxu0
    %v1708 = vadd.f32 %v1632, %v1707
    %1709 = vmatmul.f32.gmra.mxu0 %v1653
    %v1710 = vpop.f32.mrf.mxu0
    %v1711 = vadd.f32 %v1637, %v1710
    %1712 = vmatmul.f32.gmra.mxu0 %v1656
    %v1713 = vpop.f32.mrf.mxu0
    %v1714 = vadd.f32 %v1642, %v1713
    %1715 = vmatmul.f32.gmra.mxu0 %v1659
    %v1716 = vpop.f32.mrf.mxu0
    %v1717 = vadd.f32 %v1647, %v1716
    %1718 = vdwg.mxu0
    %1719 = vmatpush.msra.mxu0 0.0
    %1720 = vmatpush.msra.mxu0 0.0
    %1721 = vmatpush.msra.mxu0 0.0
    %1722 = vmatpush.msra.mxu0 0.0
    %1723 = vmatpush.msra.mxu0 0.0
    %1724 = vmatpush.msra.mxu0 0.0
    %1725 = vmatpush.msra.mxu0 0.0
    %1726 = vmatpush.msra.mxu0 0.0
    %1727 = vmatpush.msra.mxu0 0.0
    %1728 = vmatpush.msra.mxu0 0.0
    %1729 = vmatpush.msra.mxu0 0.0
    %1730 = vmatpush.msra.mxu0 0.0
    %1731 = vmatpush.msra.mxu0 %v1607
    %1732 = vmatpush.msra.mxu0 %v1603
    %1733 = vmatpush.msra.mxu0 %v1599
    %1734 = vmatpush.msra.mxu0 %v1595
    %1735 = vmatmul.f32.gmra.mxu0 %v1650
    %v1736 = vpop.f32.mrf.mxu0
    %v1737 = vadd.f32 %v1632, %v1736
    %1738 = vmatmul.f32.gmra.mxu0 %v1653
    %v1739 = vpop.f32.mrf.mxu0
    %v1740 = vadd.f32 %v1637, %v1739
    %1741 = vmatmul.f32.gmra.mxu0 %v1656
    %v1742 = vpop.f32.mrf.mxu0
    %v1743 = vadd.f32 %v1642, %v1742
    %1744 = vmatmul.f32.gmra.mxu0 %v1659
    %v1745 = vpop.f32.mrf.mxu0
    %v1746 = vadd.f32 %v1647, %v1745
    %1747 = vdwg.mxu0
    %1748 = vmatpush.msra.mxu0 0.0
    %1749 = vmatpush.msra.mxu0 0.0
    %1750 = vmatpush.msra.mxu0 0.0
    %1751 = vmatpush.msra.mxu0 0.0
    %1752 = vmatpush.msra.mxu0 0.0
    %1753 = vmatpush.msra.mxu0 0.0
    %1754 = vmatpush.msra.mxu0 0.0
    %1755 = vmatpush.msra.mxu0 0.0
    %1756 = vmatpush.msra.mxu0 0.0
    %1757 = vmatpush.msra.mxu0 0.0
    %1758 = vmatpush.msra.mxu0 0.0
    %1759 = vmatpush.msra.mxu0 0.0
    %1760 = vmatpush.msra.mxu0 %v1608
    %1761 = vmatpush.msra.mxu0 %v1604
    %1762 = vmatpush.msra.mxu0 %v1600
    %1763 = vmatpush.msra.mxu0 %v1596
    %1764 = vmatmul.f32.gmra.mxu0 %v1650
    %v1765 = vpop.f32.mrf.mxu0
    %v1766 = vadd.f32 %v1632, %v1765
    %1767 = vmatmul.f32.gmra.mxu0 %v1653
    %v1768 = vpop.f32.mrf.mxu0
    %v1769 = vadd.f32 %v1637, %v1768
    %1770 = vmatmul.f32.gmra.mxu0 %v1656
    %v1771 = vpop.f32.mrf.mxu0
    %v1772 = vadd.f32 %v1642, %v1771
    %1773 = vmatmul.f32.gmra.mxu0 %v1659
    %v1774 = vpop.f32.mrf.mxu0
    %v1775 = vadd.f32 %v1647, %v1774
    %1776 = vdwg.mxu0
    %v1777 = vmax.f32 %v1679, 0.0
    %v1778 = vmax.f32 %v1708, 0.0
    %v1779 = vmax.f32 %v1737, 0.0
    %v1780 = vmax.f32 %v1766, 0.0
    %v1781 = vmax.f32 %v1682, 0.0
    %v1782 = vmax.f32 %v1711, 0.0
    %v1783 = vmax.f32 %v1740, 0.0
    %v1784 = vmax.f32 %v1769, 0.0
    %v1785 = vmax.f32 %v1685, 0.0
    %v1786 = vmax.f32 %v1714, 0.0
    %v1787 = vmax.f32 %v1743, 0.0
    %v1788 = vmax.f32 %v1772, 0.0
    %v1789 = vmax.f32 %v1688, 0.0
    %v1790 = vmax.f32 %v1717, 0.0
    %v1791 = vmax.f32 %v1746, 0.0
    %v1792 = vmax.f32 %v1775, 0.0
    %1794 = vset.pattern.permute.xlu0 0
    %1795 = vperm.xlu0 %1794, %v1625
    %v1796 = vpop.permute.xlu0 %1795
    %1799 = vset.pattern.permute.xlu0 0
    %1800 = vperm.xlu0 %1799, %v1626
    %v1801 = vpop.permute.xlu0 %1800
    %1804 = vset.pattern.permute.xlu0 0
    %1805 = vperm.xlu0 %1804, %v1627
    %v1806 = vpop.permute.xlu0 %1805
    %1809 = vset.pattern.permute.xlu0 0
    %1810 = vperm.xlu0 %1809, %v1628
    %v1811 = vpop.permute.xlu0 %1810
    %v1814 = vsel %vm376, %v1620, 0
    %v1817 = vsel %vm376, %v1621, 0
    %v1820 = vsel %vm376, %v1622, 0
    %v1823 = vsel %vm376, %v1623, 0
    %1825 = vmatpush.msra.mxu0 0.0
    %1826 = vmatpush.msra.mxu0 0.0
    %1827 = vmatpush.msra.mxu0 0.0
    %1828 = vmatpush.msra.mxu0 0.0
    %1829 = vmatpush.msra.mxu0 0.0
    %1830 = vmatpush.msra.mxu0 0.0
    %1831 = vmatpush.msra.mxu0 0.0
    %1832 = vmatpush.msra.mxu0 0.0
    %1833 = vmatpush.msra.mxu0 0.0
    %1834 = vmatpush.msra.mxu0 0.0
    %1835 = vmatpush.msra.mxu0 0.0
    %1836 = vmatpush.msra.mxu0 0.0
    %1837 = vmatpush.msra.mxu0 %v1789
    %1838 = vmatpush.msra.mxu0 %v1785
    %1839 = vmatpush.msra.mxu0 %v1781
    %1840 = vmatpush.msra.mxu0 %v1777
    %1841 = vmatmul.f32.gmra.mxu0 %v1814
    %v1842 = vpop.f32.mrf.mxu0
    %v1843 = vadd.f32 %v1796, %v1842
    %1844 = vmatmul.f32.gmra.mxu0 %v1817
    %v1845 = vpop.f32.mrf.mxu0
    %v1846 = vadd.f32 %v1801, %v1845
    %1847 = vmatmul.f32.gmra.mxu0 %v1820
    %v1848 = vpop.f32.mrf.mxu0
    %v1849 = vadd.f32 %v1806, %v1848
    %1850 = vmatmul.f32.gmra.mxu0 %v1823
    %v1851 = vpop.f32.mrf.mxu0
    %v1852 = vadd.f32 %v1811, %v1851
    %1853 = vdwg.mxu0
    %1854 = vmatpush.msra.mxu0 0.0
    %1855 = vmatpush.msra.mxu0 0.0
    %1856 = vmatpush.msra.mxu0 0.0
    %1857 = vmatpush.msra.mxu0 0.0
    %1858 = vmatpush.msra.mxu0 0.0
    %1859 = vmatpush.msra.mxu0 0.0
    %1860 = vmatpush.msra.mxu0 0.0
    %1861 = vmatpush.msra.mxu0 0.0
    %1862 = vmatpush.msra.mxu0 0.0
    %1863 = vmatpush.msra.mxu0 0.0
    %1864 = vmatpush.msra.mxu0 0.0
    %1865 = vmatpush.msra.mxu0 0.0
    %1866 = vmatpush.msra.mxu0 %v1790
    %1867 = vmatpush.msra.mxu0 %v1786
    %1868 = vmatpush.msra.mxu0 %v1782
    %1869 = vmatpush.msra.mxu0 %v1778
    %1870 = vmatmul.f32.gmra.mxu0 %v1814
    %v1871 = vpop.f32.mrf.mxu0
    %v1872 = vadd.f32 %v1796, %v1871
    %1873 = vmatmul.f32.gmra.mxu0 %v1817
    %v1874 = vpop.f32.mrf.mxu0
    %v1875 = vadd.f32 %v1801, %v1874
    %1876 = vmatmul.f32.gmra.mxu0 %v1820
    %v1877 = vpop.f32.mrf.mxu0
    %v1878 = vadd.f32 %v1806, %v1877
    %1879 = vmatmul.f32.gmra.mxu0 %v1823
    %v1880 = vpop.f32.mrf.mxu0
    %v1881 = vadd.f32 %v1811, %v1880
    %1882 = vdwg.mxu0
    %1883 = vmatpush.msra.mxu0 0.0
    %1884 = vmatpush.msra.mxu0 0.0
    %1885 = vmatpush.msra.mxu0 0.0
    %1886 = vmatpush.msra.mxu0 0.0
    %1887 = vmatpush.msra.mxu0 0.0
    %1888 = vmatpush.msra.mxu0 0.0
    %1889 = vmatpush.msra.mxu0 0.0
    %1890 = vmatpush.msra.mxu0 0.0
    %1891 = vmatpush.msra.mxu0 0.0
    %1892 = vmatpush.msra.mxu0 0.0
    %1893 = vmatpush.msra.mxu0 0.0
    %1894 = vmatpush.msra.mxu0 0.0
    %1895 = vmatpush.msra.mxu0 %v1791
    %1896 = vmatpush.msra.mxu0 %v1787
    %1897 = vmatpush.msra.mxu0 %v1783
    %1898 = vmatpush.msra.mxu0 %v1779
    %1899 = vmatmul.f32.gmra.mxu0 %v1814
    %v1900 = vpop.f32.mrf.mxu0
    %v1901 = vadd.f32 %v1796, %v1900
    %1902 = vmatmul.f32.gmra.mxu0 %v1817
    %v1903 = vpop.f32.mrf.mxu0
    %v1904 = vadd.f32 %v1801, %v1903
    %1905 = vmatmul.f32.gmra.mxu0 %v1820
    %v1906 = vpop.f32.mrf.mxu0
    %v1907 = vadd.f32 %v1806, %v1906
    %1908 = vmatmul.f32.gmra.mxu0 %v1823
    %v1909 = vpop.f32.mrf.mxu0
    %v1910 = vadd.f32 %v1811, %v1909
    %1911 = vdwg.mxu0
    %1912 = vmatpush.msra.mxu0 0.0
    %1913 = vmatpush.msra.mxu0 0.0
    %1914 = vmatpush.msra.mxu0 0.0
    %1915 = vmatpush.msra.mxu0 0.0
    %1916 = vmatpush.msra.mxu0 0.0
    %1917 = vmatpush.msra.mxu0 0.0
    %1918 = vmatpush.msra.mxu0 0.0
    %1919 = vmatpush.msra.mxu0 0.0
    %1920 = vmatpush.msra.mxu0 0.0
    %1921 = vmatpush.msra.mxu0 0.0
    %1922 = vmatpush.msra.mxu0 0.0
    %1923 = vmatpush.msra.mxu0 0.0
    %1924 = vmatpush.msra.mxu0 %v1792
    %1925 = vmatpush.msra.mxu0 %v1788
    %1926 = vmatpush.msra.mxu0 %v1784
    %1927 = vmatpush.msra.mxu0 %v1780
    %1928 = vmatmul.f32.gmra.mxu0 %v1814
    %v1929 = vpop.f32.mrf.mxu0
    %v1930 = vadd.f32 %v1796, %v1929
    %1931 = vmatmul.f32.gmra.mxu0 %v1817
    %v1932 = vpop.f32.mrf.mxu0
    %v1933 = vadd.f32 %v1801, %v1932
    %1934 = vmatmul.f32.gmra.mxu0 %v1820
    %v1935 = vpop.f32.mrf.mxu0
    %v1936 = vadd.f32 %v1806, %v1935
    %1937 = vmatmul.f32.gmra.mxu0 %v1823
    %v1938 = vpop.f32.mrf.mxu0
    %v1939 = vadd.f32 %v1811, %v1938
    %1940 = vdwg.mxu0
    %v1941 = vadd.f32 %v1843, %v1593
    %v1942 = vadd.f32 %v1872, %v1594
    %v1943 = vadd.f32 %v1901, %v1595
    %v1944 = vadd.f32 %v1930, %v1596
    %v1945 = vadd.f32 %v1846, %v1597
    %v1946 = vadd.f32 %v1875, %v1598
    %v1947 = vadd.f32 %v1904, %v1599
    %v1948 = vadd.f32 %v1933, %v1600
    %v1949 = vadd.f32 %v1849, %v1601
    %v1950 = vadd.f32 %v1878, %v1602
    %v1951 = vadd.f32 %v1907, %v1603
    %v1952 = vadd.f32 %v1936, %v1604
    %v1953 = vadd.f32 %v1852, %v1605
    %v1954 = vadd.f32 %v1881, %v1606
    %v1955 = vadd.f32 %v1910, %v1607
    %v1956 = vadd.f32 %v1939, %v1608
    %v1957 = vmax.f32 %v1941, 0.0
    %v1958 = vmax.f32 %v1942, 0.0
    %v1959 = vmax.f32 %v1943, 0.0
    %v1960 = vmax.f32 %v1944, 0.0
    %v1961 = vmax.f32 %v1945, 0.0
    %v1962 = vmax.f32 %v1946, 0.0
    %v1963 = vmax.f32 %v1947, 0.0
    %v1964 = vmax.f32 %v1948, 0.0
    %v1965 = vmax.f32 %v1949, 0.0
    %v1966 = vmax.f32 %v1950, 0.0
    %v1967 = vmax.f32 %v1951, 0.0
    %v1968 = vmax.f32 %v1952, 0.0
    %v1969 = vmax.f32 %v1953, 0.0
    %v1970 = vmax.f32 %v1954, 0.0
    %v1971 = vmax.f32 %v1955, 0.0
    %v1972 = vmax.f32 %v1956, 0.0
    %s1973 = scalar_lea.vmem [#allocation11], 128
    %v1974 = vld [vmem:[%s1973] sm:$0xff]
    %v1975 = vld [vmem:[%s1973 + $0x8] sm:$0xff]
    %v1976 = vld [vmem:[%s1973 + $0x10] sm:$0xff]
    %v1977 = vld [vmem:[%s1973 + $0x18] sm:$0xff]
    %s1978 = scalar_lea.vmem %s6, 128
    %v1979 = vld [vmem:[%s1978] sm:$0xff]
    %v1980 = vld [vmem:[%s1978 + $0x8] sm:$0xff]
    %v1981 = vld [vmem:[%s1978 + $0x10] sm:$0xff]
    %v1982 = vld [vmem:[%s1978 + $0x18] sm:$0xff]
    %s1983 = scalar_lea.vmem [#allocation12], 128
    %v1984 = vld [vmem:[%s1983] sm:$0xff]
    %v1985 = vld [vmem:[%s1983 + $0x8] sm:$0xff]
    %v1986 = vld [vmem:[%s1983 + $0x10] sm:$0xff]
    %v1987 = vld [vmem:[%s1983 + $0x18] sm:$0xff]
    %s1988 = scalar_lea.vmem %s8, 128
    %v1989 = vld [vmem:[%s1988] sm:$0xff]
    %v1990 = vld [vmem:[%s1988 + $0x8] sm:$0xff]
    %v1991 = vld [vmem:[%s1988 + $0x10] sm:$0xff]
    %v1992 = vld [vmem:[%s1988 + $0x18] sm:$0xff]
    %1994 = vset.pattern.permute.xlu0 0
    %1995 = vperm.xlu0 %1994, %v1979
    %v1996 = vpop.permute.xlu0 %1995
    %1999 = vset.pattern.permute.xlu0 0
    %2000 = vperm.xlu0 %1999, %v1980
    %v2001 = vpop.permute.xlu0 %2000
    %2004 = vset.pattern.permute.xlu0 0
    %2005 = vperm.xlu0 %2004, %v1981
    %v2006 = vpop.permute.xlu0 %2005
    %2009 = vset.pattern.permute.xlu0 0
    %2010 = vperm.xlu0 %2009, %v1982
    %v2011 = vpop.permute.xlu0 %2010
    %v2014 = vsel %vm376, %v1974, 0
    %v2017 = vsel %vm376, %v1975, 0
    %v2020 = vsel %vm376, %v1976, 0
    %v2023 = vsel %vm376, %v1977, 0
    %2025 = vmatpush.msra.mxu0 0.0
    %2026 = vmatpush.msra.mxu0 0.0
    %2027 = vmatpush.msra.mxu0 0.0
    %2028 = vmatpush.msra.mxu0 0.0
    %2029 = vmatpush.msra.mxu0 0.0
    %2030 = vmatpush.msra.mxu0 0.0
    %2031 = vmatpush.msra.mxu0 0.0
    %2032 = vmatpush.msra.mxu0 0.0
    %2033 = vmatpush.msra.mxu0 0.0
    %2034 = vmatpush.msra.mxu0 0.0
    %2035 = vmatpush.msra.mxu0 0.0
    %2036 = vmatpush.msra.mxu0 0.0
    %2037 = vmatpush.msra.mxu0 %v1969
    %2038 = vmatpush.msra.mxu0 %v1965
    %2039 = vmatpush.msra.mxu0 %v1961
    %2040 = vmatpush.msra.mxu0 %v1957
    %2041 = vmatmul.f32.gmra.mxu0 %v2014
    %v2042 = vpop.f32.mrf.mxu0
    %v2043 = vadd.f32 %v1996, %v2042
    %2044 = vmatmul.f32.gmra.mxu0 %v2017
    %v2045 = vpop.f32.mrf.mxu0
    %v2046 = vadd.f32 %v2001, %v2045
    %2047 = vmatmul.f32.gmra.mxu0 %v2020
    %v2048 = vpop.f32.mrf.mxu0
    %v2049 = vadd.f32 %v2006, %v2048
    %2050 = vmatmul.f32.gmra.mxu0 %v2023
    %v2051 = vpop.f32.mrf.mxu0
    %v2052 = vadd.f32 %v2011, %v2051
    %2053 = vdwg.mxu0
    %2054 = vmatpush.msra.mxu0 0.0
    %2055 = vmatpush.msra.mxu0 0.0
    %2056 = vmatpush.msra.mxu0 0.0
    %2057 = vmatpush.msra.mxu0 0.0
    %2058 = vmatpush.msra.mxu0 0.0
    %2059 = vmatpush.msra.mxu0 0.0
    %2060 = vmatpush.msra.mxu0 0.0
    %2061 = vmatpush.msra.mxu0 0.0
    %2062 = vmatpush.msra.mxu0 0.0
    %2063 = vmatpush.msra.mxu0 0.0
    %2064 = vmatpush.msra.mxu0 0.0
    %2065 = vmatpush.msra.mxu0 0.0
    %2066 = vmatpush.msra.mxu0 %v1970
    %2067 = vmatpush.msra.mxu0 %v1966
    %2068 = vmatpush.msra.mxu0 %v1962
    %2069 = vmatpush.msra.mxu0 %v1958
    %2070 = vmatmul.f32.gmra.mxu0 %v2014
    %v2071 = vpop.f32.mrf.mxu0
    %v2072 = vadd.f32 %v1996, %v2071
    %2073 = vmatmul.f32.gmra.mxu0 %v2017
    %v2074 = vpop.f32.mrf.mxu0
    %v2075 = vadd.f32 %v2001, %v2074
    %2076 = vmatmul.f32.gmra.mxu0 %v2020
    %v2077 = vpop.f32.mrf.mxu0
    %v2078 = vadd.f32 %v2006, %v2077
    %2079 = vmatmul.f32.gmra.mxu0 %v2023
    %v2080 = vpop.f32.mrf.mxu0
    %v2081 = vadd.f32 %v2011, %v2080
    %2082 = vdwg.mxu0
    %2083 = vmatpush.msra.mxu0 0.0
    %2084 = vmatpush.msra.mxu0 0.0
    %2085 = vmatpush.msra.mxu0 0.0
    %2086 = vmatpush.msra.mxu0 0.0
    %2087 = vmatpush.msra.mxu0 0.0
    %2088 = vmatpush.msra.mxu0 0.0
    %2089 = vmatpush.msra.mxu0 0.0
    %2090 = vmatpush.msra.mxu0 0.0
    %2091 = vmatpush.msra.mxu0 0.0
    %2092 = vmatpush.msra.mxu0 0.0
    %2093 = vmatpush.msra.mxu0 0.0
    %2094 = vmatpush.msra.mxu0 0.0
    %2095 = vmatpush.msra.mxu0 %v1971
    %2096 = vmatpush.msra.mxu0 %v1967
    %2097 = vmatpush.msra.mxu0 %v1963
    %2098 = vmatpush.msra.mxu0 %v1959
    %2099 = vmatmul.f32.gmra.mxu0 %v2014
    %v2100 = vpop.f32.mrf.mxu0
    %v2101 = vadd.f32 %v1996, %v2100
    %2102 = vmatmul.f32.gmra.mxu0 %v2017
    %v2103 = vpop.f32.mrf.mxu0
    %v2104 = vadd.f32 %v2001, %v2103
    %2105 = vmatmul.f32.gmra.mxu0 %v2020
    %v2106 = vpop.f32.mrf.mxu0
    %v2107 = vadd.f32 %v2006, %v2106
    %2108 = vmatmul.f32.gmra.mxu0 %v2023
    %v2109 = vpop.f32.mrf.mxu0
    %v2110 = vadd.f32 %v2011, %v2109
    %2111 = vdwg.mxu0
    %2112 = vmatpush.msra.mxu0 0.0
    %2113 = vmatpush.msra.mxu0 0.0
    %2114 = vmatpush.msra.mxu0 0.0
    %2115 = vmatpush.msra.mxu0 0.0
    %2116 = vmatpush.msra.mxu0 0.0
    %2117 = vmatpush.msra.mxu0 0.0
    %2118 = vmatpush.msra.mxu0 0.0
    %2119 = vmatpush.msra.mxu0 0.0
    %2120 = vmatpush.msra.mxu0 0.0
    %2121 = vmatpush.msra.mxu0 0.0
    %2122 = vmatpush.msra.mxu0 0.0
    %2123 = vmatpush.msra.mxu0 0.0
    %2124 = vmatpush.msra.mxu0 %v1972
    %2125 = vmatpush.msra.mxu0 %v1968
    %2126 = vmatpush.msra.mxu0 %v1964
    %2127 = vmatpush.msra.mxu0 %v1960
    %2128 = vmatmul.f32.gmra.mxu0 %v2014
    %v2129 = vpop.f32.mrf.mxu0
    %v2130 = vadd.f32 %v1996, %v2129
    %2131 = vmatmul.f32.gmra.mxu0 %v2017
    %v2132 = vpop.f32.mrf.mxu0
    %v2133 = vadd.f32 %v2001, %v2132
    %2134 = vmatmul.f32.gmra.mxu0 %v2020
    %v2135 = vpop.f32.mrf.mxu0
    %v2136 = vadd.f32 %v2006, %v2135
    %2137 = vmatmul.f32.gmra.mxu0 %v2023
    %v2138 = vpop.f32.mrf.mxu0
    %v2139 = vadd.f32 %v2011, %v2138
    %2140 = vdwg.mxu0
    %v2141 = vmax.f32 %v2043, 0.0
    %v2142 = vmax.f32 %v2072, 0.0
    %v2143 = vmax.f32 %v2101, 0.0
    %v2144 = vmax.f32 %v2130, 0.0
    %v2145 = vmax.f32 %v2046, 0.0
    %v2146 = vmax.f32 %v2075, 0.0
    %v2147 = vmax.f32 %v2104, 0.0
    %v2148 = vmax.f32 %v2133, 0.0
    %v2149 = vmax.f32 %v2049, 0.0
    %v2150 = vmax.f32 %v2078, 0.0
    %v2151 = vmax.f32 %v2107, 0.0
    %v2152 = vmax.f32 %v2136, 0.0
    %v2153 = vmax.f32 %v2052, 0.0
    %v2154 = vmax.f32 %v2081, 0.0
    %v2155 = vmax.f32 %v2110, 0.0
    %v2156 = vmax.f32 %v2139, 0.0
    %2158 = vset.pattern.permute.xlu0 0
    %2159 = vperm.xlu0 %2158, %v1989
    %v2160 = vpop.permute.xlu0 %2159
    %2163 = vset.pattern.permute.xlu0 0
    %2164 = vperm.xlu0 %2163, %v1990
    %v2165 = vpop.permute.xlu0 %2164
    %2168 = vset.pattern.permute.xlu0 0
    %2169 = vperm.xlu0 %2168, %v1991
    %v2170 = vpop.permute.xlu0 %2169
    %2173 = vset.pattern.permute.xlu0 0
    %2174 = vperm.xlu0 %2173, %v1992
    %v2175 = vpop.permute.xlu0 %2174
    %v2178 = vsel %vm376, %v1984, 0
    %v2181 = vsel %vm376, %v1985, 0
    %v2184 = vsel %vm376, %v1986, 0
    %v2187 = vsel %vm376, %v1987, 0
    %2189 = vmatpush.msra.mxu0 0.0
    %2190 = vmatpush.msra.mxu0 0.0
    %2191 = vmatpush.msra.mxu0 0.0
    %2192 = vmatpush.msra.mxu0 0.0
    %2193 = vmatpush.msra.mxu0 0.0
    %2194 = vmatpush.msra.mxu0 0.0
    %2195 = vmatpush.msra.mxu0 0.0
    %2196 = vmatpush.msra.mxu0 0.0
    %2197 = vmatpush.msra.mxu0 0.0
    %2198 = vmatpush.msra.mxu0 0.0
    %2199 = vmatpush.msra.mxu0 0.0
    %2200 = vmatpush.msra.mxu0 0.0
    %2201 = vmatpush.msra.mxu0 %v2153
    %2202 = vmatpush.msra.mxu0 %v2149
    %2203 = vmatpush.msra.mxu0 %v2145
    %2204 = vmatpush.msra.mxu0 %v2141
    %2205 = vmatmul.f32.gmra.mxu0 %v2178
    %v2206 = vpop.f32.mrf.mxu0
    %v2207 = vadd.f32 %v2160, %v2206
    %2208 = vmatmul.f32.gmra.mxu0 %v2181
    %v2209 = vpop.f32.mrf.mxu0
    %v2210 = vadd.f32 %v2165, %v2209
    %2211 = vmatmul.f32.gmra.mxu0 %v2184
    %v2212 = vpop.f32.mrf.mxu0
    %v2213 = vadd.f32 %v2170, %v2212
    %2214 = vmatmul.f32.gmra.mxu0 %v2187
    %v2215 = vpop.f32.mrf.mxu0
    %v2216 = vadd.f32 %v2175, %v2215
    %2217 = vdwg.mxu0
    %2218 = vmatpush.msra.mxu0 0.0
    %2219 = vmatpush.msra.mxu0 0.0
    %2220 = vmatpush.msra.mxu0 0.0
    %2221 = vmatpush.msra.mxu0 0.0
    %2222 = vmatpush.msra.mxu0 0.0
    %2223 = vmatpush.msra.mxu0 0.0
    %2224 = vmatpush.msra.mxu0 0.0
    %2225 = vmatpush.msra.mxu0 0.0
    %2226 = vmatpush.msra.mxu0 0.0
    %2227 = vmatpush.msra.mxu0 0.0
    %2228 = vmatpush.msra.mxu0 0.0
    %2229 = vmatpush.msra.mxu0 0.0
    %2230 = vmatpush.msra.mxu0 %v2154
    %2231 = vmatpush.msra.mxu0 %v2150
    %2232 = vmatpush.msra.mxu0 %v2146
    %2233 = vmatpush.msra.mxu0 %v2142
    %2234 = vmatmul.f32.gmra.mxu0 %v2178
    %v2235 = vpop.f32.mrf.mxu0
    %v2236 = vadd.f32 %v2160, %v2235
    %2237 = vmatmul.f32.gmra.mxu0 %v2181
    %v2238 = vpop.f32.mrf.mxu0
    %v2239 = vadd.f32 %v2165, %v2238
    %2240 = vmatmul.f32.gmra.mxu0 %v2184
    %v2241 = vpop.f32.mrf.mxu0
    %v2242 = vadd.f32 %v2170, %v2241
    %2243 = vmatmul.f32.gmra.mxu0 %v2187
    %v2244 = vpop.f32.mrf.mxu0
    %v2245 = vadd.f32 %v2175, %v2244
    %2246 = vdwg.mxu0
    %2247 = vmatpush.msra.mxu0 0.0
    %2248 = vmatpush.msra.mxu0 0.0
    %2249 = vmatpush.msra.mxu0 0.0
    %2250 = vmatpush.msra.mxu0 0.0
    %2251 = vmatpush.msra.mxu0 0.0
    %2252 = vmatpush.msra.mxu0 0.0
    %2253 = vmatpush.msra.mxu0 0.0
    %2254 = vmatpush.msra.mxu0 0.0
    %2255 = vmatpush.msra.mxu0 0.0
    %2256 = vmatpush.msra.mxu0 0.0
    %2257 = vmatpush.msra.mxu0 0.0
    %2258 = vmatpush.msra.mxu0 0.0
    %2259 = vmatpush.msra.mxu0 %v2155
    %2260 = vmatpush.msra.mxu0 %v2151
    %2261 = vmatpush.msra.mxu0 %v2147
    %2262 = vmatpush.msra.mxu0 %v2143
    %2263 = vmatmul.f32.gmra.mxu0 %v2178
    %v2264 = vpop.f32.mrf.mxu0
    %v2265 = vadd.f32 %v2160, %v2264
    %2266 = vmatmul.f32.gmra.mxu0 %v2181
    %v2267 = vpop.f32.mrf.mxu0
    %v2268 = vadd.f32 %v2165, %v2267
    %2269 = vmatmul.f32.gmra.mxu0 %v2184
    %v2270 = vpop.f32.mrf.mxu0
    %v2271 = vadd.f32 %v2170, %v2270
    %2272 = vmatmul.f32.gmra.mxu0 %v2187
    %v2273 = vpop.f32.mrf.mxu0
    %v2274 = vadd.f32 %v2175, %v2273
    %2275 = vdwg.mxu0
    %2276 = vmatpush.msra.mxu0 0.0
    %2277 = vmatpush.msra.mxu0 0.0
    %2278 = vmatpush.msra.mxu0 0.0
    %2279 = vmatpush.msra.mxu0 0.0
    %2280 = vmatpush.msra.mxu0 0.0
    %2281 = vmatpush.msra.mxu0 0.0
    %2282 = vmatpush.msra.mxu0 0.0
    %2283 = vmatpush.msra.mxu0 0.0
    %2284 = vmatpush.msra.mxu0 0.0
    %2285 = vmatpush.msra.mxu0 0.0
    %2286 = vmatpush.msra.mxu0 0.0
    %2287 = vmatpush.msra.mxu0 0.0
    %2288 = vmatpush.msra.mxu0 %v2156
    %2289 = vmatpush.msra.mxu0 %v2152
    %2290 = vmatpush.msra.mxu0 %v2148
    %2291 = vmatpush.msra.mxu0 %v2144
    %2292 = vmatmul.f32.gmra.mxu0 %v2178
    %v2293 = vpop.f32.mrf.mxu0
    %v2294 = vadd.f32 %v2160, %v2293
    %2295 = vmatmul.f32.gmra.mxu0 %v2181
    %v2296 = vpop.f32.mrf.mxu0
    %v2297 = vadd.f32 %v2165, %v2296
    %2298 = vmatmul.f32.gmra.mxu0 %v2184
    %v2299 = vpop.f32.mrf.mxu0
    %v2300 = vadd.f32 %v2170, %v2299
    %2301 = vmatmul.f32.gmra.mxu0 %v2187
    %v2302 = vpop.f32.mrf.mxu0
    %v2303 = vadd.f32 %v2175, %v2302
    %2304 = vdwg.mxu0
    %v2305 = vadd.f32 %v2207, %v1957
    %v2306 = vadd.f32 %v2236, %v1958
    %v2307 = vadd.f32 %v2265, %v1959
    %v2308 = vadd.f32 %v2294, %v1960
    %v2309 = vadd.f32 %v2210, %v1961
    %v2310 = vadd.f32 %v2239, %v1962
    %v2311 = vadd.f32 %v2268, %v1963
    %v2312 = vadd.f32 %v2297, %v1964
    %v2313 = vadd.f32 %v2213, %v1965
    %v2314 = vadd.f32 %v2242, %v1966
    %v2315 = vadd.f32 %v2271, %v1967
    %v2316 = vadd.f32 %v2300, %v1968
    %v2317 = vadd.f32 %v2216, %v1969
    %v2318 = vadd.f32 %v2245, %v1970
    %v2319 = vadd.f32 %v2274, %v1971
    %v2320 = vadd.f32 %v2303, %v1972
    %v2321 = vmax.f32 %v2305, 0.0
    %v2322 = vmax.f32 %v2306, 0.0
    %v2323 = vmax.f32 %v2307, 0.0
    %v2324 = vmax.f32 %v2308, 0.0
    %v2325 = vmax.f32 %v2309, 0.0
    %v2326 = vmax.f32 %v2310, 0.0
    %v2327 = vmax.f32 %v2311, 0.0
    %v2328 = vmax.f32 %v2312, 0.0
    %v2329 = vmax.f32 %v2313, 0.0
    %v2330 = vmax.f32 %v2314, 0.0
    %v2331 = vmax.f32 %v2315, 0.0
    %v2332 = vmax.f32 %v2316, 0.0
    %v2333 = vmax.f32 %v2317, 0.0
    %v2334 = vmax.f32 %v2318, 0.0
    %v2335 = vmax.f32 %v2319, 0.0
    %v2336 = vmax.f32 %v2320, 0.0
    %v2337 = vld [vmem:[#allocation14] sm:$0xff]
    %v2338 = vld [vmem:[%s10] sm:$0xff]
    %2340 = vset.pattern.permute.xlu0 0
    %2341 = vperm.xlu0 %2340, %v2338
    %v2342 = vpop.permute.xlu0 %2341
    %v2345 = vsel %vm376, %v2337, 0
    %2347 = vmatpush.msra.mxu0 0.0
    %2348 = vmatpush.msra.mxu0 0.0
    %2349 = vmatpush.msra.mxu0 0.0
    %2350 = vmatpush.msra.mxu0 0.0
    %2351 = vmatpush.msra.mxu0 0.0
    %2352 = vmatpush.msra.mxu0 0.0
    %2353 = vmatpush.msra.mxu0 0.0
    %2354 = vmatpush.msra.mxu0 0.0
    %2355 = vmatpush.msra.mxu0 0.0
    %2356 = vmatpush.msra.mxu0 0.0
    %2357 = vmatpush.msra.mxu0 0.0
    %2358 = vmatpush.msra.mxu0 0.0
    %2359 = vmatpush.msra.mxu0 %v2333
    %2360 = vmatpush.msra.mxu0 %v2329
    %2361 = vmatpush.msra.mxu0 %v2325
    %2362 = vmatpush.msra.mxu0 %v2321
    %2363 = vmatmul.f32.gmra.mxu0 %v2345
    %v2364 = vpop.f32.mrf.mxu0
    %v2365 = vadd.f32 %v2342, %v2364
    %2366 = vdwg.mxu0
    %2367 = vmatpush.msra.mxu0 0.0
    %2368 = vmatpush.msra.mxu0 0.0
    %2369 = vmatpush.msra.mxu0 0.0
    %2370 = vmatpush.msra.mxu0 0.0
    %2371 = vmatpush.msra.mxu0 0.0
    %2372 = vmatpush.msra.mxu0 0.0
    %2373 = vmatpush.msra.mxu0 0.0
    %2374 = vmatpush.msra.mxu0 0.0
    %2375 = vmatpush.msra.mxu0 0.0
    %2376 = vmatpush.msra.mxu0 0.0
    %2377 = vmatpush.msra.mxu0 0.0
    %2378 = vmatpush.msra.mxu0 0.0
    %2379 = vmatpush.msra.mxu0 %v2334
    %2380 = vmatpush.msra.mxu0 %v2330
    %2381 = vmatpush.msra.mxu0 %v2326
    %2382 = vmatpush.msra.mxu0 %v2322
    %2383 = vmatmul.f32.gmra.mxu0 %v2345
    %v2384 = vpop.f32.mrf.mxu0
    %v2385 = vadd.f32 %v2342, %v2384
    %2386 = vdwg.mxu0
    %2387 = vmatpush.msra.mxu0 0.0
    %2388 = vmatpush.msra.mxu0 0.0
    %2389 = vmatpush.msra.mxu0 0.0
    %2390 = vmatpush.msra.mxu0 0.0
    %2391 = vmatpush.msra.mxu0 0.0
    %2392 = vmatpush.msra.mxu0 0.0
    %2393 = vmatpush.msra.mxu0 0.0
    %2394 = vmatpush.msra.mxu0 0.0
    %2395 = vmatpush.msra.mxu0 0.0
    %2396 = vmatpush.msra.mxu0 0.0
    %2397 = vmatpush.msra.mxu0 0.0
    %2398 = vmatpush.msra.mxu0 0.0
    %2399 = vmatpush.msra.mxu0 %v2335
    %2400 = vmatpush.msra.mxu0 %v2331
    %2401 = vmatpush.msra.mxu0 %v2327
    %2402 = vmatpush.msra.mxu0 %v2323
    %2403 = vmatmul.f32.gmra.mxu0 %v2345
    %v2404 = vpop.f32.mrf.mxu0
    %v2405 = vadd.f32 %v2342, %v2404
    %2406 = vdwg.mxu0
    %2407 = vmatpush.msra.mxu0 0.0
    %2408 = vmatpush.msra.mxu0 0.0
    %2409 = vmatpush.msra.mxu0 0.0
    %2410 = vmatpush.msra.mxu0 0.0
    %2411 = vmatpush.msra.mxu0 0.0
    %2412 = vmatpush.msra.mxu0 0.0
    %2413 = vmatpush.msra.mxu0 0.0
    %2414 = vmatpush.msra.mxu0 0.0
    %2415 = vmatpush.msra.mxu0 0.0
    %2416 = vmatpush.msra.mxu0 0.0
    %2417 = vmatpush.msra.mxu0 0.0
    %2418 = vmatpush.msra.mxu0 0.0
    %2419 = vmatpush.msra.mxu0 %v2336
    %2420 = vmatpush.msra.mxu0 %v2332
    %2421 = vmatpush.msra.mxu0 %v2328
    %2422 = vmatpush.msra.mxu0 %v2324
    %2423 = vmatmul.f32.gmra.mxu0 %v2345
    %v2424 = vpop.f32.mrf.mxu0
    %v2425 = vadd.f32 %v2342, %v2424
    %2426 = vdwg.mxu0
    %v2427 = vmax.f32 %v2365, 0.0
    %v2428 = vmax.f32 %v2385, 0.0
    %v2429 = vmax.f32 %v2405, 0.0
    %v2430 = vmax.f32 %v2425, 0.0
    %v2433 = vrot.slane %v2428, 7
    %vm2434 = vcmask 1040384
    %v2435 = vsel %vm2434, %v2427, %v2433
    %v2437 = vlaneseq
    %vm2438 = vcmp.ge.s32.totalorder %v2437, 0
    %vm2439 = vcmp.lt.s32.totalorder %v2437, 256
    %vm2440 = vmand %vm2438, %vm2439
    %2441 = vst.msk [vmem:[#allocation2] ss:$2 sm:$0x3] %vm2440, %v2435
    %2442 = vst [vmem:[#allocation1] sm:$0xff] %v2427
    %2443 = vst [vmem:[#allocation1 + $0x9] sm:$0xff] %v2428
    %s2444 = scalar_lea.vmem [#allocation1], 1
    %v2445 = vld [vmem:[%s2444] ss:$9 sm:$0xff]
    %s2447 = scalar_lea.vmem [#allocation2], 4
    %2448 = vst.msk [vmem:[%s2447] ss:$2 sm:$0x3] %vm2440, %v2445
    %2449 = vst [vmem:[#allocation1] sm:$0xff] %v2427
    %2450 = vst [vmem:[#allocation1 + $0x9] sm:$0xff] %v2428
    %s2451 = scalar_lea.vmem [#allocation1], 2
    %v2452 = vld [vmem:[%s2451] ss:$9 sm:$0xff]
    %s2454 = scalar_lea.vmem [#allocation2], 8
    %2455 = vst.msk [vmem:[%s2454] ss:$2 sm:$0x3] %vm2440, %v2452
    %2456 = vst [vmem:[#allocation1] sm:$0xff] %v2427
    %2457 = vst [vmem:[#allocation1 + $0x9] sm:$0xff] %v2428
    %s2458 = scalar_lea.vmem [#allocation1], 3
    %v2459 = vld [vmem:[%s2458] ss:$9 sm:$0xff]
    %s2461 = scalar_lea.vmem [#allocation2], 12
    %2462 = vst.msk [vmem:[%s2461] ss:$2 sm:$0x3] %vm2440, %v2459
    %2463 = vst [vmem:[#allocation1] sm:$0xff] %v2427
    %2464 = vst [vmem:[#allocation1 + $0x9] sm:$0xff] %v2428
    %s2465 = scalar_lea.vmem [#allocation1], 4
    %v2466 = vld [vmem:[%s2465] ss:$9 sm:$0xff]
    %s2468 = scalar_lea.vmem [#allocation2], 16
    %2469 = vst.msk [vmem:[%s2468] ss:$2 sm:$0x3] %vm2440, %v2466
    %2470 = vst [vmem:[#allocation1] sm:$0xff] %v2427
    %2471 = vst [vmem:[#allocation1 + $0x9] sm:$0xff] %v2428
    %s2472 = scalar_lea.vmem [#allocation1], 5
    %v2473 = vld [vmem:[%s2472] ss:$9 sm:$0xff]
    %s2475 = scalar_lea.vmem [#allocation2], 20
    %2476 = vst.msk [vmem:[%s2475] ss:$2 sm:$0x3] %vm2440, %v2473
    %2477 = vst [vmem:[#allocation1] sm:$0xff] %v2427
    %2478 = vst [vmem:[#allocation1 + $0x9] sm:$0xff] %v2428
    %s2479 = scalar_lea.vmem [#allocation1], 6
    %v2480 = vld [vmem:[%s2479] ss:$9 sm:$0xff]
    %s2482 = scalar_lea.vmem [#allocation2], 24
    %2483 = vst.msk [vmem:[%s2482] ss:$2 sm:$0x3] %vm2440, %v2480
    %2484 = vst [vmem:[#allocation1] sm:$0xff] %v2427
    %2485 = vst [vmem:[#allocation1 + $0x9] sm:$0xff] %v2428
    %s2486 = scalar_lea.vmem [#allocation1], 7
    %v2487 = vld [vmem:[%s2486] ss:$9 sm:$0xff]
    %s2489 = scalar_lea.vmem [#allocation2], 28
    %2490 = vst.msk [vmem:[%s2489] ss:$2 sm:$0x3] %vm2440, %v2487
    %v2493 = vrot.slane %v2430, 7
    %v2494 = vsel %vm2434, %v2429, %v2493
    %s2496 = scalar_lea.vmem [#allocation2], 1
    %2497 = vst.msk [vmem:[%s2496] ss:$2 sm:$0x3] %vm2440, %v2494
    %2498 = vst [vmem:[#allocation1] sm:$0xff] %v2429
    %2499 = vst [vmem:[#allocation1 + $0x9] sm:$0xff] %v2430
    %s2500 = scalar_lea.vmem [#allocation1], 1
    %v2501 = vld [vmem:[%s2500] ss:$9 sm:$0xff]
    %s2503 = scalar_lea.vmem [#allocation2], 5
    %2504 = vst.msk [vmem:[%s2503] ss:$2 sm:$0x3] %vm2440, %v2501
    %2505 = vst [vmem:[#allocation1] sm:$0xff] %v2429
    %2506 = vst [vmem:[#allocation1 + $0x9] sm:$0xff] %v2430
    %s2507 = scalar_lea.vmem [#allocation1], 2
    %v2508 = vld [vmem:[%s2507] ss:$9 sm:$0xff]
    %s2510 = scalar_lea.vmem [#allocation2], 9
    %2511 = vst.msk [vmem:[%s2510] ss:$2 sm:$0x3] %vm2440, %v2508
    %2512 = vst [vmem:[#allocation1] sm:$0xff] %v2429
    %2513 = vst [vmem:[#allocation1 + $0x9] sm:$0xff] %v2430
    %s2514 = scalar_lea.vmem [#allocation1], 3
    %v2515 = vld [vmem:[%s2514] ss:$9 sm:$0xff]
    %s2517 = scalar_lea.vmem [#allocation2], 13
    %2518 = vst.msk [vmem:[%s2517] ss:$2 sm:$0x3] %vm2440, %v2515
    %2519 = vst [vmem:[#allocation1] sm:$0xff] %v2429
    %2520 = vst [vmem:[#allocation1 + $0x9] sm:$0xff] %v2430
    %s2521 = scalar_lea.vmem [#allocation1], 4
    %v2522 = vld [vmem:[%s2521] ss:$9 sm:$0xff]
    %s2524 = scalar_lea.vmem [#allocation2], 17
    %2525 = vst.msk [vmem:[%s2524] ss:$2 sm:$0x3] %vm2440, %v2522
    %2526 = vst [vmem:[#allocation1] sm:$0xff] %v2429
    %2527 = vst [vmem:[#allocation1 + $0x9] sm:$0xff] %v2430
    %s2528 = scalar_lea.vmem [#allocation1], 5
    %v2529 = vld [vmem:[%s2528] ss:$9 sm:$0xff]
    %s2531 = scalar_lea.vmem [#allocation2], 21
    %2532 = vst.msk [vmem:[%s2531] ss:$2 sm:$0x3] %vm2440, %v2529
    %2533 = vst [vmem:[#allocation1] sm:$0xff] %v2429
    %2534 = vst [vmem:[#allocation1 + $0x9] sm:$0xff] %v2430
    %s2535 = scalar_lea.vmem [#allocation1], 6
    %v2536 = vld [vmem:[%s2535] ss:$9 sm:$0xff]
    %s2538 = scalar_lea.vmem [#allocation2], 25
    %2539 = vst.msk [vmem:[%s2538] ss:$2 sm:$0x3] %vm2440, %v2536
    %2540 = vst [vmem:[#allocation1] sm:$0xff] %v2429
    %2541 = vst [vmem:[#allocation1 + $0x9] sm:$0xff] %v2430
    %s2542 = scalar_lea.vmem [#allocation1], 7
    %v2543 = vld [vmem:[%s2542] ss:$9 sm:$0xff]
    %s2545 = scalar_lea.vmem [#allocation2], 29
    %2546 = vst.msk [vmem:[%s2545] ss:$2 sm:$0x3] %vm2440, %v2543
    %s2547 = smul.u32 8, 256
    %s2548 = smul.u32 %s2547, 2
    %s2549 = sshll.u32 %s2548, 4
    %2550 = dma.done [#allocation4], %s2549
    %v2551 = vld [vmem:[#allocation2] sm:$0xff]
    %v2552 = vld [vmem:[#allocation2 + $0x8] sm:$0xff]
    %v2553 = vld [vmem:[#allocation2 + $0x10] sm:$0xff]
    %v2554 = vld [vmem:[#allocation2 + $0x18] sm:$0xff]
    %v2555 = vld [vmem:[#allocation3] sm:$0xff]
    %v2556 = vld [vmem:[#allocation3 + $0x8] sm:$0xff]
    %v2557 = vld [vmem:[#allocation3 + $0x10] sm:$0xff]
    %v2558 = vld [vmem:[#allocation3 + $0x18] sm:$0xff]
    %v2559 = vld [vmem:[#allocation3 + $0x20] sm:$0xff]
    %v2560 = vld [vmem:[#allocation3 + $0x28] sm:$0xff]
    %v2561 = vld [vmem:[#allocation3 + $0x30] sm:$0xff]
    %v2562 = vld [vmem:[#allocation3 + $0x38] sm:$0xff]
    %v2563 = vld [vmem:[#allocation3 + $0x40] sm:$0xff]
    %v2564 = vld [vmem:[#allocation3 + $0x48] sm:$0xff]
    %v2565 = vld [vmem:[#allocation3 + $0x50] sm:$0xff]
    %v2566 = vld [vmem:[#allocation3 + $0x58] sm:$0xff]
    %v2567 = vld [vmem:[#allocation3 + $0x60] sm:$0xff]
    %v2568 = vld [vmem:[#allocation3 + $0x68] sm:$0xff]
    %v2569 = vld [vmem:[#allocation3 + $0x70] sm:$0xff]
    %v2570 = vld [vmem:[#allocation3 + $0x78] sm:$0xff]
    %v2571 = vld [vmem:[#allocation3 + $0x80] sm:$0xff]
    %v2572 = vld [vmem:[#allocation3 + $0x88] sm:$0xff]
    %v2573 = vld [vmem:[#allocation3 + $0x90] sm:$0xff]
    %v2574 = vld [vmem:[#allocation3 + $0x98] sm:$0xff]
    %v2575 = vld [vmem:[#allocation3 + $0xa0] sm:$0xff]
    %v2576 = vld [vmem:[#allocation3 + $0xa8] sm:$0xff]
    %v2577 = vld [vmem:[#allocation3 + $0xb0] sm:$0xff]
    %v2578 = vld [vmem:[#allocation3 + $0xb8] sm:$0xff]
    %v2579 = vld [vmem:[#allocation3 + $0xc0] sm:$0xff]
    %v2580 = vld [vmem:[#allocation3 + $0xc8] sm:$0xff]
    %v2581 = vld [vmem:[#allocation3 + $0xd0] sm:$0xff]
    %v2582 = vld [vmem:[#allocation3 + $0xd8] sm:$0xff]
    %v2583 = vld [vmem:[#allocation3 + $0xe0] sm:$0xff]
    %v2584 = vld [vmem:[#allocation3 + $0xe8] sm:$0xff]
    %v2585 = vld [vmem:[#allocation3 + $0xf0] sm:$0xff]
    %v2586 = vld [vmem:[#allocation3 + $0xf8] sm:$0xff]
    %v2587 = vld [vmem:[#allocation3 + $0x100] sm:$0xff]
    %v2588 = vld [vmem:[#allocation3 + $0x108] sm:$0xff]
    %v2589 = vld [vmem:[#allocation3 + $0x110] sm:$0xff]
    %v2590 = vld [vmem:[#allocation3 + $0x118] sm:$0xff]
    %v2591 = vld [vmem:[#allocation3 + $0x120] sm:$0xff]
    %v2592 = vld [vmem:[#allocation3 + $0x128] sm:$0xff]
    %v2593 = vld [vmem:[#allocation3 + $0x130] sm:$0xff]
    %v2594 = vld [vmem:[#allocation3 + $0x138] sm:$0xff]
    %v2595 = vld [vmem:[#allocation3 + $0x140] sm:$0xff]
    %v2596 = vld [vmem:[#allocation3 + $0x148] sm:$0xff]
    %v2597 = vld [vmem:[#allocation3 + $0x150] sm:$0xff]
    %v2598 = vld [vmem:[#allocation3 + $0x158] sm:$0xff]
    %v2599 = vld [vmem:[#allocation3 + $0x160] sm:$0xff]
    %v2600 = vld [vmem:[#allocation3 + $0x168] sm:$0xff]
    %v2601 = vld [vmem:[#allocation3 + $0x170] sm:$0xff]
    %v2602 = vld [vmem:[#allocation3 + $0x178] sm:$0xff]
    %v2603 = vld [vmem:[#allocation3 + $0x180] sm:$0xff]
    %v2604 = vld [vmem:[#allocation3 + $0x188] sm:$0xff]
    %v2605 = vld [vmem:[#allocation3 + $0x190] sm:$0xff]
    %v2606 = vld [vmem:[#allocation3 + $0x198] sm:$0xff]
    %v2607 = vld [vmem:[#allocation3 + $0x1a0] sm:$0xff]
    %v2608 = vld [vmem:[#allocation3 + $0x1a8] sm:$0xff]
    %v2609 = vld [vmem:[#allocation3 + $0x1b0] sm:$0xff]
    %v2610 = vld [vmem:[#allocation3 + $0x1b8] sm:$0xff]
    %v2611 = vld [vmem:[#allocation3 + $0x1c0] sm:$0xff]
    %v2612 = vld [vmem:[#allocation3 + $0x1c8] sm:$0xff]
    %v2613 = vld [vmem:[#allocation3 + $0x1d0] sm:$0xff]
    %v2614 = vld [vmem:[#allocation3 + $0x1d8] sm:$0xff]
    %v2615 = vld [vmem:[#allocation3 + $0x1e0] sm:$0xff]
    %v2616 = vld [vmem:[#allocation3 + $0x1e8] sm:$0xff]
    %v2617 = vld [vmem:[#allocation3 + $0x1f0] sm:$0xff]
    %v2618 = vld [vmem:[#allocation3 + $0x1f8] sm:$0xff]
    %v2619 = vld [vmem:[#allocation3 + $0x200] sm:$0xff]
    %v2620 = vld [vmem:[#allocation3 + $0x208] sm:$0xff]
    %v2621 = vld [vmem:[#allocation3 + $0x210] sm:$0xff]
    %v2622 = vld [vmem:[#allocation3 + $0x218] sm:$0xff]
    %v2623 = vld [vmem:[#allocation3 + $0x220] sm:$0xff]
    %v2624 = vld [vmem:[#allocation3 + $0x228] sm:$0xff]
    %v2625 = vld [vmem:[#allocation3 + $0x230] sm:$0xff]
    %v2626 = vld [vmem:[#allocation3 + $0x238] sm:$0xff]
    %v2627 = vld [vmem:[#allocation3 + $0x240] sm:$0xff]
    %v2628 = vld [vmem:[#allocation3 + $0x248] sm:$0xff]
    %v2629 = vld [vmem:[#allocation3 + $0x250] sm:$0xff]
    %v2630 = vld [vmem:[#allocation3 + $0x258] sm:$0xff]
    %v2631 = vld [vmem:[#allocation3 + $0x260] sm:$0xff]
    %v2632 = vld [vmem:[#allocation3 + $0x268] sm:$0xff]
    %v2633 = vld [vmem:[#allocation3 + $0x270] sm:$0xff]
    %v2634 = vld [vmem:[#allocation3 + $0x278] sm:$0xff]
    %v2635 = vld [vmem:[#allocation3 + $0x280] sm:$0xff]
    %v2636 = vld [vmem:[#allocation3 + $0x288] sm:$0xff]
    %v2637 = vld [vmem:[#allocation3 + $0x290] sm:$0xff]
    %v2638 = vld [vmem:[#allocation3 + $0x298] sm:$0xff]
    %v2639 = vld [vmem:[#allocation3 + $0x2a0] sm:$0xff]
    %v2640 = vld [vmem:[#allocation3 + $0x2a8] sm:$0xff]
    %v2641 = vld [vmem:[#allocation3 + $0x2b0] sm:$0xff]
    %v2642 = vld [vmem:[#allocation3 + $0x2b8] sm:$0xff]
    %v2643 = vld [vmem:[#allocation3 + $0x2c0] sm:$0xff]
    %v2644 = vld [vmem:[#allocation3 + $0x2c8] sm:$0xff]
    %v2645 = vld [vmem:[#allocation3 + $0x2d0] sm:$0xff]
    %v2646 = vld [vmem:[#allocation3 + $0x2d8] sm:$0xff]
    %v2647 = vld [vmem:[#allocation3 + $0x2e0] sm:$0xff]
    %v2648 = vld [vmem:[#allocation3 + $0x2e8] sm:$0xff]
    %v2649 = vld [vmem:[#allocation3 + $0x2f0] sm:$0xff]
    %v2650 = vld [vmem:[#allocation3 + $0x2f8] sm:$0xff]
    %v2651 = vld [vmem:[#allocation3 + $0x300] sm:$0xff]
    %v2652 = vld [vmem:[#allocation3 + $0x308] sm:$0xff]
    %v2653 = vld [vmem:[#allocation3 + $0x310] sm:$0xff]
    %v2654 = vld [vmem:[#allocation3 + $0x318] sm:$0xff]
    %v2655 = vld [vmem:[#allocation3 + $0x320] sm:$0xff]
    %v2656 = vld [vmem:[#allocation3 + $0x328] sm:$0xff]
    %v2657 = vld [vmem:[#allocation3 + $0x330] sm:$0xff]
    %v2658 = vld [vmem:[#allocation3 + $0x338] sm:$0xff]
    %v2659 = vld [vmem:[#allocation3 + $0x340] sm:$0xff]
    %v2660 = vld [vmem:[#allocation3 + $0x348] sm:$0xff]
    %v2661 = vld [vmem:[#allocation3 + $0x350] sm:$0xff]
    %v2662 = vld [vmem:[#allocation3 + $0x358] sm:$0xff]
    %v2663 = vld [vmem:[#allocation3 + $0x360] sm:$0xff]
    %v2664 = vld [vmem:[#allocation3 + $0x368] sm:$0xff]
    %v2665 = vld [vmem:[#allocation3 + $0x370] sm:$0xff]
    %v2666 = vld [vmem:[#allocation3 + $0x378] sm:$0xff]
    %v2667 = vld [vmem:[#allocation3 + $0x380] sm:$0xff]
    %v2668 = vld [vmem:[#allocation3 + $0x388] sm:$0xff]
    %v2669 = vld [vmem:[#allocation3 + $0x390] sm:$0xff]
    %v2670 = vld [vmem:[#allocation3 + $0x398] sm:$0xff]
    %v2671 = vld [vmem:[#allocation3 + $0x3a0] sm:$0xff]
    %v2672 = vld [vmem:[#allocation3 + $0x3a8] sm:$0xff]
    %v2673 = vld [vmem:[#allocation3 + $0x3b0] sm:$0xff]
    %v2674 = vld [vmem:[#allocation3 + $0x3b8] sm:$0xff]
    %v2675 = vld [vmem:[#allocation3 + $0x3c0] sm:$0xff]
    %v2676 = vld [vmem:[#allocation3 + $0x3c8] sm:$0xff]
    %v2677 = vld [vmem:[#allocation3 + $0x3d0] sm:$0xff]
    %v2678 = vld [vmem:[#allocation3 + $0x3d8] sm:$0xff]
    %v2679 = vld [vmem:[#allocation3 + $0x3e0] sm:$0xff]
    %v2680 = vld [vmem:[#allocation3 + $0x3e8] sm:$0xff]
    %v2681 = vld [vmem:[#allocation3 + $0x3f0] sm:$0xff]
    %v2682 = vld [vmem:[#allocation3 + $0x3f8] sm:$0xff]
    %v2683 = vld [vmem:[#allocation3 + $0x400] sm:$0xff]
    %v2684 = vld [vmem:[#allocation3 + $0x408] sm:$0xff]
    %v2685 = vld [vmem:[#allocation3 + $0x410] sm:$0xff]
    %v2686 = vld [vmem:[#allocation3 + $0x418] sm:$0xff]
    %v2687 = vld [vmem:[#allocation3 + $0x420] sm:$0xff]
    %v2688 = vld [vmem:[#allocation3 + $0x428] sm:$0xff]
    %v2689 = vld [vmem:[#allocation3 + $0x430] sm:$0xff]
    %v2690 = vld [vmem:[#allocation3 + $0x438] sm:$0xff]
    %v2691 = vld [vmem:[#allocation3 + $0x440] sm:$0xff]
    %v2692 = vld [vmem:[#allocation3 + $0x448] sm:$0xff]
    %v2693 = vld [vmem:[#allocation3 + $0x450] sm:$0xff]
    %v2694 = vld [vmem:[#allocation3 + $0x458] sm:$0xff]
    %v2695 = vld [vmem:[#allocation3 + $0x460] sm:$0xff]
    %v2696 = vld [vmem:[#allocation3 + $0x468] sm:$0xff]
    %v2697 = vld [vmem:[#allocation3 + $0x470] sm:$0xff]
    %v2698 = vld [vmem:[#allocation3 + $0x478] sm:$0xff]
    %v2699 = vld [vmem:[#allocation3 + $0x480] sm:$0xff]
    %v2700 = vld [vmem:[#allocation3 + $0x488] sm:$0xff]
    %v2701 = vld [vmem:[#allocation3 + $0x490] sm:$0xff]
    %v2702 = vld [vmem:[#allocation3 + $0x498] sm:$0xff]
    %v2703 = vld [vmem:[#allocation3 + $0x4a0] sm:$0xff]
    %v2704 = vld [vmem:[#allocation3 + $0x4a8] sm:$0xff]
    %v2705 = vld [vmem:[#allocation3 + $0x4b0] sm:$0xff]
    %v2706 = vld [vmem:[#allocation3 + $0x4b8] sm:$0xff]
    %v2707 = vld [vmem:[#allocation3 + $0x4c0] sm:$0xff]
    %v2708 = vld [vmem:[#allocation3 + $0x4c8] sm:$0xff]
    %v2709 = vld [vmem:[#allocation3 + $0x4d0] sm:$0xff]
    %v2710 = vld [vmem:[#allocation3 + $0x4d8] sm:$0xff]
    %v2711 = vld [vmem:[#allocation3 + $0x4e0] sm:$0xff]
    %v2712 = vld [vmem:[#allocation3 + $0x4e8] sm:$0xff]
    %v2713 = vld [vmem:[#allocation3 + $0x4f0] sm:$0xff]
    %v2714 = vld [vmem:[#allocation3 + $0x4f8] sm:$0xff]
    %v2715 = vld [vmem:[#allocation3 + $0x500] sm:$0xff]
    %v2716 = vld [vmem:[#allocation3 + $0x508] sm:$0xff]
    %v2717 = vld [vmem:[#allocation3 + $0x510] sm:$0xff]
    %v2718 = vld [vmem:[#allocation3 + $0x518] sm:$0xff]
    %v2719 = vld [vmem:[#allocation3 + $0x520] sm:$0xff]
    %v2720 = vld [vmem:[#allocation3 + $0x528] sm:$0xff]
    %v2721 = vld [vmem:[#allocation3 + $0x530] sm:$0xff]
    %v2722 = vld [vmem:[#allocation3 + $0x538] sm:$0xff]
    %v2723 = vld [vmem:[#allocation3 + $0x540] sm:$0xff]
    %v2724 = vld [vmem:[#allocation3 + $0x548] sm:$0xff]
    %v2725 = vld [vmem:[#allocation3 + $0x550] sm:$0xff]
    %v2726 = vld [vmem:[#allocation3 + $0x558] sm:$0xff]
    %v2727 = vld [vmem:[#allocation3 + $0x560] sm:$0xff]
    %v2728 = vld [vmem:[#allocation3 + $0x568] sm:$0xff]
    %v2729 = vld [vmem:[#allocation3 + $0x570] sm:$0xff]
    %v2730 = vld [vmem:[#allocation3 + $0x578] sm:$0xff]
    %v2731 = vld [vmem:[#allocation3 + $0x580] sm:$0xff]
    %v2732 = vld [vmem:[#allocation3 + $0x588] sm:$0xff]
    %v2733 = vld [vmem:[#allocation3 + $0x590] sm:$0xff]
    %v2734 = vld [vmem:[#allocation3 + $0x598] sm:$0xff]
    %v2735 = vld [vmem:[#allocation3 + $0x5a0] sm:$0xff]
    %v2736 = vld [vmem:[#allocation3 + $0x5a8] sm:$0xff]
    %v2737 = vld [vmem:[#allocation3 + $0x5b0] sm:$0xff]
    %v2738 = vld [vmem:[#allocation3 + $0x5b8] sm:$0xff]
    %v2739 = vld [vmem:[#allocation3 + $0x5c0] sm:$0xff]
    %v2740 = vld [vmem:[#allocation3 + $0x5c8] sm:$0xff]
    %v2741 = vld [vmem:[#allocation3 + $0x5d0] sm:$0xff]
    %v2742 = vld [vmem:[#allocation3 + $0x5d8] sm:$0xff]
    %v2743 = vld [vmem:[#allocation3 + $0x5e0] sm:$0xff]
    %v2744 = vld [vmem:[#allocation3 + $0x5e8] sm:$0xff]
    %v2745 = vld [vmem:[#allocation3 + $0x5f0] sm:$0xff]
    %v2746 = vld [vmem:[#allocation3 + $0x5f8] sm:$0xff]
    %v2747 = vld [vmem:[#allocation3 + $0x600] sm:$0xff]
    %v2748 = vld [vmem:[#allocation3 + $0x608] sm:$0xff]
    %v2749 = vld [vmem:[#allocation3 + $0x610] sm:$0xff]
    %v2750 = vld [vmem:[#allocation3 + $0x618] sm:$0xff]
    %v2751 = vld [vmem:[#allocation3 + $0x620] sm:$0xff]
    %v2752 = vld [vmem:[#allocation3 + $0x628] sm:$0xff]
    %v2753 = vld [vmem:[#allocation3 + $0x630] sm:$0xff]
    %v2754 = vld [vmem:[#allocation3 + $0x638] sm:$0xff]
    %v2755 = vld [vmem:[#allocation3 + $0x640] sm:$0xff]
    %v2756 = vld [vmem:[#allocation3 + $0x648] sm:$0xff]
    %v2757 = vld [vmem:[#allocation3 + $0x650] sm:$0xff]
    %v2758 = vld [vmem:[#allocation3 + $0x658] sm:$0xff]
    %v2759 = vld [vmem:[#allocation3 + $0x660] sm:$0xff]
    %v2760 = vld [vmem:[#allocation3 + $0x668] sm:$0xff]
    %v2761 = vld [vmem:[#allocation3 + $0x670] sm:$0xff]
    %v2762 = vld [vmem:[#allocation3 + $0x678] sm:$0xff]
    %v2763 = vld [vmem:[#allocation3 + $0x680] sm:$0xff]
    %v2764 = vld [vmem:[#allocation3 + $0x688] sm:$0xff]
    %v2765 = vld [vmem:[#allocation3 + $0x690] sm:$0xff]
    %v2766 = vld [vmem:[#allocation3 + $0x698] sm:$0xff]
    %v2767 = vld [vmem:[#allocation3 + $0x6a0] sm:$0xff]
    %v2768 = vld [vmem:[#allocation3 + $0x6a8] sm:$0xff]
    %v2769 = vld [vmem:[#allocation3 + $0x6b0] sm:$0xff]
    %v2770 = vld [vmem:[#allocation3 + $0x6b8] sm:$0xff]
    %v2771 = vld [vmem:[#allocation3 + $0x6c0] sm:$0xff]
    %v2772 = vld [vmem:[#allocation3 + $0x6c8] sm:$0xff]
    %v2773 = vld [vmem:[#allocation3 + $0x6d0] sm:$0xff]
    %v2774 = vld [vmem:[#allocation3 + $0x6d8] sm:$0xff]
    %v2775 = vld [vmem:[#allocation3 + $0x6e0] sm:$0xff]
    %v2776 = vld [vmem:[#allocation3 + $0x6e8] sm:$0xff]
    %v2777 = vld [vmem:[#allocation3 + $0x6f0] sm:$0xff]
    %v2778 = vld [vmem:[#allocation3 + $0x6f8] sm:$0xff]
    %v2779 = vld [vmem:[#allocation3 + $0x700] sm:$0xff]
    %v2780 = vld [vmem:[#allocation3 + $0x708] sm:$0xff]
    %v2781 = vld [vmem:[#allocation3 + $0x710] sm:$0xff]
    %v2782 = vld [vmem:[#allocation3 + $0x718] sm:$0xff]
    %v2783 = vld [vmem:[#allocation3 + $0x720] sm:$0xff]
    %v2784 = vld [vmem:[#allocation3 + $0x728] sm:$0xff]
    %v2785 = vld [vmem:[#allocation3 + $0x730] sm:$0xff]
    %v2786 = vld [vmem:[#allocation3 + $0x738] sm:$0xff]
    %v2787 = vld [vmem:[#allocation3 + $0x740] sm:$0xff]
    %v2788 = vld [vmem:[#allocation3 + $0x748] sm:$0xff]
    %v2789 = vld [vmem:[#allocation3 + $0x750] sm:$0xff]
    %v2790 = vld [vmem:[#allocation3 + $0x758] sm:$0xff]
    %v2791 = vld [vmem:[#allocation3 + $0x760] sm:$0xff]
    %v2792 = vld [vmem:[#allocation3 + $0x768] sm:$0xff]
    %v2793 = vld [vmem:[#allocation3 + $0x770] sm:$0xff]
    %v2794 = vld [vmem:[#allocation3 + $0x778] sm:$0xff]
    %v2795 = vld [vmem:[#allocation3 + $0x780] sm:$0xff]
    %v2796 = vld [vmem:[#allocation3 + $0x788] sm:$0xff]
    %v2797 = vld [vmem:[#allocation3 + $0x790] sm:$0xff]
    %v2798 = vld [vmem:[#allocation3 + $0x798] sm:$0xff]
    %v2799 = vld [vmem:[#allocation3 + $0x7a0] sm:$0xff]
    %v2800 = vld [vmem:[#allocation3 + $0x7a8] sm:$0xff]
    %v2801 = vld [vmem:[#allocation3 + $0x7b0] sm:$0xff]
    %v2802 = vld [vmem:[#allocation3 + $0x7b8] sm:$0xff]
    %v2803 = vld [vmem:[#allocation3 + $0x7c0] sm:$0xff]
    %v2804 = vld [vmem:[#allocation3 + $0x7c8] sm:$0xff]
    %v2805 = vld [vmem:[#allocation3 + $0x7d0] sm:$0xff]
    %v2806 = vld [vmem:[#allocation3 + $0x7d8] sm:$0xff]
    %v2807 = vld [vmem:[#allocation3 + $0x7e0] sm:$0xff]
    %v2808 = vld [vmem:[#allocation3 + $0x7e8] sm:$0xff]
    %v2809 = vld [vmem:[#allocation3 + $0x7f0] sm:$0xff]
    %v2810 = vld [vmem:[#allocation3 + $0x7f8] sm:$0xff]
    %v2811 = vld [vmem:[#allocation3 + $0x800] sm:$0xff]
    %v2812 = vld [vmem:[#allocation3 + $0x808] sm:$0xff]
    %v2813 = vld [vmem:[#allocation3 + $0x810] sm:$0xff]
    %v2814 = vld [vmem:[#allocation3 + $0x818] sm:$0xff]
    %v2815 = vld [vmem:[#allocation3 + $0x820] sm:$0xff]
    %v2816 = vld [vmem:[#allocation3 + $0x828] sm:$0xff]
    %v2817 = vld [vmem:[#allocation3 + $0x830] sm:$0xff]
    %v2818 = vld [vmem:[#allocation3 + $0x838] sm:$0xff]
    %v2819 = vld [vmem:[#allocation3 + $0x840] sm:$0xff]
    %v2820 = vld [vmem:[#allocation3 + $0x848] sm:$0xff]
    %v2821 = vld [vmem:[#allocation3 + $0x850] sm:$0xff]
    %v2822 = vld [vmem:[#allocation3 + $0x858] sm:$0xff]
    %v2823 = vld [vmem:[#allocation3 + $0x860] sm:$0xff]
    %v2824 = vld [vmem:[#allocation3 + $0x868] sm:$0xff]
    %v2825 = vld [vmem:[#allocation3 + $0x870] sm:$0xff]
    %v2826 = vld [vmem:[#allocation3 + $0x878] sm:$0xff]
    %v2827 = vld [vmem:[#allocation3 + $0x880] sm:$0xff]
    %v2828 = vld [vmem:[#allocation3 + $0x888] sm:$0xff]
    %v2829 = vld [vmem:[#allocation3 + $0x890] sm:$0xff]
    %v2830 = vld [vmem:[#allocation3 + $0x898] sm:$0xff]
    %v2831 = vld [vmem:[#allocation3 + $0x8a0] sm:$0xff]
    %v2832 = vld [vmem:[#allocation3 + $0x8a8] sm:$0xff]
    %v2833 = vld [vmem:[#allocation3 + $0x8b0] sm:$0xff]
    %v2834 = vld [vmem:[#allocation3 + $0x8b8] sm:$0xff]
    %v2835 = vld [vmem:[#allocation3 + $0x8c0] sm:$0xff]
    %v2836 = vld [vmem:[#allocation3 + $0x8c8] sm:$0xff]
    %v2837 = vld [vmem:[#allocation3 + $0x8d0] sm:$0xff]
    %v2838 = vld [vmem:[#allocation3 + $0x8d8] sm:$0xff]
    %v2839 = vld [vmem:[#allocation3 + $0x8e0] sm:$0xff]
    %v2840 = vld [vmem:[#allocation3 + $0x8e8] sm:$0xff]
    %v2841 = vld [vmem:[#allocation3 + $0x8f0] sm:$0xff]
    %v2842 = vld [vmem:[#allocation3 + $0x8f8] sm:$0xff]
    %v2843 = vld [vmem:[#allocation3 + $0x900] sm:$0xff]
    %v2844 = vld [vmem:[#allocation3 + $0x908] sm:$0xff]
    %v2845 = vld [vmem:[#allocation3 + $0x910] sm:$0xff]
    %v2846 = vld [vmem:[#allocation3 + $0x918] sm:$0xff]
    %v2847 = vld [vmem:[#allocation3 + $0x920] sm:$0xff]
    %v2848 = vld [vmem:[#allocation3 + $0x928] sm:$0xff]
    %v2849 = vld [vmem:[#allocation3 + $0x930] sm:$0xff]
    %v2850 = vld [vmem:[#allocation3 + $0x938] sm:$0xff]
    %v2851 = vld [vmem:[#allocation3 + $0x940] sm:$0xff]
    %v2852 = vld [vmem:[#allocation3 + $0x948] sm:$0xff]
    %v2853 = vld [vmem:[#allocation3 + $0x950] sm:$0xff]
    %v2854 = vld [vmem:[#allocation3 + $0x958] sm:$0xff]
    %v2855 = vld [vmem:[#allocation3 + $0x960] sm:$0xff]
    %v2856 = vld [vmem:[#allocation3 + $0x968] sm:$0xff]
    %v2857 = vld [vmem:[#allocation3 + $0x970] sm:$0xff]
    %v2858 = vld [vmem:[#allocation3 + $0x978] sm:$0xff]
    %v2859 = vld [vmem:[#allocation3 + $0x980] sm:$0xff]
    %v2860 = vld [vmem:[#allocation3 + $0x988] sm:$0xff]
    %v2861 = vld [vmem:[#allocation3 + $0x990] sm:$0xff]
    %v2862 = vld [vmem:[#allocation3 + $0x998] sm:$0xff]
    %v2863 = vld [vmem:[#allocation3 + $0x9a0] sm:$0xff]
    %v2864 = vld [vmem:[#allocation3 + $0x9a8] sm:$0xff]
    %v2865 = vld [vmem:[#allocation3 + $0x9b0] sm:$0xff]
    %v2866 = vld [vmem:[#allocation3 + $0x9b8] sm:$0xff]
    %v2867 = vld [vmem:[#allocation3 + $0x9c0] sm:$0xff]
    %v2868 = vld [vmem:[#allocation3 + $0x9c8] sm:$0xff]
    %v2869 = vld [vmem:[#allocation3 + $0x9d0] sm:$0xff]
    %v2870 = vld [vmem:[#allocation3 + $0x9d8] sm:$0xff]
    %v2871 = vld [vmem:[#allocation3 + $0x9e0] sm:$0xff]
    %v2872 = vld [vmem:[#allocation3 + $0x9e8] sm:$0xff]
    %v2873 = vld [vmem:[#allocation3 + $0x9f0] sm:$0xff]
    %v2874 = vld [vmem:[#allocation3 + $0x9f8] sm:$0xff]
    %v2875 = vld [vmem:[#allocation3 + $0xa00] sm:$0xff]
    %v2876 = vld [vmem:[#allocation3 + $0xa08] sm:$0xff]
    %v2877 = vld [vmem:[#allocation3 + $0xa10] sm:$0xff]
    %v2878 = vld [vmem:[#allocation3 + $0xa18] sm:$0xff]
    %v2879 = vld [vmem:[#allocation3 + $0xa20] sm:$0xff]
    %v2880 = vld [vmem:[#allocation3 + $0xa28] sm:$0xff]
    %v2881 = vld [vmem:[#allocation3 + $0xa30] sm:$0xff]
    %v2882 = vld [vmem:[#allocation3 + $0xa38] sm:$0xff]
    %v2883 = vld [vmem:[#allocation3 + $0xa40] sm:$0xff]
    %v2884 = vld [vmem:[#allocation3 + $0xa48] sm:$0xff]
    %v2885 = vld [vmem:[#allocation3 + $0xa50] sm:$0xff]
    %v2886 = vld [vmem:[#allocation3 + $0xa58] sm:$0xff]
    %v2887 = vld [vmem:[#allocation3 + $0xa60] sm:$0xff]
    %v2888 = vld [vmem:[#allocation3 + $0xa68] sm:$0xff]
    %v2889 = vld [vmem:[#allocation3 + $0xa70] sm:$0xff]
    %v2890 = vld [vmem:[#allocation3 + $0xa78] sm:$0xff]
    %v2891 = vld [vmem:[#allocation3 + $0xa80] sm:$0xff]
    %v2892 = vld [vmem:[#allocation3 + $0xa88] sm:$0xff]
    %v2893 = vld [vmem:[#allocation3 + $0xa90] sm:$0xff]
    %v2894 = vld [vmem:[#allocation3 + $0xa98] sm:$0xff]
    %v2895 = vld [vmem:[#allocation3 + $0xaa0] sm:$0xff]
    %v2896 = vld [vmem:[#allocation3 + $0xaa8] sm:$0xff]
    %v2897 = vld [vmem:[#allocation3 + $0xab0] sm:$0xff]
    %v2898 = vld [vmem:[#allocation3 + $0xab8] sm:$0xff]
    %v2899 = vld [vmem:[#allocation3 + $0xac0] sm:$0xff]
    %v2900 = vld [vmem:[#allocation3 + $0xac8] sm:$0xff]
    %v2901 = vld [vmem:[#allocation3 + $0xad0] sm:$0xff]
    %v2902 = vld [vmem:[#allocation3 + $0xad8] sm:$0xff]
    %v2903 = vld [vmem:[#allocation3 + $0xae0] sm:$0xff]
    %v2904 = vld [vmem:[#allocation3 + $0xae8] sm:$0xff]
    %v2905 = vld [vmem:[#allocation3 + $0xaf0] sm:$0xff]
    %v2906 = vld [vmem:[#allocation3 + $0xaf8] sm:$0xff]
    %v2907 = vld [vmem:[#allocation3 + $0xb00] sm:$0xff]
    %v2908 = vld [vmem:[#allocation3 + $0xb08] sm:$0xff]
    %v2909 = vld [vmem:[#allocation3 + $0xb10] sm:$0xff]
    %v2910 = vld [vmem:[#allocation3 + $0xb18] sm:$0xff]
    %v2911 = vld [vmem:[#allocation3 + $0xb20] sm:$0xff]
    %v2912 = vld [vmem:[#allocation3 + $0xb28] sm:$0xff]
    %v2913 = vld [vmem:[#allocation3 + $0xb30] sm:$0xff]
    %v2914 = vld [vmem:[#allocation3 + $0xb38] sm:$0xff]
    %v2915 = vld [vmem:[#allocation3 + $0xb40] sm:$0xff]
    %v2916 = vld [vmem:[#allocation3 + $0xb48] sm:$0xff]
    %v2917 = vld [vmem:[#allocation3 + $0xb50] sm:$0xff]
    %v2918 = vld [vmem:[#allocation3 + $0xb58] sm:$0xff]
    %v2919 = vld [vmem:[#allocation3 + $0xb60] sm:$0xff]
    %v2920 = vld [vmem:[#allocation3 + $0xb68] sm:$0xff]
    %v2921 = vld [vmem:[#allocation3 + $0xb70] sm:$0xff]
    %v2922 = vld [vmem:[#allocation3 + $0xb78] sm:$0xff]
    %v2923 = vld [vmem:[#allocation3 + $0xb80] sm:$0xff]
    %v2924 = vld [vmem:[#allocation3 + $0xb88] sm:$0xff]
    %v2925 = vld [vmem:[#allocation3 + $0xb90] sm:$0xff]
    %v2926 = vld [vmem:[#allocation3 + $0xb98] sm:$0xff]
    %v2927 = vld [vmem:[#allocation3 + $0xba0] sm:$0xff]
    %v2928 = vld [vmem:[#allocation3 + $0xba8] sm:$0xff]
    %v2929 = vld [vmem:[#allocation3 + $0xbb0] sm:$0xff]
    %v2930 = vld [vmem:[#allocation3 + $0xbb8] sm:$0xff]
    %v2931 = vld [vmem:[#allocation3 + $0xbc0] sm:$0xff]
    %v2932 = vld [vmem:[#allocation3 + $0xbc8] sm:$0xff]
    %v2933 = vld [vmem:[#allocation3 + $0xbd0] sm:$0xff]
    %v2934 = vld [vmem:[#allocation3 + $0xbd8] sm:$0xff]
    %v2935 = vld [vmem:[#allocation3 + $0xbe0] sm:$0xff]
    %v2936 = vld [vmem:[#allocation3 + $0xbe8] sm:$0xff]
    %v2937 = vld [vmem:[#allocation3 + $0xbf0] sm:$0xff]
    %v2938 = vld [vmem:[#allocation3 + $0xbf8] sm:$0xff]
    %v2939 = vld [vmem:[#allocation3 + $0xc00] sm:$0xff]
    %v2940 = vld [vmem:[#allocation3 + $0xc08] sm:$0xff]
    %v2941 = vld [vmem:[#allocation3 + $0xc10] sm:$0xff]
    %v2942 = vld [vmem:[#allocation3 + $0xc18] sm:$0xff]
    %v2943 = vld [vmem:[#allocation3 + $0xc20] sm:$0xff]
    %v2944 = vld [vmem:[#allocation3 + $0xc28] sm:$0xff]
    %v2945 = vld [vmem:[#allocation3 + $0xc30] sm:$0xff]
    %v2946 = vld [vmem:[#allocation3 + $0xc38] sm:$0xff]
    %v2947 = vld [vmem:[#allocation3 + $0xc40] sm:$0xff]
    %v2948 = vld [vmem:[#allocation3 + $0xc48] sm:$0xff]
    %v2949 = vld [vmem:[#allocation3 + $0xc50] sm:$0xff]
    %v2950 = vld [vmem:[#allocation3 + $0xc58] sm:$0xff]
    %v2951 = vld [vmem:[#allocation3 + $0xc60] sm:$0xff]
    %v2952 = vld [vmem:[#allocation3 + $0xc68] sm:$0xff]
    %v2953 = vld [vmem:[#allocation3 + $0xc70] sm:$0xff]
    %v2954 = vld [vmem:[#allocation3 + $0xc78] sm:$0xff]
    %v2955 = vld [vmem:[#allocation3 + $0xc80] sm:$0xff]
    %v2956 = vld [vmem:[#allocation3 + $0xc88] sm:$0xff]
    %v2957 = vld [vmem:[#allocation3 + $0xc90] sm:$0xff]
    %v2958 = vld [vmem:[#allocation3 + $0xc98] sm:$0xff]
    %v2959 = vld [vmem:[#allocation3 + $0xca0] sm:$0xff]
    %v2960 = vld [vmem:[#allocation3 + $0xca8] sm:$0xff]
    %v2961 = vld [vmem:[#allocation3 + $0xcb0] sm:$0xff]
    %v2962 = vld [vmem:[#allocation3 + $0xcb8] sm:$0xff]
    %v2963 = vld [vmem:[#allocation3 + $0xcc0] sm:$0xff]
    %v2964 = vld [vmem:[#allocation3 + $0xcc8] sm:$0xff]
    %v2965 = vld [vmem:[#allocation3 + $0xcd0] sm:$0xff]
    %v2966 = vld [vmem:[#allocation3 + $0xcd8] sm:$0xff]
    %v2967 = vld [vmem:[#allocation3 + $0xce0] sm:$0xff]
    %v2968 = vld [vmem:[#allocation3 + $0xce8] sm:$0xff]
    %v2969 = vld [vmem:[#allocation3 + $0xcf0] sm:$0xff]
    %v2970 = vld [vmem:[#allocation3 + $0xcf8] sm:$0xff]
    %v2971 = vld [vmem:[#allocation3 + $0xd00] sm:$0xff]
    %v2972 = vld [vmem:[#allocation3 + $0xd08] sm:$0xff]
    %v2973 = vld [vmem:[#allocation3 + $0xd10] sm:$0xff]
    %v2974 = vld [vmem:[#allocation3 + $0xd18] sm:$0xff]
    %v2975 = vld [vmem:[#allocation3 + $0xd20] sm:$0xff]
    %v2976 = vld [vmem:[#allocation3 + $0xd28] sm:$0xff]
    %v2977 = vld [vmem:[#allocation3 + $0xd30] sm:$0xff]
    %v2978 = vld [vmem:[#allocation3 + $0xd38] sm:$0xff]
    %v2979 = vld [vmem:[#allocation3 + $0xd40] sm:$0xff]
    %v2980 = vld [vmem:[#allocation3 + $0xd48] sm:$0xff]
    %v2981 = vld [vmem:[#allocation3 + $0xd50] sm:$0xff]
    %v2982 = vld [vmem:[#allocation3 + $0xd58] sm:$0xff]
    %v2983 = vld [vmem:[#allocation3 + $0xd60] sm:$0xff]
    %v2984 = vld [vmem:[#allocation3 + $0xd68] sm:$0xff]
    %v2985 = vld [vmem:[#allocation3 + $0xd70] sm:$0xff]
    %v2986 = vld [vmem:[#allocation3 + $0xd78] sm:$0xff]
    %v2987 = vld [vmem:[#allocation3 + $0xd80] sm:$0xff]
    %v2988 = vld [vmem:[#allocation3 + $0xd88] sm:$0xff]
    %v2989 = vld [vmem:[#allocation3 + $0xd90] sm:$0xff]
    %v2990 = vld [vmem:[#allocation3 + $0xd98] sm:$0xff]
    %v2991 = vld [vmem:[#allocation3 + $0xda0] sm:$0xff]
    %v2992 = vld [vmem:[#allocation3 + $0xda8] sm:$0xff]
    %v2993 = vld [vmem:[#allocation3 + $0xdb0] sm:$0xff]
    %v2994 = vld [vmem:[#allocation3 + $0xdb8] sm:$0xff]
    %v2995 = vld [vmem:[#allocation3 + $0xdc0] sm:$0xff]
    %v2996 = vld [vmem:[#allocation3 + $0xdc8] sm:$0xff]
    %v2997 = vld [vmem:[#allocation3 + $0xdd0] sm:$0xff]
    %v2998 = vld [vmem:[#allocation3 + $0xdd8] sm:$0xff]
    %v2999 = vld [vmem:[#allocation3 + $0xde0] sm:$0xff]
    %v3000 = vld [vmem:[#allocation3 + $0xde8] sm:$0xff]
    %v3001 = vld [vmem:[#allocation3 + $0xdf0] sm:$0xff]
    %v3002 = vld [vmem:[#allocation3 + $0xdf8] sm:$0xff]
    %v3003 = vld [vmem:[#allocation3 + $0xe00] sm:$0xff]
    %v3004 = vld [vmem:[#allocation3 + $0xe08] sm:$0xff]
    %v3005 = vld [vmem:[#allocation3 + $0xe10] sm:$0xff]
    %v3006 = vld [vmem:[#allocation3 + $0xe18] sm:$0xff]
    %v3007 = vld [vmem:[#allocation3 + $0xe20] sm:$0xff]
    %v3008 = vld [vmem:[#allocation3 + $0xe28] sm:$0xff]
    %v3009 = vld [vmem:[#allocation3 + $0xe30] sm:$0xff]
    %v3010 = vld [vmem:[#allocation3 + $0xe38] sm:$0xff]
    %v3011 = vld [vmem:[#allocation3 + $0xe40] sm:$0xff]
    %v3012 = vld [vmem:[#allocation3 + $0xe48] sm:$0xff]
    %v3013 = vld [vmem:[#allocation3 + $0xe50] sm:$0xff]
    %v3014 = vld [vmem:[#allocation3 + $0xe58] sm:$0xff]
    %v3015 = vld [vmem:[#allocation3 + $0xe60] sm:$0xff]
    %v3016 = vld [vmem:[#allocation3 + $0xe68] sm:$0xff]
    %v3017 = vld [vmem:[#allocation3 + $0xe70] sm:$0xff]
    %v3018 = vld [vmem:[#allocation3 + $0xe78] sm:$0xff]
    %v3019 = vld [vmem:[#allocation3 + $0xe80] sm:$0xff]
    %v3020 = vld [vmem:[#allocation3 + $0xe88] sm:$0xff]
    %v3021 = vld [vmem:[#allocation3 + $0xe90] sm:$0xff]
    %v3022 = vld [vmem:[#allocation3 + $0xe98] sm:$0xff]
    %v3023 = vld [vmem:[#allocation3 + $0xea0] sm:$0xff]
    %v3024 = vld [vmem:[#allocation3 + $0xea8] sm:$0xff]
    %v3025 = vld [vmem:[#allocation3 + $0xeb0] sm:$0xff]
    %v3026 = vld [vmem:[#allocation3 + $0xeb8] sm:$0xff]
    %v3027 = vld [vmem:[#allocation3 + $0xec0] sm:$0xff]
    %v3028 = vld [vmem:[#allocation3 + $0xec8] sm:$0xff]
    %v3029 = vld [vmem:[#allocation3 + $0xed0] sm:$0xff]
    %v3030 = vld [vmem:[#allocation3 + $0xed8] sm:$0xff]
    %v3031 = vld [vmem:[#allocation3 + $0xee0] sm:$0xff]
    %v3032 = vld [vmem:[#allocation3 + $0xee8] sm:$0xff]
    %v3033 = vld [vmem:[#allocation3 + $0xef0] sm:$0xff]
    %v3034 = vld [vmem:[#allocation3 + $0xef8] sm:$0xff]
    %v3035 = vld [vmem:[#allocation3 + $0xf00] sm:$0xff]
    %v3036 = vld [vmem:[#allocation3 + $0xf08] sm:$0xff]
    %v3037 = vld [vmem:[#allocation3 + $0xf10] sm:$0xff]
    %v3038 = vld [vmem:[#allocation3 + $0xf18] sm:$0xff]
    %v3039 = vld [vmem:[#allocation3 + $0xf20] sm:$0xff]
    %v3040 = vld [vmem:[#allocation3 + $0xf28] sm:$0xff]
    %v3041 = vld [vmem:[#allocation3 + $0xf30] sm:$0xff]
    %v3042 = vld [vmem:[#allocation3 + $0xf38] sm:$0xff]
    %v3043 = vld [vmem:[#allocation3 + $0xf40] sm:$0xff]
    %v3044 = vld [vmem:[#allocation3 + $0xf48] sm:$0xff]
    %v3045 = vld [vmem:[#allocation3 + $0xf50] sm:$0xff]
    %v3046 = vld [vmem:[#allocation3 + $0xf58] sm:$0xff]
    %v3047 = vld [vmem:[#allocation3 + $0xf60] sm:$0xff]
    %v3048 = vld [vmem:[#allocation3 + $0xf68] sm:$0xff]
    %v3049 = vld [vmem:[#allocation3 + $0xf70] sm:$0xff]
    %v3050 = vld [vmem:[#allocation3 + $0xf78] sm:$0xff]
    %v3051 = vld [vmem:[#allocation3 + $0xf80] sm:$0xff]
    %v3052 = vld [vmem:[#allocation3 + $0xf88] sm:$0xff]
    %v3053 = vld [vmem:[#allocation3 + $0xf90] sm:$0xff]
    %v3054 = vld [vmem:[#allocation3 + $0xf98] sm:$0xff]
    %v3055 = vld [vmem:[#allocation3 + $0xfa0] sm:$0xff]
    %v3056 = vld [vmem:[#allocation3 + $0xfa8] sm:$0xff]
    %v3057 = vld [vmem:[#allocation3 + $0xfb0] sm:$0xff]
    %v3058 = vld [vmem:[#allocation3 + $0xfb8] sm:$0xff]
    %v3059 = vld [vmem:[#allocation3 + $0xfc0] sm:$0xff]
    %v3060 = vld [vmem:[#allocation3 + $0xfc8] sm:$0xff]
    %v3061 = vld [vmem:[#allocation3 + $0xfd0] sm:$0xff]
    %v3062 = vld [vmem:[#allocation3 + $0xfd8] sm:$0xff]
    %v3063 = vld [vmem:[#allocation3 + $0xfe0] sm:$0xff]
    %v3064 = vld [vmem:[#allocation3 + $0xfe8] sm:$0xff]
    %v3065 = vld [vmem:[#allocation3 + $0xff0] sm:$0xff]
    %v3066 = vld [vmem:[#allocation3 + $0xff8] sm:$0xff]
    %v3067 = vld [vmem:[#allocation15] sm:$0x3]
    %v3069 = vperm.slane %v3067, 0
    %v3070 = vperm.slane %v3067, 1
    %3077 = vst [vmem:[#allocation1] ss:$4 sm:$0xff] %v2551
    %s3078 = scalar_lea.vmem [#allocation1], 32
    %3079 = vst [vmem:[%s3078] ss:$4 sm:$0xff] %v2552
    %v3080 = vld.sshfl [vmem:[#allocation1] sm:$0xff pattern:$0x73625140]
    %v3081 = vld.sshfl [vmem:[#allocation1 + $0x8] sm:$0xff pattern:$0x73625140]
    %v3082 = vld.sshfl [vmem:[#allocation1 + $0x10] sm:$0xff pattern:$0x73625140]
    %v3083 = vld.sshfl [vmem:[#allocation1 + $0x18] sm:$0xff pattern:$0x73625140]
    %v3084 = vld.sshfl [vmem:[#allocation1 + $0x20] sm:$0xff pattern:$0x73625140]
    %v3085 = vld.sshfl [vmem:[#allocation1 + $0x28] sm:$0xff pattern:$0x73625140]
    %v3086 = vld.sshfl [vmem:[#allocation1 + $0x30] sm:$0xff pattern:$0x73625140]
    %v3087 = vld.sshfl [vmem:[#allocation1 + $0x38] sm:$0xff pattern:$0x73625140]
    %3088 = vst [vmem:[#allocation1] ss:$4 sm:$0xff] %v2553
    %3089 = vst [vmem:[%s3078] ss:$4 sm:$0xff] %v2554
    %v3090 = vld.sshfl [vmem:[#allocation1] sm:$0xff pattern:$0x73625140]
    %v3091 = vld.sshfl [vmem:[#allocation1 + $0x8] sm:$0xff pattern:$0x73625140]
    %v3092 = vld.sshfl [vmem:[#allocation1 + $0x10] sm:$0xff pattern:$0x73625140]
    %v3093 = vld.sshfl [vmem:[#allocation1 + $0x18] sm:$0xff pattern:$0x73625140]
    %v3094 = vld.sshfl [vmem:[#allocation1 + $0x20] sm:$0xff pattern:$0x73625140]
    %v3095 = vld.sshfl [vmem:[#allocation1 + $0x28] sm:$0xff pattern:$0x73625140]
    %v3096 = vld.sshfl [vmem:[#allocation1 + $0x30] sm:$0xff pattern:$0x73625140]
    %v3097 = vld.sshfl [vmem:[#allocation1 + $0x38] sm:$0xff pattern:$0x73625140]
    %3114 = vmatpush.msra.mxu0 %v2585
    %3115 = vmatpush.msra.mxu0 %v2583
    %3116 = vmatpush.msra.mxu0 %v2581
    %3117 = vmatpush.msra.mxu0 %v2579
    %3118 = vmatpush.msra.mxu0 %v2577
    %3119 = vmatpush.msra.mxu0 %v2575
    %3120 = vmatpush.msra.mxu0 %v2573
    %3121 = vmatpush.msra.mxu0 %v2571
    %3122 = vmatpush.msra.mxu0 %v2569
    %3123 = vmatpush.msra.mxu0 %v2567
    %3124 = vmatpush.msra.mxu0 %v2565
    %3125 = vmatpush.msra.mxu0 %v2563
    %3126 = vmatpush.msra.mxu0 %v2561
    %3127 = vmatpush.msra.mxu0 %v2559
    %3128 = vmatpush.msra.mxu0 %v2557
    %3129 = vmatpush.msra.mxu0 %v2555
    %3130 = vmatmul.f32.gmra.mxu0 %v3080
    %v3131 = vpop.f32.mrf.mxu0
    %v3132 = vadd.f32 %v3069, %v3131
    %3133 = vdwg.mxu0
    %3134 = vmatpush.msra.mxu0 %v2617
    %3135 = vmatpush.msra.mxu0 %v2615
    %3136 = vmatpush.msra.mxu0 %v2613
    %3137 = vmatpush.msra.mxu0 %v2611
    %3138 = vmatpush.msra.mxu0 %v2609
    %3139 = vmatpush.msra.mxu0 %v2607
    %3140 = vmatpush.msra.mxu0 %v2605
    %3141 = vmatpush.msra.mxu0 %v2603
    %3142 = vmatpush.msra.mxu0 %v2601
    %3143 = vmatpush.msra.mxu0 %v2599
    %3144 = vmatpush.msra.mxu0 %v2597
    %3145 = vmatpush.msra.mxu0 %v2595
    %3146 = vmatpush.msra.mxu0 %v2593
    %3147 = vmatpush.msra.mxu0 %v2591
    %3148 = vmatpush.msra.mxu0 %v2589
    %3149 = vmatpush.msra.mxu0 %v2587
    %3150 = vmatmul.f32.gmra.mxu0 %v3081
    %v3151 = vpop.f32.mrf.mxu0
    %v3152 = vadd.f32 %v3132, %v3151
    %3153 = vdwg.mxu0
    %3154 = vmatpush.msra.mxu0 %v2649
    %3155 = vmatpush.msra.mxu0 %v2647
    %3156 = vmatpush.msra.mxu0 %v2645
    %3157 = vmatpush.msra.mxu0 %v2643
    %3158 = vmatpush.msra.mxu0 %v2641
    %3159 = vmatpush.msra.mxu0 %v2639
    %3160 = vmatpush.msra.mxu0 %v2637
    %3161 = vmatpush.msra.mxu0 %v2635
    %3162 = vmatpush.msra.mxu0 %v2633
    %3163 = vmatpush.msra.mxu0 %v2631
    %3164 = vmatpush.msra.mxu0 %v2629
    %3165 = vmatpush.msra.mxu0 %v2627
    %3166 = vmatpush.msra.mxu0 %v2625
    %3167 = vmatpush.msra.mxu0 %v2623
    %3168 = vmatpush.msra.mxu0 %v2621
    %3169 = vmatpush.msra.mxu0 %v2619
    %3170 = vmatmul.f32.gmra.mxu0 %v3082
    %v3171 = vpop.f32.mrf.mxu0
    %v3172 = vadd.f32 %v3152, %v3171
    %3173 = vdwg.mxu0
    %3174 = vmatpush.msra.mxu0 %v2681
    %3175 = vmatpush.msra.mxu0 %v2679
    %3176 = vmatpush.msra.mxu0 %v2677
    %3177 = vmatpush.msra.mxu0 %v2675
    %3178 = vmatpush.msra.mxu0 %v2673
    %3179 = vmatpush.msra.mxu0 %v2671
    %3180 = vmatpush.msra.mxu0 %v2669
    %3181 = vmatpush.msra.mxu0 %v2667
    %3182 = vmatpush.msra.mxu0 %v2665
    %3183 = vmatpush.msra.mxu0 %v2663
    %3184 = vmatpush.msra.mxu0 %v2661
    %3185 = vmatpush.msra.mxu0 %v2659
    %3186 = vmatpush.msra.mxu0 %v2657
    %3187 = vmatpush.msra.mxu0 %v2655
    %3188 = vmatpush.msra.mxu0 %v2653
    %3189 = vmatpush.msra.mxu0 %v2651
    %3190 = vmatmul.f32.gmra.mxu0 %v3083
    %v3191 = vpop.f32.mrf.mxu0
    %v3192 = vadd.f32 %v3172, %v3191
    %3193 = vdwg.mxu0
    %3194 = vmatpush.msra.mxu0 %v2713
    %3195 = vmatpush.msra.mxu0 %v2711
    %3196 = vmatpush.msra.mxu0 %v2709
    %3197 = vmatpush.msra.mxu0 %v2707
    %3198 = vmatpush.msra.mxu0 %v2705
    %3199 = vmatpush.msra.mxu0 %v2703
    %3200 = vmatpush.msra.mxu0 %v2701
    %3201 = vmatpush.msra.mxu0 %v2699
    %3202 = vmatpush.msra.mxu0 %v2697
    %3203 = vmatpush.msra.mxu0 %v2695
    %3204 = vmatpush.msra.mxu0 %v2693
    %3205 = vmatpush.msra.mxu0 %v2691
    %3206 = vmatpush.msra.mxu0 %v2689
    %3207 = vmatpush.msra.mxu0 %v2687
    %3208 = vmatpush.msra.mxu0 %v2685
    %3209 = vmatpush.msra.mxu0 %v2683
    %3210 = vmatmul.f32.gmra.mxu0 %v3084
    %v3211 = vpop.f32.mrf.mxu0
    %v3212 = vadd.f32 %v3192, %v3211
    %3213 = vdwg.mxu0
    %3214 = vmatpush.msra.mxu0 %v2745
    %3215 = vmatpush.msra.mxu0 %v2743
    %3216 = vmatpush.msra.mxu0 %v2741
    %3217 = vmatpush.msra.mxu0 %v2739
    %3218 = vmatpush.msra.mxu0 %v2737
    %3219 = vmatpush.msra.mxu0 %v2735
    %3220 = vmatpush.msra.mxu0 %v2733
    %3221 = vmatpush.msra.mxu0 %v2731
    %3222 = vmatpush.msra.mxu0 %v2729
    %3223 = vmatpush.msra.mxu0 %v2727
    %3224 = vmatpush.msra.mxu0 %v2725
    %3225 = vmatpush.msra.mxu0 %v2723
    %3226 = vmatpush.msra.mxu0 %v2721
    %3227 = vmatpush.msra.mxu0 %v2719
    %3228 = vmatpush.msra.mxu0 %v2717
    %3229 = vmatpush.msra.mxu0 %v2715
    %3230 = vmatmul.f32.gmra.mxu0 %v3085
    %v3231 = vpop.f32.mrf.mxu0
    %v3232 = vadd.f32 %v3212, %v3231
    %3233 = vdwg.mxu0
    %3234 = vmatpush.msra.mxu0 %v2777
    %3235 = vmatpush.msra.mxu0 %v2775
    %3236 = vmatpush.msra.mxu0 %v2773
    %3237 = vmatpush.msra.mxu0 %v2771
    %3238 = vmatpush.msra.mxu0 %v2769
    %3239 = vmatpush.msra.mxu0 %v2767
    %3240 = vmatpush.msra.mxu0 %v2765
    %3241 = vmatpush.msra.mxu0 %v2763
    %3242 = vmatpush.msra.mxu0 %v2761
    %3243 = vmatpush.msra.mxu0 %v2759
    %3244 = vmatpush.msra.mxu0 %v2757
    %3245 = vmatpush.msra.mxu0 %v2755
    %3246 = vmatpush.msra.mxu0 %v2753
    %3247 = vmatpush.msra.mxu0 %v2751
    %3248 = vmatpush.msra.mxu0 %v2749
    %3249 = vmatpush.msra.mxu0 %v2747
    %3250 = vmatmul.f32.gmra.mxu0 %v3086
    %v3251 = vpop.f32.mrf.mxu0
    %v3252 = vadd.f32 %v3232, %v3251
    %3253 = vdwg.mxu0
    %3254 = vmatpush.msra.mxu0 %v2809
    %3255 = vmatpush.msra.mxu0 %v2807
    %3256 = vmatpush.msra.mxu0 %v2805
    %3257 = vmatpush.msra.mxu0 %v2803
    %3258 = vmatpush.msra.mxu0 %v2801
    %3259 = vmatpush.msra.mxu0 %v2799
    %3260 = vmatpush.msra.mxu0 %v2797
    %3261 = vmatpush.msra.mxu0 %v2795
    %3262 = vmatpush.msra.mxu0 %v2793
    %3263 = vmatpush.msra.mxu0 %v2791
    %3264 = vmatpush.msra.mxu0 %v2789
    %3265 = vmatpush.msra.mxu0 %v2787
    %3266 = vmatpush.msra.mxu0 %v2785
    %3267 = vmatpush.msra.mxu0 %v2783
    %3268 = vmatpush.msra.mxu0 %v2781
    %3269 = vmatpush.msra.mxu0 %v2779
    %3270 = vmatmul.f32.gmra.mxu0 %v3087
    %v3271 = vpop.f32.mrf.mxu0
    %v3272 = vadd.f32 %v3252, %v3271
    %3273 = vdwg.mxu0
    %3274 = vmatpush.msra.mxu0 %v2841
    %3275 = vmatpush.msra.mxu0 %v2839
    %3276 = vmatpush.msra.mxu0 %v2837
    %3277 = vmatpush.msra.mxu0 %v2835
    %3278 = vmatpush.msra.mxu0 %v2833
    %3279 = vmatpush.msra.mxu0 %v2831
    %3280 = vmatpush.msra.mxu0 %v2829
    %3281 = vmatpush.msra.mxu0 %v2827
    %3282 = vmatpush.msra.mxu0 %v2825
    %3283 = vmatpush.msra.mxu0 %v2823
    %3284 = vmatpush.msra.mxu0 %v2821
    %3285 = vmatpush.msra.mxu0 %v2819
    %3286 = vmatpush.msra.mxu0 %v2817
    %3287 = vmatpush.msra.mxu0 %v2815
    %3288 = vmatpush.msra.mxu0 %v2813
    %3289 = vmatpush.msra.mxu0 %v2811
    %3290 = vmatmul.f32.gmra.mxu0 %v3090
    %v3291 = vpop.f32.mrf.mxu0
    %v3292 = vadd.f32 %v3272, %v3291
    %3293 = vdwg.mxu0
    %3294 = vmatpush.msra.mxu0 %v2873
    %3295 = vmatpush.msra.mxu0 %v2871
    %3296 = vmatpush.msra.mxu0 %v2869
    %3297 = vmatpush.msra.mxu0 %v2867
    %3298 = vmatpush.msra.mxu0 %v2865
    %3299 = vmatpush.msra.mxu0 %v2863
    %3300 = vmatpush.msra.mxu0 %v2861
    %3301 = vmatpush.msra.mxu0 %v2859
    %3302 = vmatpush.msra.mxu0 %v2857
    %3303 = vmatpush.msra.mxu0 %v2855
    %3304 = vmatpush.msra.mxu0 %v2853
    %3305 = vmatpush.msra.mxu0 %v2851
    %3306 = vmatpush.msra.mxu0 %v2849
    %3307 = vmatpush.msra.mxu0 %v2847
    %3308 = vmatpush.msra.mxu0 %v2845
    %3309 = vmatpush.msra.mxu0 %v2843
    %3310 = vmatmul.f32.gmra.mxu0 %v3091
    %v3311 = vpop.f32.mrf.mxu0
    %v3312 = vadd.f32 %v3292, %v3311
    %3313 = vdwg.mxu0
    %3314 = vmatpush.msra.mxu0 %v2905
    %3315 = vmatpush.msra.mxu0 %v2903
    %3316 = vmatpush.msra.mxu0 %v2901
    %3317 = vmatpush.msra.mxu0 %v2899
    %3318 = vmatpush.msra.mxu0 %v2897
    %3319 = vmatpush.msra.mxu0 %v2895
    %3320 = vmatpush.msra.mxu0 %v2893
    %3321 = vmatpush.msra.mxu0 %v2891
    %3322 = vmatpush.msra.mxu0 %v2889
    %3323 = vmatpush.msra.mxu0 %v2887
    %3324 = vmatpush.msra.mxu0 %v2885
    %3325 = vmatpush.msra.mxu0 %v2883
    %3326 = vmatpush.msra.mxu0 %v2881
    %3327 = vmatpush.msra.mxu0 %v2879
    %3328 = vmatpush.msra.mxu0 %v2877
    %3329 = vmatpush.msra.mxu0 %v2875
    %3330 = vmatmul.f32.gmra.mxu0 %v3092
    %v3331 = vpop.f32.mrf.mxu0
    %v3332 = vadd.f32 %v3312, %v3331
    %3333 = vdwg.mxu0
    %3334 = vmatpush.msra.mxu0 %v2937
    %3335 = vmatpush.msra.mxu0 %v2935
    %3336 = vmatpush.msra.mxu0 %v2933
    %3337 = vmatpush.msra.mxu0 %v2931
    %3338 = vmatpush.msra.mxu0 %v2929
    %3339 = vmatpush.msra.mxu0 %v2927
    %3340 = vmatpush.msra.mxu0 %v2925
    %3341 = vmatpush.msra.mxu0 %v2923
    %3342 = vmatpush.msra.mxu0 %v2921
    %3343 = vmatpush.msra.mxu0 %v2919
    %3344 = vmatpush.msra.mxu0 %v2917
    %3345 = vmatpush.msra.mxu0 %v2915
    %3346 = vmatpush.msra.mxu0 %v2913
    %3347 = vmatpush.msra.mxu0 %v2911
    %3348 = vmatpush.msra.mxu0 %v2909
    %3349 = vmatpush.msra.mxu0 %v2907
    %3350 = vmatmul.f32.gmra.mxu0 %v3093
    %v3351 = vpop.f32.mrf.mxu0
    %v3352 = vadd.f32 %v3332, %v3351
    %3353 = vdwg.mxu0
    %3354 = vmatpush.msra.mxu0 %v2969
    %3355 = vmatpush.msra.mxu0 %v2967
    %3356 = vmatpush.msra.mxu0 %v2965
    %3357 = vmatpush.msra.mxu0 %v2963
    %3358 = vmatpush.msra.mxu0 %v2961
    %3359 = vmatpush.msra.mxu0 %v2959
    %3360 = vmatpush.msra.mxu0 %v2957
    %3361 = vmatpush.msra.mxu0 %v2955
    %3362 = vmatpush.msra.mxu0 %v2953
    %3363 = vmatpush.msra.mxu0 %v2951
    %3364 = vmatpush.msra.mxu0 %v2949
    %3365 = vmatpush.msra.mxu0 %v2947
    %3366 = vmatpush.msra.mxu0 %v2945
    %3367 = vmatpush.msra.mxu0 %v2943
    %3368 = vmatpush.msra.mxu0 %v2941
    %3369 = vmatpush.msra.mxu0 %v2939
    %3370 = vmatmul.f32.gmra.mxu0 %v3094
    %v3371 = vpop.f32.mrf.mxu0
    %v3372 = vadd.f32 %v3352, %v3371
    %3373 = vdwg.mxu0
    %3374 = vmatpush.msra.mxu0 %v3001
    %3375 = vmatpush.msra.mxu0 %v2999
    %3376 = vmatpush.msra.mxu0 %v2997
    %3377 = vmatpush.msra.mxu0 %v2995
    %3378 = vmatpush.msra.mxu0 %v2993
    %3379 = vmatpush.msra.mxu0 %v2991
    %3380 = vmatpush.msra.mxu0 %v2989
    %3381 = vmatpush.msra.mxu0 %v2987
    %3382 = vmatpush.msra.mxu0 %v2985
    %3383 = vmatpush.msra.mxu0 %v2983
    %3384 = vmatpush.msra.mxu0 %v2981
    %3385 = vmatpush.msra.mxu0 %v2979
    %3386 = vmatpush.msra.mxu0 %v2977
    %3387 = vmatpush.msra.mxu0 %v2975
    %3388 = vmatpush.msra.mxu0 %v2973
    %3389 = vmatpush.msra.mxu0 %v2971
    %3390 = vmatmul.f32.gmra.mxu0 %v3095
    %v3391 = vpop.f32.mrf.mxu0
    %v3392 = vadd.f32 %v3372, %v3391
    %3393 = vdwg.mxu0
    %3394 = vmatpush.msra.mxu0 %v3033
    %3395 = vmatpush.msra.mxu0 %v3031
    %3396 = vmatpush.msra.mxu0 %v3029
    %3397 = vmatpush.msra.mxu0 %v3027
    %3398 = vmatpush.msra.mxu0 %v3025
    %3399 = vmatpush.msra.mxu0 %v3023
    %3400 = vmatpush.msra.mxu0 %v3021
    %3401 = vmatpush.msra.mxu0 %v3019
    %3402 = vmatpush.msra.mxu0 %v3017
    %3403 = vmatpush.msra.mxu0 %v3015
    %3404 = vmatpush.msra.mxu0 %v3013
    %3405 = vmatpush.msra.mxu0 %v3011
    %3406 = vmatpush.msra.mxu0 %v3009
    %3407 = vmatpush.msra.mxu0 %v3007
    %3408 = vmatpush.msra.mxu0 %v3005
    %3409 = vmatpush.msra.mxu0 %v3003
    %3410 = vmatmul.f32.gmra.mxu0 %v3096
    %v3411 = vpop.f32.mrf.mxu0
    %v3412 = vadd.f32 %v3392, %v3411
    %3413 = vdwg.mxu0
    %3414 = vmatpush.msra.mxu0 %v3065
    %3415 = vmatpush.msra.mxu0 %v3063
    %3416 = vmatpush.msra.mxu0 %v3061
    %3417 = vmatpush.msra.mxu0 %v3059
    %3418 = vmatpush.msra.mxu0 %v3057
    %3419 = vmatpush.msra.mxu0 %v3055
    %3420 = vmatpush.msra.mxu0 %v3053
    %3421 = vmatpush.msra.mxu0 %v3051
    %3422 = vmatpush.msra.mxu0 %v3049
    %3423 = vmatpush.msra.mxu0 %v3047
    %3424 = vmatpush.msra.mxu0 %v3045
    %3425 = vmatpush.msra.mxu0 %v3043
    %3426 = vmatpush.msra.mxu0 %v3041
    %3427 = vmatpush.msra.mxu0 %v3039
    %3428 = vmatpush.msra.mxu0 %v3037
    %3429 = vmatpush.msra.mxu0 %v3035
    %3430 = vmatmul.f32.gmra.mxu0 %v3097
    %v3431 = vpop.f32.mrf.mxu0
    %v3432 = vadd.f32 %v3412, %v3431
    %3433 = vdwg.mxu0
    %3434 = vmatpush.msra.mxu0 %v2586
    %3435 = vmatpush.msra.mxu0 %v2584
    %3436 = vmatpush.msra.mxu0 %v2582
    %3437 = vmatpush.msra.mxu0 %v2580
    %3438 = vmatpush.msra.mxu0 %v2578
    %3439 = vmatpush.msra.mxu0 %v2576
    %3440 = vmatpush.msra.mxu0 %v2574
    %3441 = vmatpush.msra.mxu0 %v2572
    %3442 = vmatpush.msra.mxu0 %v2570
    %3443 = vmatpush.msra.mxu0 %v2568
    %3444 = vmatpush.msra.mxu0 %v2566
    %3445 = vmatpush.msra.mxu0 %v2564
    %3446 = vmatpush.msra.mxu0 %v2562
    %3447 = vmatpush.msra.mxu0 %v2560
    %3448 = vmatpush.msra.mxu0 %v2558
    %3449 = vmatpush.msra.mxu0 %v2556
    %3450 = vmatmul.f32.gmra.mxu0 %v3080
    %v3451 = vpop.f32.mrf.mxu0
    %v3452 = vadd.f32 %v3070, %v3451
    %3453 = vdwg.mxu0
    %3454 = vmatpush.msra.mxu0 %v2618
    %3455 = vmatpush.msra.mxu0 %v2616
    %3456 = vmatpush.msra.mxu0 %v2614
    %3457 = vmatpush.msra.mxu0 %v2612
    %3458 = vmatpush.msra.mxu0 %v2610
    %3459 = vmatpush.msra.mxu0 %v2608
    %3460 = vmatpush.msra.mxu0 %v2606
    %3461 = vmatpush.msra.mxu0 %v2604
    %3462 = vmatpush.msra.mxu0 %v2602
    %3463 = vmatpush.msra.mxu0 %v2600
    %3464 = vmatpush.msra.mxu0 %v2598
    %3465 = vmatpush.msra.mxu0 %v2596
    %3466 = vmatpush.msra.mxu0 %v2594
    %3467 = vmatpush.msra.mxu0 %v2592
    %3468 = vmatpush.msra.mxu0 %v2590
    %3469 = vmatpush.msra.mxu0 %v2588
    %3470 = vmatmul.f32.gmra.mxu0 %v3081
    %v3471 = vpop.f32.mrf.mxu0
    %v3472 = vadd.f32 %v3452, %v3471
    %3473 = vdwg.mxu0
    %3474 = vmatpush.msra.mxu0 %v2650
    %3475 = vmatpush.msra.mxu0 %v2648
    %3476 = vmatpush.msra.mxu0 %v2646
    %3477 = vmatpush.msra.mxu0 %v2644
    %3478 = vmatpush.msra.mxu0 %v2642
    %3479 = vmatpush.msra.mxu0 %v2640
    %3480 = vmatpush.msra.mxu0 %v2638
    %3481 = vmatpush.msra.mxu0 %v2636
    %3482 = vmatpush.msra.mxu0 %v2634
    %3483 = vmatpush.msra.mxu0 %v2632
    %3484 = vmatpush.msra.mxu0 %v2630
    %3485 = vmatpush.msra.mxu0 %v2628
    %3486 = vmatpush.msra.mxu0 %v2626
    %3487 = vmatpush.msra.mxu0 %v2624
    %3488 = vmatpush.msra.mxu0 %v2622
    %3489 = vmatpush.msra.mxu0 %v2620
    %3490 = vmatmul.f32.gmra.mxu0 %v3082
    %v3491 = vpop.f32.mrf.mxu0
    %v3492 = vadd.f32 %v3472, %v3491
    %3493 = vdwg.mxu0
    %3494 = vmatpush.msra.mxu0 %v2682
    %3495 = vmatpush.msra.mxu0 %v2680
    %3496 = vmatpush.msra.mxu0 %v2678
    %3497 = vmatpush.msra.mxu0 %v2676
    %3498 = vmatpush.msra.mxu0 %v2674
    %3499 = vmatpush.msra.mxu0 %v2672
    %3500 = vmatpush.msra.mxu0 %v2670
    %3501 = vmatpush.msra.mxu0 %v2668
    %3502 = vmatpush.msra.mxu0 %v2666
    %3503 = vmatpush.msra.mxu0 %v2664
    %3504 = vmatpush.msra.mxu0 %v2662
    %3505 = vmatpush.msra.mxu0 %v2660
    %3506 = vmatpush.msra.mxu0 %v2658
    %3507 = vmatpush.msra.mxu0 %v2656
    %3508 = vmatpush.msra.mxu0 %v2654
    %3509 = vmatpush.msra.mxu0 %v2652
    %3510 = vmatmul.f32.gmra.mxu0 %v3083
    %v3511 = vpop.f32.mrf.mxu0
    %v3512 = vadd.f32 %v3492, %v3511
    %3513 = vdwg.mxu0
    %3514 = vmatpush.msra.mxu0 %v2714
    %3515 = vmatpush.msra.mxu0 %v2712
    %3516 = vmatpush.msra.mxu0 %v2710
    %3517 = vmatpush.msra.mxu0 %v2708
    %3518 = vmatpush.msra.mxu0 %v2706
    %3519 = vmatpush.msra.mxu0 %v2704
    %3520 = vmatpush.msra.mxu0 %v2702
    %3521 = vmatpush.msra.mxu0 %v2700
    %3522 = vmatpush.msra.mxu0 %v2698
    %3523 = vmatpush.msra.mxu0 %v2696
    %3524 = vmatpush.msra.mxu0 %v2694
    %3525 = vmatpush.msra.mxu0 %v2692
    %3526 = vmatpush.msra.mxu0 %v2690
    %3527 = vmatpush.msra.mxu0 %v2688
    %3528 = vmatpush.msra.mxu0 %v2686
    %3529 = vmatpush.msra.mxu0 %v2684
    %3530 = vmatmul.f32.gmra.mxu0 %v3084
    %v3531 = vpop.f32.mrf.mxu0
    %v3532 = vadd.f32 %v3512, %v3531
    %3533 = vdwg.mxu0
    %3534 = vmatpush.msra.mxu0 %v2746
    %3535 = vmatpush.msra.mxu0 %v2744
    %3536 = vmatpush.msra.mxu0 %v2742
    %3537 = vmatpush.msra.mxu0 %v2740
    %3538 = vmatpush.msra.mxu0 %v2738
    %3539 = vmatpush.msra.mxu0 %v2736
    %3540 = vmatpush.msra.mxu0 %v2734
    %3541 = vmatpush.msra.mxu0 %v2732
    %3542 = vmatpush.msra.mxu0 %v2730
    %3543 = vmatpush.msra.mxu0 %v2728
    %3544 = vmatpush.msra.mxu0 %v2726
    %3545 = vmatpush.msra.mxu0 %v2724
    %3546 = vmatpush.msra.mxu0 %v2722
    %3547 = vmatpush.msra.mxu0 %v2720
    %3548 = vmatpush.msra.mxu0 %v2718
    %3549 = vmatpush.msra.mxu0 %v2716
    %3550 = vmatmul.f32.gmra.mxu0 %v3085
    %v3551 = vpop.f32.mrf.mxu0
    %v3552 = vadd.f32 %v3532, %v3551
    %3553 = vdwg.mxu0
    %3554 = vmatpush.msra.mxu0 %v2778
    %3555 = vmatpush.msra.mxu0 %v2776
    %3556 = vmatpush.msra.mxu0 %v2774
    %3557 = vmatpush.msra.mxu0 %v2772
    %3558 = vmatpush.msra.mxu0 %v2770
    %3559 = vmatpush.msra.mxu0 %v2768
    %3560 = vmatpush.msra.mxu0 %v2766
    %3561 = vmatpush.msra.mxu0 %v2764
    %3562 = vmatpush.msra.mxu0 %v2762
    %3563 = vmatpush.msra.mxu0 %v2760
    %3564 = vmatpush.msra.mxu0 %v2758
    %3565 = vmatpush.msra.mxu0 %v2756
    %3566 = vmatpush.msra.mxu0 %v2754
    %3567 = vmatpush.msra.mxu0 %v2752
    %3568 = vmatpush.msra.mxu0 %v2750
    %3569 = vmatpush.msra.mxu0 %v2748
    %3570 = vmatmul.f32.gmra.mxu0 %v3086
    %v3571 = vpop.f32.mrf.mxu0
    %v3572 = vadd.f32 %v3552, %v3571
    %3573 = vdwg.mxu0
    %3574 = vmatpush.msra.mxu0 %v2810
    %3575 = vmatpush.msra.mxu0 %v2808
    %3576 = vmatpush.msra.mxu0 %v2806
    %3577 = vmatpush.msra.mxu0 %v2804
    %3578 = vmatpush.msra.mxu0 %v2802
    %3579 = vmatpush.msra.mxu0 %v2800
    %3580 = vmatpush.msra.mxu0 %v2798
    %3581 = vmatpush.msra.mxu0 %v2796
    %3582 = vmatpush.msra.mxu0 %v2794
    %3583 = vmatpush.msra.mxu0 %v2792
    %3584 = vmatpush.msra.mxu0 %v2790
    %3585 = vmatpush.msra.mxu0 %v2788
    %3586 = vmatpush.msra.mxu0 %v2786
    %3587 = vmatpush.msra.mxu0 %v2784
    %3588 = vmatpush.msra.mxu0 %v2782
    %3589 = vmatpush.msra.mxu0 %v2780
    %3590 = vmatmul.f32.gmra.mxu0 %v3087
    %v3591 = vpop.f32.mrf.mxu0
    %v3592 = vadd.f32 %v3572, %v3591
    %3593 = vdwg.mxu0
    %3594 = vmatpush.msra.mxu0 %v2842
    %3595 = vmatpush.msra.mxu0 %v2840
    %3596 = vmatpush.msra.mxu0 %v2838
    %3597 = vmatpush.msra.mxu0 %v2836
    %3598 = vmatpush.msra.mxu0 %v2834
    %3599 = vmatpush.msra.mxu0 %v2832
    %3600 = vmatpush.msra.mxu0 %v2830
    %3601 = vmatpush.msra.mxu0 %v2828
    %3602 = vmatpush.msra.mxu0 %v2826
    %3603 = vmatpush.msra.mxu0 %v2824
    %3604 = vmatpush.msra.mxu0 %v2822
    %3605 = vmatpush.msra.mxu0 %v2820
    %3606 = vmatpush.msra.mxu0 %v2818
    %3607 = vmatpush.msra.mxu0 %v2816
    %3608 = vmatpush.msra.mxu0 %v2814
    %3609 = vmatpush.msra.mxu0 %v2812
    %3610 = vmatmul.f32.gmra.mxu0 %v3090
    %v3611 = vpop.f32.mrf.mxu0
    %v3612 = vadd.f32 %v3592, %v3611
    %3613 = vdwg.mxu0
    %3614 = vmatpush.msra.mxu0 %v2874
    %3615 = vmatpush.msra.mxu0 %v2872
    %3616 = vmatpush.msra.mxu0 %v2870
    %3617 = vmatpush.msra.mxu0 %v2868
    %3618 = vmatpush.msra.mxu0 %v2866
    %3619 = vmatpush.msra.mxu0 %v2864
    %3620 = vmatpush.msra.mxu0 %v2862
    %3621 = vmatpush.msra.mxu0 %v2860
    %3622 = vmatpush.msra.mxu0 %v2858
    %3623 = vmatpush.msra.mxu0 %v2856
    %3624 = vmatpush.msra.mxu0 %v2854
    %3625 = vmatpush.msra.mxu0 %v2852
    %3626 = vmatpush.msra.mxu0 %v2850
    %3627 = vmatpush.msra.mxu0 %v2848
    %3628 = vmatpush.msra.mxu0 %v2846
    %3629 = vmatpush.msra.mxu0 %v2844
    %3630 = vmatmul.f32.gmra.mxu0 %v3091
    %v3631 = vpop.f32.mrf.mxu0
    %v3632 = vadd.f32 %v3612, %v3631
    %3633 = vdwg.mxu0
    %3634 = vmatpush.msra.mxu0 %v2906
    %3635 = vmatpush.msra.mxu0 %v2904
    %3636 = vmatpush.msra.mxu0 %v2902
    %3637 = vmatpush.msra.mxu0 %v2900
    %3638 = vmatpush.msra.mxu0 %v2898
    %3639 = vmatpush.msra.mxu0 %v2896
    %3640 = vmatpush.msra.mxu0 %v2894
    %3641 = vmatpush.msra.mxu0 %v2892
    %3642 = vmatpush.msra.mxu0 %v2890
    %3643 = vmatpush.msra.mxu0 %v2888
    %3644 = vmatpush.msra.mxu0 %v2886
    %3645 = vmatpush.msra.mxu0 %v2884
    %3646 = vmatpush.msra.mxu0 %v2882
    %3647 = vmatpush.msra.mxu0 %v2880
    %3648 = vmatpush.msra.mxu0 %v2878
    %3649 = vmatpush.msra.mxu0 %v2876
    %3650 = vmatmul.f32.gmra.mxu0 %v3092
    %v3651 = vpop.f32.mrf.mxu0
    %v3652 = vadd.f32 %v3632, %v3651
    %3653 = vdwg.mxu0
    %3654 = vmatpush.msra.mxu0 %v2938
    %3655 = vmatpush.msra.mxu0 %v2936
    %3656 = vmatpush.msra.mxu0 %v2934
    %3657 = vmatpush.msra.mxu0 %v2932
    %3658 = vmatpush.msra.mxu0 %v2930
    %3659 = vmatpush.msra.mxu0 %v2928
    %3660 = vmatpush.msra.mxu0 %v2926
    %3661 = vmatpush.msra.mxu0 %v2924
    %3662 = vmatpush.msra.mxu0 %v2922
    %3663 = vmatpush.msra.mxu0 %v2920
    %3664 = vmatpush.msra.mxu0 %v2918
    %3665 = vmatpush.msra.mxu0 %v2916
    %3666 = vmatpush.msra.mxu0 %v2914
    %3667 = vmatpush.msra.mxu0 %v2912
    %3668 = vmatpush.msra.mxu0 %v2910
    %3669 = vmatpush.msra.mxu0 %v2908
    %3670 = vmatmul.f32.gmra.mxu0 %v3093
    %v3671 = vpop.f32.mrf.mxu0
    %v3672 = vadd.f32 %v3652, %v3671
    %3673 = vdwg.mxu0
    %3674 = vmatpush.msra.mxu0 %v2970
    %3675 = vmatpush.msra.mxu0 %v2968
    %3676 = vmatpush.msra.mxu0 %v2966
    %3677 = vmatpush.msra.mxu0 %v2964
    %3678 = vmatpush.msra.mxu0 %v2962
    %3679 = vmatpush.msra.mxu0 %v2960
    %3680 = vmatpush.msra.mxu0 %v2958
    %3681 = vmatpush.msra.mxu0 %v2956
    %3682 = vmatpush.msra.mxu0 %v2954
    %3683 = vmatpush.msra.mxu0 %v2952
    %3684 = vmatpush.msra.mxu0 %v2950
    %3685 = vmatpush.msra.mxu0 %v2948
    %3686 = vmatpush.msra.mxu0 %v2946
    %3687 = vmatpush.msra.mxu0 %v2944
    %3688 = vmatpush.msra.mxu0 %v2942
    %3689 = vmatpush.msra.mxu0 %v2940
    %3690 = vmatmul.f32.gmra.mxu0 %v3094
    %v3691 = vpop.f32.mrf.mxu0
    %v3692 = vadd.f32 %v3672, %v3691
    %3693 = vdwg.mxu0
    %3694 = vmatpush.msra.mxu0 %v3002
    %3695 = vmatpush.msra.mxu0 %v3000
    %3696 = vmatpush.msra.mxu0 %v2998
    %3697 = vmatpush.msra.mxu0 %v2996
    %3698 = vmatpush.msra.mxu0 %v2994
    %3699 = vmatpush.msra.mxu0 %v2992
    %3700 = vmatpush.msra.mxu0 %v2990
    %3701 = vmatpush.msra.mxu0 %v2988
    %3702 = vmatpush.msra.mxu0 %v2986
    %3703 = vmatpush.msra.mxu0 %v2984
    %3704 = vmatpush.msra.mxu0 %v2982
    %3705 = vmatpush.msra.mxu0 %v2980
    %3706 = vmatpush.msra.mxu0 %v2978
    %3707 = vmatpush.msra.mxu0 %v2976
    %3708 = vmatpush.msra.mxu0 %v2974
    %3709 = vmatpush.msra.mxu0 %v2972
    %3710 = vmatmul.f32.gmra.mxu0 %v3095
    %v3711 = vpop.f32.mrf.mxu0
    %v3712 = vadd.f32 %v3692, %v3711
    %3713 = vdwg.mxu0
    %3714 = vmatpush.msra.mxu0 %v3034
    %3715 = vmatpush.msra.mxu0 %v3032
    %3716 = vmatpush.msra.mxu0 %v3030
    %3717 = vmatpush.msra.mxu0 %v3028
    %3718 = vmatpush.msra.mxu0 %v3026
    %3719 = vmatpush.msra.mxu0 %v3024
    %3720 = vmatpush.msra.mxu0 %v3022
    %3721 = vmatpush.msra.mxu0 %v3020
    %3722 = vmatpush.msra.mxu0 %v3018
    %3723 = vmatpush.msra.mxu0 %v3016
    %3724 = vmatpush.msra.mxu0 %v3014
    %3725 = vmatpush.msra.mxu0 %v3012
    %3726 = vmatpush.msra.mxu0 %v3010
    %3727 = vmatpush.msra.mxu0 %v3008
    %3728 = vmatpush.msra.mxu0 %v3006
    %3729 = vmatpush.msra.mxu0 %v3004
    %3730 = vmatmul.f32.gmra.mxu0 %v3096
    %v3731 = vpop.f32.mrf.mxu0
    %v3732 = vadd.f32 %v3712, %v3731
    %3733 = vdwg.mxu0
    %3734 = vmatpush.msra.mxu0 %v3066
    %3735 = vmatpush.msra.mxu0 %v3064
    %3736 = vmatpush.msra.mxu0 %v3062
    %3737 = vmatpush.msra.mxu0 %v3060
    %3738 = vmatpush.msra.mxu0 %v3058
    %3739 = vmatpush.msra.mxu0 %v3056
    %3740 = vmatpush.msra.mxu0 %v3054
    %3741 = vmatpush.msra.mxu0 %v3052
    %3742 = vmatpush.msra.mxu0 %v3050
    %3743 = vmatpush.msra.mxu0 %v3048
    %3744 = vmatpush.msra.mxu0 %v3046
    %3745 = vmatpush.msra.mxu0 %v3044
    %3746 = vmatpush.msra.mxu0 %v3042
    %3747 = vmatpush.msra.mxu0 %v3040
    %3748 = vmatpush.msra.mxu0 %v3038
    %3749 = vmatpush.msra.mxu0 %v3036
    %3750 = vmatmul.f32.gmra.mxu0 %v3097
    %v3751 = vpop.f32.mrf.mxu0
    %v3752 = vadd.f32 %v3732, %v3751
    %3753 = vdwg.mxu0
    %vm3754 = vcmask 1041408
    %v3755 = vsel %vm3754, %v3432, -inf
    %v3756 = vsel %vm3754, %v3752, -inf
    %v3757 = vmax.f32 %v3755, %v3756
    %3758 = vmax.xlane.f32.xlu0 %v3757
    %v3759 = vpop.xlane.xlu0 %3758
    %v3760 = vsub.f32 %v3432, %v3759
    %v3761 = vsub.f32 %v3752, %v3759
    %v3762 = vmul.f32 %v3760, 1.442695
    %v3763 = vpow.pop %v3762
    %v3764 = vmul.f32 %v3761, 1.442695
    %v3765 = vpow.pop %v3764
    %v3766 = vsel %vm3754, %v3763, 0.0
    %v3767 = vsel %vm3754, %v3765, 0.0
    %v3768 = vadd.f32 %v3766, %v3767
    %3769 = vadd.xlane.f32.xlu0 %v3768
    %v3770 = vpop.xlane.xlu0 %3769
    %v3771 = vrcp.pop %v3770
    %v3772 = vmul.f32 %v3770, %v3771
    %v3773 = vsub.f32 1.0, %v3772
    %v3774 = vmul.f32 %v3771, %v3773
    %v3775 = vadd.f32 %v3771, %v3774
    %vm3776 = vweird.f32 %v3770
    %vm3777 = vweird.f32 %v3771
    %vm3778 = vmor %vm3776, %vm3777
    %v3779 = vsel %vm3778, %v3771, %v3775
    %v3780 = vand.u32 2147483647, %v3770
    %vm3781 = vcmp.eq.f32.partialorder %v3780, 8.507059e+37
    %v3782 = vand.u32 %v3770, 2147483648
    %v3783 = vor.u32 1.1754944e-38, %v3782
    %v3784 = vsel %vm3781, %v3783, %v3779
    %v3785 = vmul.f32 %v3763, %v3784
    %v3786 = vmul.f32 %v3765, %v3784
    %s3787 = ssub.f32 1.0, %s166
    %v3788 = vstv %s3787
    %v3789 = vmul.f32 %v3785, %v3788
    %v3790 = vmul.f32 %v3786, %v3788
    %v3791 = vld [vmem:[#allocation17] sm:$0xf]
    %v3792 = vstv %s166
    %v3793 = vmul.f32 %v3791, %v3792
    %3795 = vst [vmem:[#allocation1] ss:$4 sm:$0xff] %v3793
    %v3796 = vld.sshfl [vmem:[#allocation1] sm:$0xff pattern:$0x73625140]
    %v3797 = vld.sshfl [vmem:[#allocation1 + $0x8] sm:$0xff pattern:$0x73625140]
    %v3800 = vadd.f32 %v3789, %v3796
    %v3801 = vadd.f32 %v3790, %v3797
    %v3804 = vrot.slane %v3801, 6
    %v3805 = vsel %vm3754, %v3800, %v3804
    %3807 = vst [vmem:[#allocation18] sm:$0xf] %v3805
    // Predicated region
    $region90: #{tpu_custom_call.1} parent=1 // pred_check
      _
    $region91: #{tpu_custom_call.1} parent=1 // pred_check_branch
      %3809 = sbr.rel (0) target = $region93
    $region92: #{tpu_custom_call.1} parent=1 // pred_region
      %3811 = vsyncadd [#allocation8], 0
      %s3813 = sshll.u32 [#allocation18], 4
      %s3814 = int_to_ptr.vmem [resolvable:$true] %s3813
      %s3815 = sshll.u32 %s15, 4
      %s3816 = int_to_ptr.hbm [resolvable:$true] %s3815
      %3818 = dma.vmem_to_hbm [thread:$0]  %s3814, 64, %s3816, [#allocation8]
    $region93: #{tpu_custom_call.1} parent=1 // pred_fallthru
      _
    // Predicated region
    $region94: #{tpu_custom_call.1} parent=1 // pred_check
      _
    $region95: #{tpu_custom_call.1} parent=1 // pred_check_branch
      %3820 = sbr.rel (0) target = $region97
    $region96: #{tpu_custom_call.1} parent=1 // pred_region
      %3822 = dma.done [#allocation8], 64
    $region97: #{tpu_custom_call.1} parent=1 // pred_fallthru
      _
    %3823 = vsyncpa [#allocation7], 1
    %3824 = vsyncpa [#allocation10], 1
    %3825 = vsyncpa [#allocation13], 1
    %3826 = vsyncpa [#allocation16], 1
    %3827 = vsyncpa [#allocation8], 1
  %3828 = vsyncmov [#allocation4]
  %s3829 = vpop.sfrf %3828
  %p3830 = scmp.eq.s32.totalorder %s3829, 0
  %p3831 = pneg %p3830
  %3833 = shalt.err (%p3831)

</llo_original>
